<compile_context>
chip_gen: v5e
topology: v5e:2x2
jax: 0.10.0
libtpu: 0.0.40
codegen_flags: <defaults>
</compile_context>

<pallas_src>
import functools

import numpy as np
import jax
import jax.numpy as jnp
from jax.experimental import pallas as pl
from jax.experimental.pallas import tpu as pltpu


def _ndf_kernel(pos_ref, b2_ref, w1p_ref, w1s_ref, w1c_ref, b1_ref,
                wh_ref, bh_ref, wdoT_ref, bdo_ref, wcoT_ref, bco_ref, cbase_ref,
                out_ref, *, d, depth, dispdepth, coldepth):
    f32 = jnp.float32
    bf16 = jnp.bfloat16
    p = pos_ref[...].astype(f32)                           # [TM, d]
    tm = p.shape[0]
    n = b2_ref.shape[1]                                    # Fourier mapping size (== width)

    # Fourier projection + coordinate rows of the first Linear: exact f32 on the VPU
    # (K = d = 3 is too skinny for the MXU; exactness keeps sin/cos stable).
    # One explicit lane-broadcast per coordinate, reused for both accumulations.
    ff = None
    h = None
    for k in range(d):
        pk = jnp.broadcast_to(p[:, k:k + 1], (tm, n))
        tf = pk * b2_ref[k:k + 1, :]
        th = pk * w1p_ref[k:k + 1, :]
        ff = tf if ff is None else ff + tf
        h = th if h is None else h + th
    s = jnp.sin(ff)
    c = jnp.cos(ff)

    # First Linear (progressive-encoding alpha already folded into w1s / w1c rows) + ReLU.
    # bf16 MXU operands, f32 accumulation.
    h = h + jnp.dot(s.astype(bf16), w1s_ref[...], preferred_element_type=f32)
    h = h + jnp.dot(c.astype(bf16), w1c_ref[...], preferred_element_type=f32)
    h = jnp.maximum(h + b1_ref[...], 0.0)

    # Base MLP trunk (hidden slab is bf16; biases / activations stay f32).
    for l in range(depth):
        h = jnp.maximum(
            jnp.dot(h.astype(bf16), wh_ref[l], preferred_element_type=f32) + bh_ref[l], 0.0)

    def head3(ha, wT_ref, b_ref):
        # [TM, W] x [W, 3] as 3 broadcast-multiplies + XLU cross-lane reduces: a full MXU
        # weight pass for 3 useful columns is wasted; the VPU/XLU have slack here.
        cols = []
        for j in range(3):
            wj = wT_ref[j:j + 1, :]                        # (1, W) lane-aligned weight row
            cols.append(jnp.sum(ha * wj, axis=-1, keepdims=True))
        return jnp.concatenate(cols, axis=-1) + b_ref[...]

    # Displacement head: disp = 0.1 * tanh(mlp_disp(x)).
    hd = h
    for l in range(depth, depth + dispdepth):
        hd = jnp.maximum(
            jnp.dot(hd.astype(bf16), wh_ref[l], preferred_element_type=f32) + bh_ref[l], 0.0)
    dsp = 0.1 * jnp.tanh(head3(hd, wdoT_ref, bdo_ref))

    # Colour head: col = col_base + 0.5 * (1 + tanh(mlp_col(x))).
    hc = h
    for l in range(depth + dispdepth, depth + dispdepth + coldepth):
        hc = jnp.maximum(
            jnp.dot(hc.astype(bf16), wh_ref[l], preferred_element_type=f32) + bh_ref[l], 0.0)
    cl = cbase_ref[...] + 0.5 * (1.0 + jnp.tanh(head3(hc, wcoT_ref, bco_ref)))

    # Merged (TM, 8) output slab: disp in lanes 0:3, col in 3:6, 2 pad lanes.
    pad = jnp.zeros((tm, 2), f32)
    out_ref[...] = jnp.concatenate([dsp, cl, pad], axis=-1).astype(out_ref.dtype)


class NeuralDisplacementField:
    """JAX/Pallas port of the default forward path (encoding='gaussian',
    positional_encoding=True, no latent vectors)."""

    def __init__(self, key, *, sigma=10.0, depth=4, width=256, dispdepth=3, coldepth=3,
                 niter=6000, input_dim=3, progressive_encoding=False,
                 use_avg_colour=False, point_tile=1024):
        self.sigma = float(sigma)
        self.depth = int(depth)
        self.width = int(width)
        self.dispdepth = int(dispdepth)
        self.coldepth = int(coldepth)
        self.T = int(niter)
        self.d = int(input_dim)
        self.n = self.width                      # FourierFeatureTransform mapping size
        self.progressive_encoding = bool(progressive_encoding)
        self.use_avg_colour = bool(use_avg_colour)
        self.point_tile = int(point_tile)
        assert self.point_tile % 8 == 0, "point tile must be a multiple of 8 (sublanes)"
        self._t = 0                              # ProgressiveEncoding step counter
        self._tau = 2.0 * self.n / self.T

        d, n, w = self.d, self.n, self.width
        keys = jax.random.split(key, 8)

        def linear(k, fan_in, fan_out):
            kw, kb = jax.random.split(k)
            bound = 1.0 / np.sqrt(fan_in)
            W = jax.random.uniform(kw, (fan_in, fan_out), jnp.float32, -bound, bound)
            b = jax.random.uniform(kb, (1, fan_out), jnp.float32, -bound, bound)
            return W, b

        # FourierFeatureTransform projection matrix (gaussian, scaled by sigma).
        self.Bmat = self.sigma * jax.random.normal(keys[0], (d, n), jnp.float32)
        self.B2 = (2.0 * np.pi) * self.Bmat      # 2*pi folded in once

        # First Linear: (d + 2n) -> w.
        self.W1, self.b1 = linear(keys[1], d + 2 * n, w)

        # Hidden layers (all w -> w): base trunk, then disp-head hiddens, then col-head hiddens.
        Lh = self.depth + self.dispdepth + self.coldepth
        hk = jax.random.split(keys[2], max(Lh, 1))
        whs, bhs = [], []
        for l in range(Lh):
            W, b = linear(hk[l], w, w)
            whs.append(W)
            bhs.append(b)                        # (1, w)
        self.Wh = jnp.stack(whs)                 # (Lh, w, w)
        self.bh = jnp.stack(bhs)                 # (Lh, 1, w)

        # Output Linears.  reset_weights() in the spec zeroes the disp head's final layer.
        self.Wdo = jnp.zeros((w, 3), jnp.float32)
        self.bdo = jnp.zeros((1, 3), jnp.float32)
        self.Wco, self.bco = linear(keys[3], w, 3)

        # avg_col is all-zeros when no template mesh is given (spec default).
        self.avg_col = jnp.zeros((3,), jnp.float32)
        self.col_base = (self.avg_col.reshape(1, 3) if self.use_avg_colour
                         else jnp.zeros((1, 3), jnp.float32))

        self._forward_cache = {}                 # one jitted forward per point tile size

    # ------------------------------------------------------------------ tiling / forward --

    def _pick_tile(self, m):
        # Shrink the tile when the point count is small so the single "parallel" grid axis
        # keeps >= 4 tiles (v7x megacore sharding needs >= 2, ideally >= 4).
        tm = self.point_tile
        while tm > 8 and -(-m // tm) < 4:
            tm //= 2
        return max(8, (tm // 8) * 8)

    def _get_forward(self, tm):
        f = self._forward_cache.get(tm)
        if f is None:
            f = self._build_forward(tm)
            self._forward_cache[tm] = f
        return f

    def _build_forward(self, TM):
        d, n, width = self.d, self.n, self.width
        depth, dd, cd = self.depth, self.dispdepth, self.coldepth
        Lh = depth + dd + cd
        tau = self._tau
        apply_pe = self.progressive_encoding

        kernel = functools.partial(_ndf_kernel, d=d, depth=depth, dispdepth=dd, coldepth=cd)

        # Resident operands: whole array placed in VMEM once (single copy, no double buffer).
        res = pl.BlockSpec(memory_space=pltpu.MemorySpace.VMEM)

        # Explicit scoped-VMEM budget: bf16 weight slab + streams + live f32 intermediates,
        # with headroom; capped at 64 MiB so it never exceeds v7x physical VMEM per core.
        w_bytes = (2 * d * n * 4 + 2 * n * width * 2 + width * 4
                   + Lh * width * width * 2 + Lh * width * 4 + 2 * 3 * width * 4 + 512)
        stream_bytes = 2 * (TM * d * 4 + TM * 8 * 4)      # double-buffered pos / out streams
        live_bytes = 10 * TM * max(n, width) * 4          # f32 temporaries / spill headroom
        vmem_limit = int(min(64 * 2 ** 20,
                             max(1.5 * (w_bytes + stream_bytes + live_bytes), 32 * 2 ** 20)))

        def fwd(pos2, t, b2, w1, b1, wh, bh, wdo, bdo, wco, bco, col_base):
            m_pad = pos2.shape[0]
            f32, bf16 = jnp.float32, jnp.bfloat16
            # Fold the progressive-encoding mask into the first Linear's sin/cos rows:
            # (feat * alpha) @ W1 == feat @ (alpha[:, None] * W1)  -> zero in-kernel cost.
            if apply_pe:
                idx = jnp.arange(n, dtype=f32)
                alpha = jnp.clip((t - tau * idx) / tau, 0.0, 1.0)[:, None]
                w1s = (w1[d:d + n] * alpha).astype(bf16)
                w1c = (w1[d + n:] * alpha).astype(bf16)
            else:
                w1s = w1[d:d + n].astype(bf16)
                w1c = w1[d + n:].astype(bf16)
            w1p = w1[:d]                          # raw-coordinate rows, exact f32 (VPU path)
            wh_b = wh.astype(bf16)                # trunk + head hidden slab -> bf16 for MXU
            wdoT = wdo.T                          # (3, W) lane-aligned rows, f32 (VPU/XLU)
            wcoT = wco.T

            grid = (m_pad // TM,)
            out = pl.pallas_call(
                kernel,
                grid=grid,
                in_specs=[pl.BlockSpec((TM, d), lambda i: (i, 0))] + [res] * 12,
                out_specs=pl.BlockSpec((TM, 8), lambda i: (i, 0)),
                out_shape=jax.ShapeDtypeStruct((m_pad, 8), jnp.float32),
                compiler_params=pltpu.CompilerParams(
                    dimension_semantics=("parallel",),    # megacore sharding on v7x
                    vmem_limit_bytes=vmem_limit),
            )(pos2, b2, w1p, w1s, w1c, b1, wh_b, bh, wdoT, bdo, wcoT, bco, col_base)
            return out

        return jax.jit(fwd)

    # ---------------------------------------------------------------------------- __call__ --

    def __call__(self, pos, shapevec=None, texvec=None, posevec=None):
        # TODO(synk): shapevec/posevec/texvec concatenation branches, non-gaussian encoding,
        # and onnx_mode are not implemented in the fused kernel (defaults pass None/False).
        assert shapevec is None and texvec is None and posevec is None
        batch, npts, dim = pos.shape
        assert dim == self.d
        m = batch * npts
        tm = self._pick_tile(m)
        m_pad = ((m + tm - 1) // tm) * tm
        pos2 = jnp.asarray(pos, jnp.float32).reshape(m, dim)
        if m_pad != m:
            pos2 = jnp.pad(pos2, ((0, m_pad - m), (0, 0)))

        t_now = self._t
        if self.progressive_encoding:
            self._t += 1                         # stateful step counter (host side)

        out = self._get_forward(tm)(
            pos2, jnp.asarray(t_now, jnp.float32),
            self.B2, self.W1, self.b1, self.Wh, self.bh,
            self.Wdo, self.bdo, self.Wco, self.bco, self.col_base)
        disp = out[:m, 0:3].reshape(batch, npts, 3)
        col = out[:m, 3:6].reshape(batch, npts, 3)
        return {"disp": disp, "col": col}


def _reference_forward(model, pos, t):
    """Pure-JAX f32 replica of the torch forward (gaussian + positional-encoding path)."""
    HI = jax.lax.Precision.HIGHEST
    d, n = model.d, model.n
    b, npts, _ = pos.shape
    x = pos.reshape(-1, d).astype(jnp.float32)
    res = 2.0 * np.pi * jnp.matmul(x, model.Bmat, precision=HI)
    feat = jnp.concatenate([x, jnp.sin(res), jnp.cos(res)], axis=-1)
    if model.progressive_encoding:
        idx = jnp.arange(n, dtype=jnp.float32)
        a = jnp.clip((t - model._tau * idx) / model._tau, 0.0, 1.0)
        alpha = jnp.concatenate([jnp.ones((d,), jnp.float32), a, a])
        feat = feat * alpha
    h = jax.nn.relu(jnp.matmul(feat, model.W1, precision=HI) + model.b1[0])
    for l in range(model.depth):
        h = jax.nn.relu(jnp.matmul(h, model.Wh[l], precision=HI) + model.bh[l, 0])
    hd = h
    for l in range(model.depth, model.depth + model.dispdepth):
        hd = jax.nn.relu(jnp.matmul(hd, model.Wh[l], precision=HI) + model.bh[l, 0])
    disp = 0.1 * jnp.tanh(jnp.matmul(hd, model.Wdo, precision=HI) + model.bdo[0])
    hc = h
    s0 = model.depth + model.dispdepth
    for l in range(s0, s0 + model.coldepth):
        hc = jax.nn.relu(jnp.matmul(hc, model.Wh[l], precision=HI) + model.bh[l, 0])
    col = model.col_base[0] + 0.5 * (
        1.0 + jnp.tanh(jnp.matmul(hc, model.Wco, precision=HI) + model.bco[0]))
    return disp.reshape(b, npts, 3), col.reshape(b, npts, 3)


if __name__ == "__main__":
    key = jax.random.PRNGKey(0)
    k_model, k_pos, k_wdo, k_bdo = jax.random.split(key, 4)

    # Small config consistent with the module; progressive encoding enabled so the
    # fused-alpha path is exercised, and the step counter changes alpha every call.
    model = NeuralDisplacementField(
        k_model, sigma=0.25, depth=2, width=64, dispdepth=2, coldepth=2,
        niter=100, input_dim=3, progressive_encoding=True, use_avg_colour=False)

    # reset_weights() zeroes the disp head's final layer (per spec); give it small non-zero
    # values here purely so the test exercises the displacement-head output path too.
    model.Wdo = 0.1 * jax.random.normal(k_wdo, (model.width, 3), jnp.float32)
    model.bdo = 0.01 * jax.random.normal(k_bdo, (1, 3), jnp.float32)

    batch, npts = 2, 100            # M = 200 -> tile 64 -> padded to 256 -> 4 parallel tiles
    pos = jax.random.uniform(k_pos, (batch, npts, 3), jnp.float32, -0.5, 0.5)

    ok = True
    for step in range(3):
        out = model(pos)
        disp = jax.block_until_ready(out["disp"])
        col = jax.block_until_ready(out["col"])
        ref_disp, ref_col = _reference_forward(model, pos, float(step))
        if not (bool(jnp.all(jnp.isfinite(disp))) and bool(jnp.all(jnp.isfinite(col)))
                and jnp.allclose(disp, ref_disp, atol=3e-2, rtol=3e-2)
                and jnp.allclose(col, ref_col, atol=3e-2, rtol=3e-2)):
            ok = False

    print("KERNEL_OK" if ok else "MISMATCH")
</pallas_src>

<mosaic_0001>
module attributes {stable_mosaic.version = 11 : i64} {
  func.func @_ndf_kernel(%arg0: i32, %arg1: memref<64x3xf32, #tpu.memory_space<vmem>>, %arg2: memref<3x64xf32, #tpu.memory_space<vmem>>, %arg3: memref<3x64xf32, #tpu.memory_space<vmem>>, %arg4: memref<64x64xbf16, #tpu.memory_space<vmem>>, %arg5: memref<64x64xbf16, #tpu.memory_space<vmem>>, %arg6: memref<1x64xf32, #tpu.memory_space<vmem>>, %arg7: memref<6x64x64xbf16, #tpu.memory_space<vmem>>, %arg8: memref<6x1x64xf32, #tpu.memory_space<vmem>>, %arg9: memref<3x64xf32, #tpu.memory_space<vmem>>, %arg10: memref<1x3xf32, #tpu.memory_space<vmem>>, %arg11: memref<3x64xf32, #tpu.memory_space<vmem>>, %arg12: memref<1x3xf32, #tpu.memory_space<vmem>>, %arg13: memref<1x3xf32, #tpu.memory_space<vmem>>, %arg14: memref<64x8xf32, #tpu.memory_space<vmem>>) attributes {dimension_semantics = [#tpu.dimension_semantics<parallel>], iteration_bounds = array<i64: 4>, scalar_prefetch = 0 : i64, scratch_operands = 0 : i64, tpu.core_type = #tpu.core_type<tc>, window_params = [{transform_indices = @transform_0, window_bounds = array<i64: 64, 3>}, {pipeline_mode = #tpu.pipeline_mode<synchronous>, transform_indices = @transform_1, window_bounds = array<i64: 3, 64>}, {pipeline_mode = #tpu.pipeline_mode<synchronous>, transform_indices = @transform_2, window_bounds = array<i64: 3, 64>}, {pipeline_mode = #tpu.pipeline_mode<synchronous>, transform_indices = @transform_3, window_bounds = array<i64: 64, 64>}, {pipeline_mode = #tpu.pipeline_mode<synchronous>, transform_indices = @transform_4, window_bounds = array<i64: 64, 64>}, {pipeline_mode = #tpu.pipeline_mode<synchronous>, transform_indices = @transform_5, window_bounds = array<i64: 1, 64>}, {pipeline_mode = #tpu.pipeline_mode<synchronous>, transform_indices = @transform_6, window_bounds = array<i64: 6, 64, 64>}, {pipeline_mode = #tpu.pipeline_mode<synchronous>, transform_indices = @transform_7, window_bounds = array<i64: 6, 1, 64>}, {pipeline_mode = #tpu.pipeline_mode<synchronous>, transform_indices = @transform_8, window_bounds = array<i64: 3, 64>}, {pipeline_mode = #tpu.pipeline_mode<synchronous>, transform_indices = @transform_9, window_bounds = array<i64: 1, 3>}, {pipeline_mode = #tpu.pipeline_mode<synchronous>, transform_indices = @transform_10, window_bounds = array<i64: 3, 64>}, {pipeline_mode = #tpu.pipeline_mode<synchronous>, transform_indices = @transform_11, window_bounds = array<i64: 1, 3>}, {pipeline_mode = #tpu.pipeline_mode<synchronous>, transform_indices = @transform_12, window_bounds = array<i64: 1, 3>}, {transform_indices = @transform_13, window_bounds = array<i64: 64, 8>}]} {
    %c0 = arith.constant 0 : index
    %c0_0 = arith.constant 0 : index
    %0 = vector.load %arg1[%c0, %c0_0] : memref<64x3xf32, #tpu.memory_space<vmem>>, vector<64x3xf32>
    %1 = vector.extract_strided_slice %0 {offsets = [0, 0], sizes = [64, 1], strides = [1, 1]} : vector<64x3xf32> to vector<64x1xf32>
    %2 = vector.shape_cast %1 : vector<64x1xf32> to vector<64x1xf32>
    %3 = vector.broadcast %2 : vector<64x1xf32> to vector<64x64xf32>
    %c0_1 = arith.constant 0 : index
    %c0_2 = arith.constant 0 : index
    %4 = vector.load %arg2[%c0_1, %c0_2] : memref<3x64xf32, #tpu.memory_space<vmem>>, vector<1x64xf32>
    %5 = vector.broadcast %4 : vector<1x64xf32> to vector<64x64xf32>
    %6 = arith.mulf %3, %5 : vector<64x64xf32>
    %c0_3 = arith.constant 0 : index
    %c0_4 = arith.constant 0 : index
    %7 = vector.load %arg3[%c0_3, %c0_4] : memref<3x64xf32, #tpu.memory_space<vmem>>, vector<1x64xf32>
    %8 = vector.broadcast %7 : vector<1x64xf32> to vector<64x64xf32>
    %9 = arith.mulf %3, %8 : vector<64x64xf32>
    %10 = vector.extract_strided_slice %0 {offsets = [0, 1], sizes = [64, 1], strides = [1, 1]} : vector<64x3xf32> to vector<64x1xf32>
    %11 = vector.shape_cast %10 : vector<64x1xf32> to vector<64x1xf32>
    %12 = vector.broadcast %11 : vector<64x1xf32> to vector<64x64xf32>
    %c1 = arith.constant 1 : index
    %c0_5 = arith.constant 0 : index
    %13 = vector.load %arg2[%c1, %c0_5] : memref<3x64xf32, #tpu.memory_space<vmem>>, vector<1x64xf32>
    %14 = vector.broadcast %13 : vector<1x64xf32> to vector<64x64xf32>
    %15 = arith.mulf %12, %14 : vector<64x64xf32>
    %c1_6 = arith.constant 1 : index
    %c0_7 = arith.constant 0 : index
    %16 = vector.load %arg3[%c1_6, %c0_7] : memref<3x64xf32, #tpu.memory_space<vmem>>, vector<1x64xf32>
    %17 = vector.broadcast %16 : vector<1x64xf32> to vector<64x64xf32>
    %18 = arith.mulf %12, %17 : vector<64x64xf32>
    %19 = arith.addf %6, %15 : vector<64x64xf32>
    %20 = arith.addf %9, %18 : vector<64x64xf32>
    %21 = vector.extract_strided_slice %0 {offsets = [0, 2], sizes = [64, 1], strides = [1, 1]} : vector<64x3xf32> to vector<64x1xf32>
    %22 = vector.shape_cast %21 : vector<64x1xf32> to vector<64x1xf32>
    %23 = vector.broadcast %22 : vector<64x1xf32> to vector<64x64xf32>
    %c2 = arith.constant 2 : index
    %c0_8 = arith.constant 0 : index
    %24 = vector.load %arg2[%c2, %c0_8] : memref<3x64xf32, #tpu.memory_space<vmem>>, vector<1x64xf32>
    %25 = vector.broadcast %24 : vector<1x64xf32> to vector<64x64xf32>
    %26 = arith.mulf %23, %25 : vector<64x64xf32>
    %c2_9 = arith.constant 2 : index
    %c0_10 = arith.constant 0 : index
    %27 = vector.load %arg3[%c2_9, %c0_10] : memref<3x64xf32, #tpu.memory_space<vmem>>, vector<1x64xf32>
    %28 = vector.broadcast %27 : vector<1x64xf32> to vector<64x64xf32>
    %29 = arith.mulf %23, %28 : vector<64x64xf32>
    %30 = arith.addf %19, %26 : vector<64x64xf32>
    %31 = arith.addf %20, %29 : vector<64x64xf32>
    %32 = math.sin %30 : vector<64x64xf32>
    %33 = math.cos %30 : vector<64x64xf32>
    %34 = arith.truncf %32 : vector<64x64xf32> to vector<64x64xbf16>
    %c0_11 = arith.constant 0 : index
    %c0_12 = arith.constant 0 : index
    %35 = vector.load %arg4[%c0_11, %c0_12] : memref<64x64xbf16, #tpu.memory_space<vmem>>, vector<64x64xbf16>
    %cst = arith.constant dense<0.000000e+00> : vector<64x64xf32>
    %36 = tpu.matmul %34, %35, %cst {dimension_numbers = #tpu.dot_dimension_numbers<[1], [0], [0], [1], [0, 0, 1, 1], [], []>} : vector<64x64xbf16>, vector<64x64xbf16>, vector<64x64xf32> -> vector<64x64xf32>
    %37 = arith.addf %31, %36 : vector<64x64xf32>
    %38 = arith.truncf %33 : vector<64x64xf32> to vector<64x64xbf16>
    %c0_13 = arith.constant 0 : index
    %c0_14 = arith.constant 0 : index
    %39 = vector.load %arg5[%c0_13, %c0_14] : memref<64x64xbf16, #tpu.memory_space<vmem>>, vector<64x64xbf16>
    %cst_15 = arith.constant dense<0.000000e+00> : vector<64x64xf32>
    %40 = tpu.matmul %38, %39, %cst_15 {dimension_numbers = #tpu.dot_dimension_numbers<[1], [0], [0], [1], [0, 0, 1, 1], [], []>} : vector<64x64xbf16>, vector<64x64xbf16>, vector<64x64xf32> -> vector<64x64xf32>
    %41 = arith.addf %37, %40 : vector<64x64xf32>
    %c0_16 = arith.constant 0 : index
    %c0_17 = arith.constant 0 : index
    %42 = vector.load %arg6[%c0_16, %c0_17] : memref<1x64xf32, #tpu.memory_space<vmem>>, vector<1x64xf32>
    %43 = vector.broadcast %42 : vector<1x64xf32> to vector<64x64xf32>
    %44 = arith.addf %41, %43 : vector<64x64xf32>
    %cst_18 = arith.constant 0.000000e+00 : f32
    %45 = vector.broadcast %cst_18 : f32 to vector<64x64xf32>
    %46 = arith.maximumf %44, %45 : vector<64x64xf32>
    %47 = arith.truncf %46 : vector<64x64xf32> to vector<64x64xbf16>
    %c0_19 = arith.constant 0 : index
    %c0_20 = arith.constant 0 : index
    %c0_21 = arith.constant 0 : index
    %48 = vector.load %arg7[%c0_19, %c0_20, %c0_21] : memref<6x64x64xbf16, #tpu.memory_space<vmem>>, vector<1x64x64xbf16>
    %49 = vector.shape_cast %48 : vector<1x64x64xbf16> to vector<64x64xbf16>
    %cst_22 = arith.constant dense<0.000000e+00> : vector<64x64xf32>
    %50 = tpu.matmul %47, %49, %cst_22 {dimension_numbers = #tpu.dot_dimension_numbers<[1], [0], [0], [1], [0, 0, 1, 1], [], []>} : vector<64x64xbf16>, vector<64x64xbf16>, vector<64x64xf32> -> vector<64x64xf32>
    %c0_23 = arith.constant 0 : index
    %c0_24 = arith.constant 0 : index
    %c0_25 = arith.constant 0 : index
    %51 = vector.load %arg8[%c0_23, %c0_24, %c0_25] : memref<6x1x64xf32, #tpu.memory_space<vmem>>, vector<1x1x64xf32>
    %52 = vector.shape_cast %51 : vector<1x1x64xf32> to vector<1x64xf32>
    %53 = vector.broadcast %52 : vector<1x64xf32> to vector<64x64xf32>
    %54 = arith.addf %50, %53 : vector<64x64xf32>
    %cst_26 = arith.constant 0.000000e+00 : f32
    %55 = vector.broadcast %cst_26 : f32 to vector<64x64xf32>
    %56 = arith.maximumf %54, %55 : vector<64x64xf32>
    %57 = arith.truncf %56 : vector<64x64xf32> to vector<64x64xbf16>
    %c1_27 = arith.constant 1 : index
    %c0_28 = arith.constant 0 : index
    %c0_29 = arith.constant 0 : index
    %58 = vector.load %arg7[%c1_27, %c0_28, %c0_29] : memref<6x64x64xbf16, #tpu.memory_space<vmem>>, vector<1x64x64xbf16>
    %59 = vector.shape_cast %58 : vector<1x64x64xbf16> to vector<64x64xbf16>
    %cst_30 = arith.constant dense<0.000000e+00> : vector<64x64xf32>
    %60 = tpu.matmul %57, %59, %cst_30 {dimension_numbers = #tpu.dot_dimension_numbers<[1], [0], [0], [1], [0, 0, 1, 1], [], []>} : vector<64x64xbf16>, vector<64x64xbf16>, vector<64x64xf32> -> vector<64x64xf32>
    %c1_31 = arith.constant 1 : index
    %c0_32 = arith.constant 0 : index
    %c0_33 = arith.constant 0 : index
    %61 = vector.load %arg8[%c1_31, %c0_32, %c0_33] : memref<6x1x64xf32, #tpu.memory_space<vmem>>, vector<1x1x64xf32>
    %62 = vector.shape_cast %61 : vector<1x1x64xf32> to vector<1x64xf32>
    %63 = vector.broadcast %62 : vector<1x64xf32> to vector<64x64xf32>
    %64 = arith.addf %60, %63 : vector<64x64xf32>
    %cst_34 = arith.constant 0.000000e+00 : f32
    %65 = vector.broadcast %cst_34 : f32 to vector<64x64xf32>
    %66 = arith.maximumf %64, %65 : vector<64x64xf32>
    %67 = arith.truncf %66 : vector<64x64xf32> to vector<64x64xbf16>
    %c2_35 = arith.constant 2 : index
    %c0_36 = arith.constant 0 : index
    %c0_37 = arith.constant 0 : index
    %68 = vector.load %arg7[%c2_35, %c0_36, %c0_37] : memref<6x64x64xbf16, #tpu.memory_space<vmem>>, vector<1x64x64xbf16>
    %69 = vector.shape_cast %68 : vector<1x64x64xbf16> to vector<64x64xbf16>
    %cst_38 = arith.constant dense<0.000000e+00> : vector<64x64xf32>
    %70 = tpu.matmul %67, %69, %cst_38 {dimension_numbers = #tpu.dot_dimension_numbers<[1], [0], [0], [1], [0, 0, 1, 1], [], []>} : vector<64x64xbf16>, vector<64x64xbf16>, vector<64x64xf32> -> vector<64x64xf32>
    %c2_39 = arith.constant 2 : index
    %c0_40 = arith.constant 0 : index
    %c0_41 = arith.constant 0 : index
    %71 = vector.load %arg8[%c2_39, %c0_40, %c0_41] : memref<6x1x64xf32, #tpu.memory_space<vmem>>, vector<1x1x64xf32>
    %72 = vector.shape_cast %71 : vector<1x1x64xf32> to vector<1x64xf32>
    %73 = vector.broadcast %72 : vector<1x64xf32> to vector<64x64xf32>
    %74 = arith.addf %70, %73 : vector<64x64xf32>
    %cst_42 = arith.constant 0.000000e+00 : f32
    %75 = vector.broadcast %cst_42 : f32 to vector<64x64xf32>
    %76 = arith.maximumf %74, %75 : vector<64x64xf32>
    %77 = arith.truncf %76 : vector<64x64xf32> to vector<64x64xbf16>
    %c3 = arith.constant 3 : index
    %c0_43 = arith.constant 0 : index
    %c0_44 = arith.constant 0 : index
    %78 = vector.load %arg7[%c3, %c0_43, %c0_44] : memref<6x64x64xbf16, #tpu.memory_space<vmem>>, vector<1x64x64xbf16>
    %79 = vector.shape_cast %78 : vector<1x64x64xbf16> to vector<64x64xbf16>
    %cst_45 = arith.constant dense<0.000000e+00> : vector<64x64xf32>
    %80 = tpu.matmul %77, %79, %cst_45 {dimension_numbers = #tpu.dot_dimension_numbers<[1], [0], [0], [1], [0, 0, 1, 1], [], []>} : vector<64x64xbf16>, vector<64x64xbf16>, vector<64x64xf32> -> vector<64x64xf32>
    %c3_46 = arith.constant 3 : index
    %c0_47 = arith.constant 0 : index
    %c0_48 = arith.constant 0 : index
    %81 = vector.load %arg8[%c3_46, %c0_47, %c0_48] : memref<6x1x64xf32, #tpu.memory_space<vmem>>, vector<1x1x64xf32>
    %82 = vector.shape_cast %81 : vector<1x1x64xf32> to vector<1x64xf32>
    %83 = vector.broadcast %82 : vector<1x64xf32> to vector<64x64xf32>
    %84 = arith.addf %80, %83 : vector<64x64xf32>
    %cst_49 = arith.constant 0.000000e+00 : f32
    %85 = vector.broadcast %cst_49 : f32 to vector<64x64xf32>
    %86 = arith.maximumf %84, %85 : vector<64x64xf32>
    %c0_50 = arith.constant 0 : index
    %c0_51 = arith.constant 0 : index
    %87 = vector.load %arg9[%c0_50, %c0_51] : memref<3x64xf32, #tpu.memory_space<vmem>>, vector<1x64xf32>
    %88 = vector.broadcast %87 : vector<1x64xf32> to vector<64x64xf32>
    %89 = arith.mulf %86, %88 : vector<64x64xf32>
    %cst_52 = arith.constant dense<0.000000e+00> : vector<64xf32>
    %90 = vector.multi_reduction <add>, %89, %cst_52 [1] : vector<64x64xf32> to vector<64xf32>
    %91 = vector.shape_cast %90 : vector<64xf32> to vector<64x1xf32>
    %c1_53 = arith.constant 1 : index
    %c0_54 = arith.constant 0 : index
    %92 = vector.load %arg9[%c1_53, %c0_54] : memref<3x64xf32, #tpu.memory_space<vmem>>, vector<1x64xf32>
    %93 = vector.broadcast %92 : vector<1x64xf32> to vector<64x64xf32>
    %94 = arith.mulf %86, %93 : vector<64x64xf32>
    %cst_55 = arith.constant dense<0.000000e+00> : vector<64xf32>
    %95 = vector.multi_reduction <add>, %94, %cst_55 [1] : vector<64x64xf32> to vector<64xf32>
    %96 = vector.shape_cast %95 : vector<64xf32> to vector<64x1xf32>
    %c2_56 = arith.constant 2 : index
    %c0_57 = arith.constant 0 : index
    %97 = vector.load %arg9[%c2_56, %c0_57] : memref<3x64xf32, #tpu.memory_space<vmem>>, vector<1x64xf32>
    %98 = vector.broadcast %97 : vector<1x64xf32> to vector<64x64xf32>
    %99 = arith.mulf %86, %98 : vector<64x64xf32>
    %cst_58 = arith.constant dense<0.000000e+00> : vector<64xf32>
    %100 = vector.multi_reduction <add>, %99, %cst_58 [1] : vector<64x64xf32> to vector<64xf32>
    %101 = vector.shape_cast %100 : vector<64xf32> to vector<64x1xf32>
    %102 = tpu.concatenate %91, %96, %101 in 1 : vector<64x1xf32>, vector<64x1xf32>, vector<64x1xf32> -> vector<64x3xf32>
    %c0_59 = arith.constant 0 : index
    %c0_60 = arith.constant 0 : index
    %103 = vector.load %arg10[%c0_59, %c0_60] : memref<1x3xf32, #tpu.memory_space<vmem>>, vector<1x3xf32>
    %104 = vector.broadcast %103 : vector<1x3xf32> to vector<64x3xf32>
    %105 = arith.addf %102, %104 : vector<64x3xf32>
    %106 = math.tanh %105 : vector<64x3xf32>
    %cst_61 = arith.constant 1.000000e-01 : f32
    %107 = vector.broadcast %cst_61 : f32 to vector<64x3xf32>
    %108 = arith.mulf %107, %106 : vector<64x3xf32>
    %109 = arith.truncf %66 : vector<64x64xf32> to vector<64x64xbf16>
    %c4 = arith.constant 4 : index
    %c0_62 = arith.constant 0 : index
    %c0_63 = arith.constant 0 : index
    %110 = vector.load %arg7[%c4, %c0_62, %c0_63] : memref<6x64x64xbf16, #tpu.memory_space<vmem>>, vector<1x64x64xbf16>
    %111 = vector.shape_cast %110 : vector<1x64x64xbf16> to vector<64x64xbf16>
    %cst_64 = arith.constant dense<0.000000e+00> : vector<64x64xf32>
    %112 = tpu.matmul %109, %111, %cst_64 {dimension_numbers = #tpu.dot_dimension_numbers<[1], [0], [0], [1], [0, 0, 1, 1], [], []>} : vector<64x64xbf16>, vector<64x64xbf16>, vector<64x64xf32> -> vector<64x64xf32>
    %c4_65 = arith.constant 4 : index
    %c0_66 = arith.constant 0 : index
    %c0_67 = arith.constant 0 : index
    %113 = vector.load %arg8[%c4_65, %c0_66, %c0_67] : memref<6x1x64xf32, #tpu.memory_space<vmem>>, vector<1x1x64xf32>
    %114 = vector.shape_cast %113 : vector<1x1x64xf32> to vector<1x64xf32>
    %115 = vector.broadcast %114 : vector<1x64xf32> to vector<64x64xf32>
    %116 = arith.addf %112, %115 : vector<64x64xf32>
    %cst_68 = arith.constant 0.000000e+00 : f32
    %117 = vector.broadcast %cst_68 : f32 to vector<64x64xf32>
    %118 = arith.maximumf %116, %117 : vector<64x64xf32>
    %119 = arith.truncf %118 : vector<64x64xf32> to vector<64x64xbf16>
    %c5 = arith.constant 5 : index
    %c0_69 = arith.constant 0 : index
    %c0_70 = arith.constant 0 : index
    %120 = vector.load %arg7[%c5, %c0_69, %c0_70] : memref<6x64x64xbf16, #tpu.memory_space<vmem>>, vector<1x64x64xbf16>
    %121 = vector.shape_cast %120 : vector<1x64x64xbf16> to vector<64x64xbf16>
    %cst_71 = arith.constant dense<0.000000e+00> : vector<64x64xf32>
    %122 = tpu.matmul %119, %121, %cst_71 {dimension_numbers = #tpu.dot_dimension_numbers<[1], [0], [0], [1], [0, 0, 1, 1], [], []>} : vector<64x64xbf16>, vector<64x64xbf16>, vector<64x64xf32> -> vector<64x64xf32>
    %c5_72 = arith.constant 5 : index
    %c0_73 = arith.constant 0 : index
    %c0_74 = arith.constant 0 : index
    %123 = vector.load %arg8[%c5_72, %c0_73, %c0_74] : memref<6x1x64xf32, #tpu.memory_space<vmem>>, vector<1x1x64xf32>
    %124 = vector.shape_cast %123 : vector<1x1x64xf32> to vector<1x64xf32>
    %125 = vector.broadcast %124 : vector<1x64xf32> to vector<64x64xf32>
    %126 = arith.addf %122, %125 : vector<64x64xf32>
    %cst_75 = arith.constant 0.000000e+00 : f32
    %127 = vector.broadcast %cst_75 : f32 to vector<64x64xf32>
    %128 = arith.maximumf %126, %127 : vector<64x64xf32>
    %c0_76 = arith.constant 0 : index
    %c0_77 = arith.constant 0 : index
    %129 = vector.load %arg13[%c0_76, %c0_77] : memref<1x3xf32, #tpu.memory_space<vmem>>, vector<1x3xf32>
    %c0_78 = arith.constant 0 : index
    %c0_79 = arith.constant 0 : index
    %130 = vector.load %arg11[%c0_78, %c0_79] : memref<3x64xf32, #tpu.memory_space<vmem>>, vector<1x64xf32>
    %131 = vector.broadcast %130 : vector<1x64xf32> to vector<64x64xf32>
    %132 = arith.mulf %128, %131 : vector<64x64xf32>
    %cst_80 = arith.constant dense<0.000000e+00> : vector<64xf32>
    %133 = vector.multi_reduction <add>, %132, %cst_80 [1] : vector<64x64xf32> to vector<64xf32>
    %134 = vector.shape_cast %133 : vector<64xf32> to vector<64x1xf32>
    %c1_81 = arith.constant 1 : index
    %c0_82 = arith.constant 0 : index
    %135 = vector.load %arg11[%c1_81, %c0_82] : memref<3x64xf32, #tpu.memory_space<vmem>>, vector<1x64xf32>
    %136 = vector.broadcast %135 : vector<1x64xf32> to vector<64x64xf32>
    %137 = arith.mulf %128, %136 : vector<64x64xf32>
    %cst_83 = arith.constant dense<0.000000e+00> : vector<64xf32>
    %138 = vector.multi_reduction <add>, %137, %cst_83 [1] : vector<64x64xf32> to vector<64xf32>
    %139 = vector.shape_cast %138 : vector<64xf32> to vector<64x1xf32>
    %c2_84 = arith.constant 2 : index
    %c0_85 = arith.constant 0 : index
    %140 = vector.load %arg11[%c2_84, %c0_85] : memref<3x64xf32, #tpu.memory_space<vmem>>, vector<1x64xf32>
    %141 = vector.broadcast %140 : vector<1x64xf32> to vector<64x64xf32>
    %142 = arith.mulf %128, %141 : vector<64x64xf32>
    %cst_86 = arith.constant dense<0.000000e+00> : vector<64xf32>
    %143 = vector.multi_reduction <add>, %142, %cst_86 [1] : vector<64x64xf32> to vector<64xf32>
    %144 = vector.shape_cast %143 : vector<64xf32> to vector<64x1xf32>
    %145 = tpu.concatenate %134, %139, %144 in 1 : vector<64x1xf32>, vector<64x1xf32>, vector<64x1xf32> -> vector<64x3xf32>
    %c0_87 = arith.constant 0 : index
    %c0_88 = arith.constant 0 : index
    %146 = vector.load %arg12[%c0_87, %c0_88] : memref<1x3xf32, #tpu.memory_space<vmem>>, vector<1x3xf32>
    %147 = vector.broadcast %146 : vector<1x3xf32> to vector<64x3xf32>
    %148 = arith.addf %145, %147 : vector<64x3xf32>
    %149 = math.tanh %148 : vector<64x3xf32>
    %cst_89 = arith.constant 1.000000e+00 : f32
    %150 = vector.broadcast %cst_89 : f32 to vector<64x3xf32>
    %151 = arith.addf %150, %149 : vector<64x3xf32>
    %cst_90 = arith.constant 5.000000e-01 : f32
    %152 = vector.broadcast %cst_90 : f32 to vector<64x3xf32>
    %153 = arith.mulf %152, %151 : vector<64x3xf32>
    %154 = vector.broadcast %129 : vector<1x3xf32> to vector<64x3xf32>
    %155 = arith.addf %154, %153 : vector<64x3xf32>
    %cst_91 = arith.constant 0.000000e+00 : f32
    %156 = vector.broadcast %cst_91 : f32 to vector<64x2xf32>
    %157 = tpu.concatenate %108, %155, %156 in 1 : vector<64x3xf32>, vector<64x3xf32>, vector<64x2xf32> -> vector<64x8xf32>
    %c0_92 = arith.constant 0 : index
    %c0_93 = arith.constant 0 : index
    %158 = vector.load %arg14[%c0_92, %c0_93] : memref<64x8xf32, #tpu.memory_space<vmem>>, vector<64x8xf32>
    tpu.vector_store %arg14[%c0_92, %c0_93], %157 {strides = array<i32>} : memref<64x8xf32, #tpu.memory_space<vmem>>, vector<64x8xf32>,
    return
  }
  func.func @transform_0(%arg0: i32) -> (i32, i32) {
    %c0_i32 = arith.constant 0 : i32
    %c0_i32_0 = arith.constant 0 : i32
    return %arg0, %c0_i32 : i32, i32
  }
  func.func @transform_1(%arg0: i32) -> (i32, i32) {
    %c0_i32 = arith.constant 0 : i32
    %c0_i32_0 = arith.constant 0 : i32
    %c0_i32_1 = arith.constant 0 : i32
    return %c0_i32, %c0_i32_0 : i32, i32
  }
  func.func @transform_2(%arg0: i32) -> (i32, i32) {
    %c0_i32 = arith.constant 0 : i32
    %c0_i32_0 = arith.constant 0 : i32
    %c0_i32_1 = arith.constant 0 : i32
    return %c0_i32, %c0_i32_0 : i32, i32
  }
  func.func @transform_3(%arg0: i32) -> (i32, i32) {
    %c0_i32 = arith.constant 0 : i32
    %c0_i32_0 = arith.constant 0 : i32
    %c0_i32_1 = arith.constant 0 : i32
    return %c0_i32, %c0_i32_0 : i32, i32
  }
  func.func @transform_4(%arg0: i32) -> (i32, i32) {
    %c0_i32 = arith.constant 0 : i32
    %c0_i32_0 = arith.constant 0 : i32
    %c0_i32_1 = arith.constant 0 : i32
    return %c0_i32, %c0_i32_0 : i32, i32
  }
  func.func @transform_5(%arg0: i32) -> (i32, i32) {
    %c0_i32 = arith.constant 0 : i32
    %c0_i32_0 = arith.constant 0 : i32
    %c0_i32_1 = arith.constant 0 : i32
    return %c0_i32, %c0_i32_0 : i32, i32
  }
  func.func @transform_6(%arg0: i32) -> (i32, i32, i32) {
    %c0_i32 = arith.constant 0 : i32
    %c0_i32_0 = arith.constant 0 : i32
    %c0_i32_1 = arith.constant 0 : i32
    %c0_i32_2 = arith.constant 0 : i32
    return %c0_i32, %c0_i32_0, %c0_i32_1 : i32, i32, i32
  }
  func.func @transform_7(%arg0: i32) -> (i32, i32, i32) {
    %c0_i32 = arith.constant 0 : i32
    %c0_i32_0 = arith.constant 0 : i32
    %c0_i32_1 = arith.constant 0 : i32
    %c0_i32_2 = arith.constant 0 : i32
    return %c0_i32, %c0_i32_0, %c0_i32_1 : i32, i32, i32
  }
  func.func @transform_8(%arg0: i32) -> (i32, i32) {
    %c0_i32 = arith.constant 0 : i32
    %c0_i32_0 = arith.constant 0 : i32
    %c0_i32_1 = arith.constant 0 : i32
    return %c0_i32, %c0_i32_0 : i32, i32
  }
  func.func @transform_9(%arg0: i32) -> (i32, i32) {
    %c0_i32 = arith.constant 0 : i32
    %c0_i32_0 = arith.constant 0 : i32
    %c0_i32_1 = arith.constant 0 : i32
    return %c0_i32, %c0_i32_0 : i32, i32
  }
  func.func @transform_10(%arg0: i32) -> (i32, i32) {
    %c0_i32 = arith.constant 0 : i32
    %c0_i32_0 = arith.constant 0 : i32
    %c0_i32_1 = arith.constant 0 : i32
    return %c0_i32, %c0_i32_0 : i32, i32
  }
  func.func @transform_11(%arg0: i32) -> (i32, i32) {
    %c0_i32 = arith.constant 0 : i32
    %c0_i32_0 = arith.constant 0 : i32
    %c0_i32_1 = arith.constant 0 : i32
    return %c0_i32, %c0_i32_0 : i32, i32
  }
  func.func @transform_12(%arg0: i32) -> (i32, i32) {
    %c0_i32 = arith.constant 0 : i32
    %c0_i32_0 = arith.constant 0 : i32
    %c0_i32_1 = arith.constant 0 : i32
    return %c0_i32, %c0_i32_0 : i32, i32
  }
  func.func @transform_13(%arg0: i32) -> (i32, i32) {
    %c0_i32 = arith.constant 0 : i32
    %c0_i32_0 = arith.constant 0 : i32
    return %arg0, %c0_i32 : i32, i32
  }
}

</mosaic_0001>

<llo_original>
// kernel: fwd.1
$region0: #{fwd.1}
  #allocation0 [shape = 'u32[]', space=smem, size = 0x4, offset = 0x4, fixed_abs, tag = 'smem constant byte address 0x4 - core index']
  #allocation1 [shape = 'u32[72,128]{1,0:T(1,128)}', space=vmem, size = 0x9000, scoped, tag = 'internal scratch']
  %s0 = inlined_call_operand.vmem [shape: f32[256,3], index: 0, kind: input, shape index: {}]
  %s1 = inlined_call_operand.vmem [shape: f32[3,64], index: 1, kind: input, shape index: {}]
  %s2 = inlined_call_operand.vmem [shape: f32[3,64], index: 2, kind: input, shape index: {}]
  %s3 = inlined_call_operand.vmem [shape: bf16[64,64], index: 3, kind: input, shape index: {}]
  %s4 = inlined_call_operand.vmem [shape: bf16[64,64], index: 4, kind: input, shape index: {}]
  %s5 = inlined_call_operand.vmem [shape: f32[1,64], index: 5, kind: input, shape index: {}]
  %s6 = inlined_call_operand.vmem [shape: bf16[6,64,64], index: 6, kind: input, shape index: {}]
  %s7 = inlined_call_operand.vmem [shape: f32[6,1,64], index: 7, kind: input, shape index: {}]
  %s8 = inlined_call_operand.vmem [shape: f32[3,64], index: 8, kind: input, shape index: {}]
  %s9 = inlined_call_operand.vmem [shape: f32[1,3], index: 9, kind: input, shape index: {}]
  %s10 = inlined_call_operand.vmem [shape: f32[3,64], index: 10, kind: input, shape index: {}]
  %s11 = inlined_call_operand.vmem [shape: f32[1,3], index: 11, kind: input, shape index: {}]
  %s12 = inlined_call_operand.vmem [shape: f32[1,3], index: 12, kind: input, shape index: {}]
  %s13 = inlined_call_operand.vmem [shape: f32[256,8], index: 13, kind: output, shape index: {}]
  %s14 = sld [smem:[#allocation0]]
  $region85: #{fwd.1} parent=0
    _
  %s16 = ssub.s32 1, %s14
  %s17 = scalar_select 0, %s16, %s14
  loop: start=0, step=1, limit=6
  $region2: #{fwd.1} parent=0 // loop_pre_header
    _
  $region3: #{fwd.1} parent=0 // loop_header
    %s19 = sphi 0, %s23
    %p20 = scmp.ge.s32.totalorder %s19, 6
    %s29 = sphi 0, %s31
    %s32 = sphi 0, %s29
    %s33 = sphi 0, %s32
    %s49 = sphi 0, %s33
    %s53 = sphi 0, %s53
    %s55 = sphi 0, %s53
    %s56 = sphi 0, %s55
    %s70 = sphi 0, %s56
    %s74 = sphi 0, %s74
    %s76 = sphi 0, %s74
    %s77 = sphi 0, %s76
    %s91 = sphi 0, %s77
    %s95 = sphi 0, %s95
    %s97 = sphi 0, %s95
    %s98 = sphi 0, %s97
    %s112 = sphi 0, %s98
    %s116 = sphi 0, %s116
    %s118 = sphi 0, %s116
    %s119 = sphi 0, %s118
    %s133 = sphi 0, %s119
    %s137 = sphi 0, %s137
    %s139 = sphi 0, %s137
    %s140 = sphi 0, %s139
    %s154 = sphi 0, %s140
    %s158 = sphi 0, %s158
    %s160 = sphi 0, %s158
    %s161 = sphi 0, %s160
    %s175 = sphi 0, %s161
    %s179 = sphi 0, %s179
    %s181 = sphi 0, %s179
    %s182 = sphi 0, %s181
    %s196 = sphi 0, %s182
    %s200 = sphi 0, %s200
    %s202 = sphi 0, %s200
    %s203 = sphi 0, %s202
    %s217 = sphi 0, %s203
    %s221 = sphi 0, %s221
    %s223 = sphi 0, %s221
    %s224 = sphi 0, %s223
    %s238 = sphi 0, %s224
    %s242 = sphi 0, %s242
    %s244 = sphi 0, %s242
    %s245 = sphi 0, %s244
    %s259 = sphi 0, %s245
    %s263 = sphi 0, %s263
    %s265 = sphi 0, %s263
    %s266 = sphi 0, %s265
    %s280 = sphi 0, %s266
    %s284 = sphi 0, %s284
    %s286 = sphi 0, %s284
    %s287 = sphi 0, %s286
    %s301 = sphi 0, %s287
    %s307 = sphi 0, %s309
    %s310 = sphi 0, %s307
    %s311 = sphi 0, %s310
    %s327 = sphi 0, %s311
  $region4: #{fwd.1} parent=0 // loop_header_branch
    %22 = sbr.rel (%p20) target = $region8
  $region5: #{fwd.1} parent=0 // loop_body
    %s24 = ssub.s32 %s19, 1
    %s25 = ssub.s32 %s19, 2
    %s26 = sadd.s32 %s19, 1
    %s27 = ssub.s32 %s19, %s26
    %p28 = scmp.eq.s32.totalorder %s27, 0
    %s30 = sadd.s32 %s29, 1
    %s31 = scalar_select %p28, %s29, %s30
    %p34 = pneg %p28
    %p35 = scmp.eq.s32.totalorder %s19, 3
    %p36 = por %p34, %p35
    %p37 = scmp.ne.s32.totalorder %s29, %s32
    %p38 = scmp.eq.s32.totalorder %s19, 0
    %p39 = por %p37, %p38
    %p40 = scmp.ne.s32.totalorder %s29, %s32
    %p41 = scmp.eq.s32.totalorder %s24, 3
    %p42 = por %p40, %p41
    %p43 = scmp.ne.s32.totalorder %s32, %s33
    %p44 = scmp.eq.s32.totalorder %s24, 0
    %p45 = por %p43, %p44
    %p46 = scmp.ne.s32.totalorder %s32, %s33
    %p47 = scmp.eq.s32.totalorder %s25, 3
    %p48 = por %p46, %p47
    %p50 = scmp.ne.s32.totalorder %s33, %s49
    %p51 = scmp.eq.s32.totalorder %s25, 0
    %p52 = por %p50, %p51
    %s54 = sadd.s32 %s53, 1
    %p57 = scmp.eq.s32.totalorder %s19, 3
    %p58 = scmp.ne.s32.totalorder %s53, %s55
    %p59 = scmp.eq.s32.totalorder %s19, 0
    %p60 = por %p58, %p59
    %p61 = scmp.ne.s32.totalorder %s53, %s55
    %p62 = scmp.eq.s32.totalorder %s24, 3
    %p63 = por %p61, %p62
    %p64 = scmp.ne.s32.totalorder %s55, %s56
    %p65 = scmp.eq.s32.totalorder %s24, 0
    %p66 = por %p64, %p65
    %p67 = scmp.ne.s32.totalorder %s55, %s56
    %p68 = scmp.eq.s32.totalorder %s25, 3
    %p69 = por %p67, %p68
    %p71 = scmp.ne.s32.totalorder %s56, %s70
    %p72 = scmp.eq.s32.totalorder %s25, 0
    %p73 = por %p71, %p72
    %s75 = sadd.s32 %s74, 1
    %p78 = scmp.eq.s32.totalorder %s19, 3
    %p79 = scmp.ne.s32.totalorder %s74, %s76
    %p80 = scmp.eq.s32.totalorder %s19, 0
    %p81 = por %p79, %p80
    %p82 = scmp.ne.s32.totalorder %s74, %s76
    %p83 = scmp.eq.s32.totalorder %s24, 3
    %p84 = por %p82, %p83
    %p85 = scmp.ne.s32.totalorder %s76, %s77
    %p86 = scmp.eq.s32.totalorder %s24, 0
    %p87 = por %p85, %p86
    %p88 = scmp.ne.s32.totalorder %s76, %s77
    %p89 = scmp.eq.s32.totalorder %s25, 3
    %p90 = por %p88, %p89
    %p92 = scmp.ne.s32.totalorder %s77, %s91
    %p93 = scmp.eq.s32.totalorder %s25, 0
    %p94 = por %p92, %p93
    %s96 = sadd.s32 %s95, 1
    %p99 = scmp.eq.s32.totalorder %s19, 3
    %p100 = scmp.ne.s32.totalorder %s95, %s97
    %p101 = scmp.eq.s32.totalorder %s19, 0
    %p102 = por %p100, %p101
    %p103 = scmp.ne.s32.totalorder %s95, %s97
    %p104 = scmp.eq.s32.totalorder %s24, 3
    %p105 = por %p103, %p104
    %p106 = scmp.ne.s32.totalorder %s97, %s98
    %p107 = scmp.eq.s32.totalorder %s24, 0
    %p108 = por %p106, %p107
    %p109 = scmp.ne.s32.totalorder %s97, %s98
    %p110 = scmp.eq.s32.totalorder %s25, 3
    %p111 = por %p109, %p110
    %p113 = scmp.ne.s32.totalorder %s98, %s112
    %p114 = scmp.eq.s32.totalorder %s25, 0
    %p115 = por %p113, %p114
    %s117 = sadd.s32 %s116, 1
    %p120 = scmp.eq.s32.totalorder %s19, 3
    %p121 = scmp.ne.s32.totalorder %s116, %s118
    %p122 = scmp.eq.s32.totalorder %s19, 0
    %p123 = por %p121, %p122
    %p124 = scmp.ne.s32.totalorder %s116, %s118
    %p125 = scmp.eq.s32.totalorder %s24, 3
    %p126 = por %p124, %p125
    %p127 = scmp.ne.s32.totalorder %s118, %s119
    %p128 = scmp.eq.s32.totalorder %s24, 0
    %p129 = por %p127, %p128
    %p130 = scmp.ne.s32.totalorder %s118, %s119
    %p131 = scmp.eq.s32.totalorder %s25, 3
    %p132 = por %p130, %p131
    %p134 = scmp.ne.s32.totalorder %s119, %s133
    %p135 = scmp.eq.s32.totalorder %s25, 0
    %p136 = por %p134, %p135
    %s138 = sadd.s32 %s137, 1
    %p141 = scmp.eq.s32.totalorder %s19, 3
    %p142 = scmp.ne.s32.totalorder %s137, %s139
    %p143 = scmp.eq.s32.totalorder %s19, 0
    %p144 = por %p142, %p143
    %p145 = scmp.ne.s32.totalorder %s137, %s139
    %p146 = scmp.eq.s32.totalorder %s24, 3
    %p147 = por %p145, %p146
    %p148 = scmp.ne.s32.totalorder %s139, %s140
    %p149 = scmp.eq.s32.totalorder %s24, 0
    %p150 = por %p148, %p149
    %p151 = scmp.ne.s32.totalorder %s139, %s140
    %p152 = scmp.eq.s32.totalorder %s25, 3
    %p153 = por %p151, %p152
    %p155 = scmp.ne.s32.totalorder %s140, %s154
    %p156 = scmp.eq.s32.totalorder %s25, 0
    %p157 = por %p155, %p156
    %s159 = sadd.s32 %s158, 1
    %p162 = scmp.eq.s32.totalorder %s19, 3
    %p163 = scmp.ne.s32.totalorder %s158, %s160
    %p164 = scmp.eq.s32.totalorder %s19, 0
    %p165 = por %p163, %p164
    %p166 = scmp.ne.s32.totalorder %s158, %s160
    %p167 = scmp.eq.s32.totalorder %s24, 3
    %p168 = por %p166, %p167
    %p169 = scmp.ne.s32.totalorder %s160, %s161
    %p170 = scmp.eq.s32.totalorder %s24, 0
    %p171 = por %p169, %p170
    %p172 = scmp.ne.s32.totalorder %s160, %s161
    %p173 = scmp.eq.s32.totalorder %s25, 3
    %p174 = por %p172, %p173
    %p176 = scmp.ne.s32.totalorder %s161, %s175
    %p177 = scmp.eq.s32.totalorder %s25, 0
    %p178 = por %p176, %p177
    %s180 = sadd.s32 %s179, 1
    %p183 = scmp.eq.s32.totalorder %s19, 3
    %p184 = scmp.ne.s32.totalorder %s179, %s181
    %p185 = scmp.eq.s32.totalorder %s19, 0
    %p186 = por %p184, %p185
    %p187 = scmp.ne.s32.totalorder %s179, %s181
    %p188 = scmp.eq.s32.totalorder %s24, 3
    %p189 = por %p187, %p188
    %p190 = scmp.ne.s32.totalorder %s181, %s182
    %p191 = scmp.eq.s32.totalorder %s24, 0
    %p192 = por %p190, %p191
    %p193 = scmp.ne.s32.totalorder %s181, %s182
    %p194 = scmp.eq.s32.totalorder %s25, 3
    %p195 = por %p193, %p194
    %p197 = scmp.ne.s32.totalorder %s182, %s196
    %p198 = scmp.eq.s32.totalorder %s25, 0
    %p199 = por %p197, %p198
    %s201 = sadd.s32 %s200, 1
    %p204 = scmp.eq.s32.totalorder %s19, 3
    %p205 = scmp.ne.s32.totalorder %s200, %s202
    %p206 = scmp.eq.s32.totalorder %s19, 0
    %p207 = por %p205, %p206
    %p208 = scmp.ne.s32.totalorder %s200, %s202
    %p209 = scmp.eq.s32.totalorder %s24, 3
    %p210 = por %p208, %p209
    %p211 = scmp.ne.s32.totalorder %s202, %s203
    %p212 = scmp.eq.s32.totalorder %s24, 0
    %p213 = por %p211, %p212
    %p214 = scmp.ne.s32.totalorder %s202, %s203
    %p215 = scmp.eq.s32.totalorder %s25, 3
    %p216 = por %p214, %p215
    %p218 = scmp.ne.s32.totalorder %s203, %s217
    %p219 = scmp.eq.s32.totalorder %s25, 0
    %p220 = por %p218, %p219
    %s222 = sadd.s32 %s221, 1
    %p225 = scmp.eq.s32.totalorder %s19, 3
    %p226 = scmp.ne.s32.totalorder %s221, %s223
    %p227 = scmp.eq.s32.totalorder %s19, 0
    %p228 = por %p226, %p227
    %p229 = scmp.ne.s32.totalorder %s221, %s223
    %p230 = scmp.eq.s32.totalorder %s24, 3
    %p231 = por %p229, %p230
    %p232 = scmp.ne.s32.totalorder %s223, %s224
    %p233 = scmp.eq.s32.totalorder %s24, 0
    %p234 = por %p232, %p233
    %p235 = scmp.ne.s32.totalorder %s223, %s224
    %p236 = scmp.eq.s32.totalorder %s25, 3
    %p237 = por %p235, %p236
    %p239 = scmp.ne.s32.totalorder %s224, %s238
    %p240 = scmp.eq.s32.totalorder %s25, 0
    %p241 = por %p239, %p240
    %s243 = sadd.s32 %s242, 1
    %p246 = scmp.eq.s32.totalorder %s19, 3
    %p247 = scmp.ne.s32.totalorder %s242, %s244
    %p248 = scmp.eq.s32.totalorder %s19, 0
    %p249 = por %p247, %p248
    %p250 = scmp.ne.s32.totalorder %s242, %s244
    %p251 = scmp.eq.s32.totalorder %s24, 3
    %p252 = por %p250, %p251
    %p253 = scmp.ne.s32.totalorder %s244, %s245
    %p254 = scmp.eq.s32.totalorder %s24, 0
    %p255 = por %p253, %p254
    %p256 = scmp.ne.s32.totalorder %s244, %s245
    %p257 = scmp.eq.s32.totalorder %s25, 3
    %p258 = por %p256, %p257
    %p260 = scmp.ne.s32.totalorder %s245, %s259
    %p261 = scmp.eq.s32.totalorder %s25, 0
    %p262 = por %p260, %p261
    %s264 = sadd.s32 %s263, 1
    %p267 = scmp.eq.s32.totalorder %s19, 3
    %p268 = scmp.ne.s32.totalorder %s263, %s265
    %p269 = scmp.eq.s32.totalorder %s19, 0
    %p270 = por %p268, %p269
    %p271 = scmp.ne.s32.totalorder %s263, %s265
    %p272 = scmp.eq.s32.totalorder %s24, 3
    %p273 = por %p271, %p272
    %p274 = scmp.ne.s32.totalorder %s265, %s266
    %p275 = scmp.eq.s32.totalorder %s24, 0
    %p276 = por %p274, %p275
    %p277 = scmp.ne.s32.totalorder %s265, %s266
    %p278 = scmp.eq.s32.totalorder %s25, 3
    %p279 = por %p277, %p278
    %p281 = scmp.ne.s32.totalorder %s266, %s280
    %p282 = scmp.eq.s32.totalorder %s25, 0
    %p283 = por %p281, %p282
    %s285 = sadd.s32 %s284, 1
    %p288 = scmp.eq.s32.totalorder %s19, 3
    %p289 = scmp.ne.s32.totalorder %s284, %s286
    %p290 = scmp.eq.s32.totalorder %s19, 0
    %p291 = por %p289, %p290
    %p292 = scmp.ne.s32.totalorder %s284, %s286
    %p293 = scmp.eq.s32.totalorder %s24, 3
    %p294 = por %p292, %p293
    %p295 = scmp.ne.s32.totalorder %s286, %s287
    %p296 = scmp.eq.s32.totalorder %s24, 0
    %p297 = por %p295, %p296
    %p298 = scmp.ne.s32.totalorder %s286, %s287
    %p299 = scmp.eq.s32.totalorder %s25, 3
    %p300 = por %p298, %p299
    %p302 = scmp.ne.s32.totalorder %s287, %s301
    %p303 = scmp.eq.s32.totalorder %s25, 0
    %p304 = por %p302, %p303
    %s305 = ssub.s32 %s19, %s26
    %p306 = scmp.eq.s32.totalorder %s305, 0
    %s308 = sadd.s32 %s307, 1
    %s309 = scalar_select %p306, %s307, %s308
    %p312 = pneg %p306
    %p313 = scmp.eq.s32.totalorder %s19, 3
    %p314 = por %p312, %p313
    %p315 = scmp.ne.s32.totalorder %s307, %s310
    %p316 = scmp.eq.s32.totalorder %s19, 0
    %p317 = por %p315, %p316
    %p318 = scmp.ne.s32.totalorder %s307, %s310
    %p319 = scmp.eq.s32.totalorder %s24, 3
    %p320 = por %p318, %p319
    %p321 = scmp.ne.s32.totalorder %s310, %s311
    %p322 = scmp.eq.s32.totalorder %s24, 0
    %p323 = por %p321, %p322
    %p324 = scmp.ne.s32.totalorder %s310, %s311
    %p325 = scmp.eq.s32.totalorder %s25, 3
    %p326 = por %p324, %p325
    %p328 = scmp.ne.s32.totalorder %s311, %s327
    %p329 = scmp.eq.s32.totalorder %s25, 0
    %p330 = por %p328, %p329
    %p331 = scmp.le.s32.totalorder 1, %s19
    %p332 = scmp.lt.s32.totalorder %s19, 5
    %p333 = pnand %p331, %p332
    %p334 = pneg %p333
    // Predicated region
    $region9: #{fwd.1} parent=5 // pred_check
      _
    $region10: #{fwd.1} parent=5 // pred_check_branch
      %336 = sbr.rel (%p333) target = $region12
    $region11: #{fwd.1} parent=5 // pred_region
      %s337 = ssub.s32 %s19, 1
      // Predicated region
      $region13: #{fwd.1} parent=11 // pred_check
        %p338 = pneg %p66
      $region14: #{fwd.1} parent=11 // pred_check_branch
        %340 = sbr.rel (%p338) target = $region16
      $region15: #{fwd.1} parent=11 // pred_region
        _
      $region16: #{fwd.1} parent=11 // pred_fallthru
        _
      // Predicated region
      $region17: #{fwd.1} parent=11 // pred_check
        %p341 = pneg %p87
      $region18: #{fwd.1} parent=11 // pred_check_branch
        %343 = sbr.rel (%p341) target = $region20
      $region19: #{fwd.1} parent=11 // pred_region
        _
      $region20: #{fwd.1} parent=11 // pred_fallthru
        _
      // Predicated region
      $region21: #{fwd.1} parent=11 // pred_check
        %p344 = pneg %p108
      $region22: #{fwd.1} parent=11 // pred_check_branch
        %346 = sbr.rel (%p344) target = $region24
      $region23: #{fwd.1} parent=11 // pred_region
        _
      $region24: #{fwd.1} parent=11 // pred_fallthru
        _
      // Predicated region
      $region25: #{fwd.1} parent=11 // pred_check
        %p347 = pneg %p129
      $region26: #{fwd.1} parent=11 // pred_check_branch
        %349 = sbr.rel (%p347) target = $region28
      $region27: #{fwd.1} parent=11 // pred_region
        _
      $region28: #{fwd.1} parent=11 // pred_fallthru
        _
      // Predicated region
      $region29: #{fwd.1} parent=11 // pred_check
        %p350 = pneg %p150
      $region30: #{fwd.1} parent=11 // pred_check_branch
        %352 = sbr.rel (%p350) target = $region32
      $region31: #{fwd.1} parent=11 // pred_region
        _
      $region32: #{fwd.1} parent=11 // pred_fallthru
        _
      // Predicated region
      $region33: #{fwd.1} parent=11 // pred_check
        %p353 = pneg %p171
      $region34: #{fwd.1} parent=11 // pred_check_branch
        %355 = sbr.rel (%p353) target = $region36
      $region35: #{fwd.1} parent=11 // pred_region
        _
      $region36: #{fwd.1} parent=11 // pred_fallthru
        _
      // Predicated region
      $region37: #{fwd.1} parent=11 // pred_check
        %p356 = pneg %p192
      $region38: #{fwd.1} parent=11 // pred_check_branch
        %358 = sbr.rel (%p356) target = $region40
      $region39: #{fwd.1} parent=11 // pred_region
        _
      $region40: #{fwd.1} parent=11 // pred_fallthru
        _
      // Predicated region
      $region41: #{fwd.1} parent=11 // pred_check
        %p359 = pneg %p213
      $region42: #{fwd.1} parent=11 // pred_check_branch
        %361 = sbr.rel (%p359) target = $region44
      $region43: #{fwd.1} parent=11 // pred_region
        _
      $region44: #{fwd.1} parent=11 // pred_fallthru
        _
      // Predicated region
      $region45: #{fwd.1} parent=11 // pred_check
        %p362 = pneg %p234
      $region46: #{fwd.1} parent=11 // pred_check_branch
        %364 = sbr.rel (%p362) target = $region48
      $region47: #{fwd.1} parent=11 // pred_region
        _
      $region48: #{fwd.1} parent=11 // pred_fallthru
        _
      // Predicated region
      $region49: #{fwd.1} parent=11 // pred_check
        %p365 = pneg %p255
      $region50: #{fwd.1} parent=11 // pred_check_branch
        %367 = sbr.rel (%p365) target = $region52
      $region51: #{fwd.1} parent=11 // pred_region
        _
      $region52: #{fwd.1} parent=11 // pred_fallthru
        _
      // Predicated region
      $region53: #{fwd.1} parent=11 // pred_check
        %p368 = pneg %p276
      $region54: #{fwd.1} parent=11 // pred_check_branch
        %370 = sbr.rel (%p368) target = $region56
      $region55: #{fwd.1} parent=11 // pred_region
        _
      $region56: #{fwd.1} parent=11 // pred_fallthru
        _
      // Predicated region
      $region57: #{fwd.1} parent=11 // pred_check
        %p371 = pneg %p297
      $region58: #{fwd.1} parent=11 // pred_check_branch
        %373 = sbr.rel (%p371) target = $region60
      $region59: #{fwd.1} parent=11 // pred_region
        _
      $region60: #{fwd.1} parent=11 // pred_fallthru
        _
    $region12: #{fwd.1} parent=5 // pred_fallthru
      _
    %p374 = scmp.lt.s32.totalorder %s19, 4
    // Predicated region
    $region61: #{fwd.1} parent=5 // pred_check
      %p375 = pneg %p374
    $region62: #{fwd.1} parent=5 // pred_check_branch
      %377 = sbr.rel (%p375) target = $region64
    $region63: #{fwd.1} parent=5 // pred_region
      // Predicated region
      $region65: #{fwd.1} parent=63 // pred_check
        %p378 = pneg %p39
      $region66: #{fwd.1} parent=63 // pred_check_branch
        %380 = sbr.rel (%p378) target = $region68
      $region67: #{fwd.1} parent=63 // pred_region
        %s381 = smul.u32 8, %s19
        %p382 = scmp.lt.s32.totalorder %s381, 31
        %s383 = scalar_select %p382, %s381, 31
        %s384 = smul.addr %s383, 8
        %s385 = scalar_lea.vmem %s0, %s384
        %s386 = smul.u32 8, %s19
      $region68: #{fwd.1} parent=63 // pred_fallthru
        _
    $region64: #{fwd.1} parent=5 // pred_fallthru
      _
    %p387 = scmp.le.s32.totalorder 1, %s19
    %p388 = scmp.lt.s32.totalorder %s19, 5
    %p389 = pnand %p387, %p388
    %p390 = pneg %p389
    // Predicated region
    $region69: #{fwd.1} parent=5 // pred_check
      _
    $region70: #{fwd.1} parent=5 // pred_check_branch
      %392 = sbr.rel (%p389) target = $region72
    $region71: #{fwd.1} parent=5 // pred_region
      %s393 = ssub.s32 %s19, 1
      %s394 = smul.u32 8, %s24
      %p395 = scmp.lt.s32.totalorder %s394, 31
      %s396 = scalar_select %p395, %s394, 31
      %s397 = smul.addr %s396, 8
      %s398 = scalar_lea.vmem %s0, %s397
      %p399 = pneg %p45
      %p400 = pneg %p42
      %p401 = pneg %p66
      %p402 = pneg %p63
      %p403 = pneg %p87
      %p404 = pneg %p84
      %p405 = pneg %p108
      %p406 = pneg %p105
      %p407 = pneg %p129
      %p408 = pneg %p126
      %p409 = pneg %p150
      %p410 = pneg %p147
      %p411 = pneg %p171
      %p412 = pneg %p168
      %p413 = pneg %p192
      %p414 = pneg %p189
      %p415 = pneg %p213
      %p416 = pneg %p210
      %p417 = pneg %p234
      %p418 = pneg %p231
      %p419 = pneg %p255
      %p420 = pneg %p252
      %p421 = pneg %p276
      %p422 = pneg %p273
      %p423 = pneg %p297
      %p424 = pneg %p294
      %p425 = pneg %p323
      %p426 = pneg %p320
      %s427 = smul.u32 8, %s24
      %p428 = scmp.lt.s32.totalorder %s427, 31
      %s429 = scalar_select %p428, %s427, 31
      %s430 = smul.addr %s429, 8
      %s431 = scalar_lea.vmem %s13, %s430
      %s432 = smul.u32 8, %s24
      %p433 = scmp.lt.s32.totalorder %s432, 31
      %s434 = scalar_select %p433, %s432, 31
      %s435 = smul.addr %s434, 8
      %s436 = scalar_lea.vmem %s0, %s435
      %s437 = smul.u32 8, %s24
      %s438 = smul.u32 8, %s24
      %p439 = scmp.lt.s32.totalorder %s438, 31
      %s440 = scalar_select %p439, %s438, 31
      %s441 = smul.addr %s440, 8
      %s442 = scalar_lea.vmem %s13, %s441
      %s443 = smul.u32 8, %s24
      %v445 = vld [vmem:[%s436] sm:$0xff]
      %v446 = vld [vmem:[%s436 + $0x8] sm:$0xff]
      %v447 = vld [vmem:[%s436 + $0x10] sm:$0xff]
      %v448 = vld [vmem:[%s436 + $0x18] sm:$0xff]
      %v449 = vld [vmem:[%s436 + $0x20] sm:$0xff]
      %v450 = vld [vmem:[%s436 + $0x28] sm:$0xff]
      %v451 = vld [vmem:[%s436 + $0x30] sm:$0xff]
      %v452 = vld [vmem:[%s436 + $0x38] sm:$0xff]
      %454 = vset.pattern.permute.xlu0 0
      %455 = vperm.xlu0 %454, %v445
      %v456 = vpop.permute.xlu0 %455
      %459 = vset.pattern.permute.xlu0 0
      %460 = vperm.xlu0 %459, %v446
      %v461 = vpop.permute.xlu0 %460
      %464 = vset.pattern.permute.xlu0 0
      %465 = vperm.xlu0 %464, %v447
      %v466 = vpop.permute.xlu0 %465
      %469 = vset.pattern.permute.xlu0 0
      %470 = vperm.xlu0 %469, %v448
      %v471 = vpop.permute.xlu0 %470
      %474 = vset.pattern.permute.xlu0 0
      %475 = vperm.xlu0 %474, %v449
      %v476 = vpop.permute.xlu0 %475
      %479 = vset.pattern.permute.xlu0 0
      %480 = vperm.xlu0 %479, %v450
      %v481 = vpop.permute.xlu0 %480
      %484 = vset.pattern.permute.xlu0 0
      %485 = vperm.xlu0 %484, %v451
      %v486 = vpop.permute.xlu0 %485
      %489 = vset.pattern.permute.xlu0 0
      %490 = vperm.xlu0 %489, %v452
      %v491 = vpop.permute.xlu0 %490
      %v493 = vld [vmem:[%s1] sm:$0x1]
      %v494 = vperm.slane %v493, 0
      %v495 = vmul.f32 %v456, %v494
      %v496 = vmul.f32 %v461, %v494
      %v497 = vmul.f32 %v466, %v494
      %v498 = vmul.f32 %v471, %v494
      %v499 = vmul.f32 %v476, %v494
      %v500 = vmul.f32 %v481, %v494
      %v501 = vmul.f32 %v486, %v494
      %v502 = vmul.f32 %v491, %v494
      %v503 = vld [vmem:[%s2] sm:$0x1]
      %v504 = vperm.slane %v503, 0
      %v505 = vmul.f32 %v456, %v504
      %v506 = vmul.f32 %v461, %v504
      %v507 = vmul.f32 %v466, %v504
      %v508 = vmul.f32 %v471, %v504
      %v509 = vmul.f32 %v476, %v504
      %v510 = vmul.f32 %v481, %v504
      %v511 = vmul.f32 %v486, %v504
      %v512 = vmul.f32 %v491, %v504
      %513 = vset.pattern.permute.xlu0 1
      %514 = vperm.xlu0 %513, %v445
      %v515 = vpop.permute.xlu0 %514
      %517 = vset.pattern.permute.xlu0 1
      %518 = vperm.xlu0 %517, %v446
      %v519 = vpop.permute.xlu0 %518
      %521 = vset.pattern.permute.xlu0 1
      %522 = vperm.xlu0 %521, %v447
      %v523 = vpop.permute.xlu0 %522
      %525 = vset.pattern.permute.xlu0 1
      %526 = vperm.xlu0 %525, %v448
      %v527 = vpop.permute.xlu0 %526
      %529 = vset.pattern.permute.xlu0 1
      %530 = vperm.xlu0 %529, %v449
      %v531 = vpop.permute.xlu0 %530
      %533 = vset.pattern.permute.xlu0 1
      %534 = vperm.xlu0 %533, %v450
      %v535 = vpop.permute.xlu0 %534
      %537 = vset.pattern.permute.xlu0 1
      %538 = vperm.xlu0 %537, %v451
      %v539 = vpop.permute.xlu0 %538
      %541 = vset.pattern.permute.xlu0 1
      %542 = vperm.xlu0 %541, %v452
      %v543 = vpop.permute.xlu0 %542
      %v545 = vld [vmem:[%s1 + $0x1] sm:$0x1]
      %v546 = vperm.slane %v545, 0
      %v547 = vmul.f32 %v515, %v546
      %v548 = vmul.f32 %v519, %v546
      %v549 = vmul.f32 %v523, %v546
      %v550 = vmul.f32 %v527, %v546
      %v551 = vmul.f32 %v531, %v546
      %v552 = vmul.f32 %v535, %v546
      %v553 = vmul.f32 %v539, %v546
      %v554 = vmul.f32 %v543, %v546
      %v555 = vld [vmem:[%s2 + $0x1] sm:$0x1]
      %v556 = vperm.slane %v555, 0
      %v557 = vmul.f32 %v515, %v556
      %v558 = vmul.f32 %v519, %v556
      %v559 = vmul.f32 %v523, %v556
      %v560 = vmul.f32 %v527, %v556
      %v561 = vmul.f32 %v531, %v556
      %v562 = vmul.f32 %v535, %v556
      %v563 = vmul.f32 %v539, %v556
      %v564 = vmul.f32 %v543, %v556
      %v565 = vadd.f32 %v495, %v547
      %v566 = vadd.f32 %v496, %v548
      %v567 = vadd.f32 %v497, %v549
      %v568 = vadd.f32 %v498, %v550
      %v569 = vadd.f32 %v499, %v551
      %v570 = vadd.f32 %v500, %v552
      %v571 = vadd.f32 %v501, %v553
      %v572 = vadd.f32 %v502, %v554
      %v573 = vadd.f32 %v505, %v557
      %v574 = vadd.f32 %v506, %v558
      %v575 = vadd.f32 %v507, %v559
      %v576 = vadd.f32 %v508, %v560
      %v577 = vadd.f32 %v509, %v561
      %v578 = vadd.f32 %v510, %v562
      %v579 = vadd.f32 %v511, %v563
      %v580 = vadd.f32 %v512, %v564
      %581 = vset.pattern.permute.xlu0 2
      %582 = vperm.xlu0 %581, %v445
      %v583 = vpop.permute.xlu0 %582
      %585 = vset.pattern.permute.xlu0 2
      %586 = vperm.xlu0 %585, %v446
      %v587 = vpop.permute.xlu0 %586
      %589 = vset.pattern.permute.xlu0 2
      %590 = vperm.xlu0 %589, %v447
      %v591 = vpop.permute.xlu0 %590
      %593 = vset.pattern.permute.xlu0 2
      %594 = vperm.xlu0 %593, %v448
      %v595 = vpop.permute.xlu0 %594
      %597 = vset.pattern.permute.xlu0 2
      %598 = vperm.xlu0 %597, %v449
      %v599 = vpop.permute.xlu0 %598
      %601 = vset.pattern.permute.xlu0 2
      %602 = vperm.xlu0 %601, %v450
      %v603 = vpop.permute.xlu0 %602
      %605 = vset.pattern.permute.xlu0 2
      %606 = vperm.xlu0 %605, %v451
      %v607 = vpop.permute.xlu0 %606
      %609 = vset.pattern.permute.xlu0 2
      %610 = vperm.xlu0 %609, %v452
      %v611 = vpop.permute.xlu0 %610
      %v613 = vld [vmem:[%s1 + $0x2] sm:$0x1]
      %v614 = vperm.slane %v613, 0
      %v615 = vmul.f32 %v583, %v614
      %v616 = vmul.f32 %v587, %v614
      %v617 = vmul.f32 %v591, %v614
      %v618 = vmul.f32 %v595, %v614
      %v619 = vmul.f32 %v599, %v614
      %v620 = vmul.f32 %v603, %v614
      %v621 = vmul.f32 %v607, %v614
      %v622 = vmul.f32 %v611, %v614
      %v623 = vld [vmem:[%s2 + $0x2] sm:$0x1]
      %v624 = vperm.slane %v623, 0
      %v625 = vmul.f32 %v583, %v624
      %v626 = vmul.f32 %v587, %v624
      %v627 = vmul.f32 %v591, %v624
      %v628 = vmul.f32 %v595, %v624
      %v629 = vmul.f32 %v599, %v624
      %v630 = vmul.f32 %v603, %v624
      %v631 = vmul.f32 %v607, %v624
      %v632 = vmul.f32 %v611, %v624
      %v633 = vadd.f32 %v565, %v615
      %v634 = vadd.f32 %v566, %v616
      %v635 = vadd.f32 %v567, %v617
      %v636 = vadd.f32 %v568, %v618
      %v637 = vadd.f32 %v569, %v619
      %v638 = vadd.f32 %v570, %v620
      %v639 = vadd.f32 %v571, %v621
      %v640 = vadd.f32 %v572, %v622
      %v641 = vadd.f32 %v573, %v625
      %v642 = vadd.f32 %v574, %v626
      %v643 = vadd.f32 %v575, %v627
      %v644 = vadd.f32 %v576, %v628
      %v645 = vadd.f32 %v577, %v629
      %v646 = vadd.f32 %v578, %v630
      %v647 = vadd.f32 %v579, %v631
      %v648 = vadd.f32 %v580, %v632
      %v649 = vand.u32 2147483647, %v633
      %vm650 = vcmp.le.f32.partialorder %v649, 0.7853982
      %vm651 = vcmp.lt.s32.totalorder %v633, 0
      %v652 = vand.u32 %v633, 2139095040
      %v653 = vshrl.u32 %v652, 23
      %v654 = vsub.s32 %v653, 127
      %v655 = vand.u32 2147483647, %v633
      %v656 = vand.u32 %v655, 8388607
      %v657 = vor.u32 %v656, 8388608
      %v658 = vsub.s32 0, %v657
      %v659 = vadd.s32 %v654, 1
      %vm660 = vcmp.gt.s32.totalorder %v659, 0
      %v661 = vsel %vm660, %v659, 0
      %v662 = vshrl.u32 %v661, 5
      %v663 = vand.u32 %v661, 31
      %v664 = vsub.s32 32, %v663
      %v665 = vshrl.u32 683565275, %v664
      %v666 = vshll.u32 683565275, %v663
      %v667 = vshrl.u32 2475754826, %v664
      %v668 = vor.u32 %v666, %v667
      %v669 = vshll.u32 2475754826, %v663
      %v670 = vshrl.u32 2131351028, %v664
      %v671 = vor.u32 %v669, %v670
      %v672 = vshll.u32 2131351028, %v663
      %v673 = vshrl.u32 2102212464, %v664
      %v674 = vor.u32 %v672, %v673
      %v675 = vshll.u32 2102212464, %v663
      %v676 = vshrl.u32 920167782, %v664
      %v677 = vor.u32 %v675, %v676
      %v678 = vshll.u32 920167782, %v663
      %v679 = vshrl.u32 1326507024, %v664
      %v680 = vor.u32 %v678, %v679
      %vm681 = vcmp.lt.s32.totalorder %v662, 1
      %vm682 = vcmp.lt.s32.totalorder %v662, 2
      %vm683 = vcmp.lt.s32.totalorder %v662, 3
      %vm684 = vcmp.lt.s32.totalorder %v662, 4
      %v685 = vsel %vm681, %v665, %v668
      %v686 = vsel %vm684, %v674, 2102212464
      %v687 = vsel %vm683, %v671, %v686
      %v688 = vsel %vm682, %v685, %v687
      %v689 = vsel %vm681, %v668, %v671
      %v690 = vsel %vm684, %v677, 920167782
      %v691 = vsel %vm683, %v674, %v690
      %v692 = vsel %vm682, %v689, %v691
      %v693 = vsel %vm681, %v671, %v674
      %v694 = vsel %vm684, %v680, 1326507024
      %v695 = vsel %vm683, %v677, %v694
      %v696 = vsel %vm682, %v693, %v695
      %v697 = vshll.u32 %v657, 8
      %v698 = vand.u32 %v697, 65535
      %v699 = vshrl.u32 %v697, 16
      %v700 = vand.u32 %v696, 65535
      %v701 = vshrl.u32 %v696, 16
      %v702 = vmul.u32 %v698, %v700
      %v703 = vmul.u32 %v698, %v701
      %v704 = vmul.u32 %v699, %v700
      %v705 = vmul.u32 %v699, %v701
      %v706 = vshll.u32 %v703, 16
      %v707 = vshrl.u32 %v703, 16
      %v708 = vshll.u32 %v704, 16
      %v709 = vshrl.u32 %v704, 16
      %vm710 = vc.u32 %v702, %v706
      %v711 = vsel %vm710, 1, 0
      %v712 = vadd.s32 %v702, %v706
      %v713 = vadd.s32 %v705, %v711
      %vm714 = vc.u32 %v712, %v708
      %v715 = vsel %vm714, 1, 0
      %v716 = vadd.s32 %v712, %v708
      %v717 = vadd.s32 %v713, %v715
      %v718 = vadd.s32 %v717, %v707
      %v719 = vadd.s32 %v718, %v709
      %v720 = vand.u32 %v697, 65535
      %v721 = vshrl.u32 %v697, 16
      %v722 = vand.u32 %v692, 65535
      %v723 = vshrl.u32 %v692, 16
      %v724 = vmul.u32 %v720, %v722
      %v725 = vmul.u32 %v720, %v723
      %v726 = vmul.u32 %v721, %v722
      %v727 = vmul.u32 %v721, %v723
      %v728 = vshll.u32 %v725, 16
      %v729 = vshrl.u32 %v725, 16
      %v730 = vshll.u32 %v726, 16
      %v731 = vshrl.u32 %v726, 16
      %vm732 = vc.u32 %v724, %v728
      %v733 = vsel %vm732, 1, 0
      %v734 = vadd.s32 %v724, %v728
      %v735 = vadd.s32 %v727, %v733
      %vm736 = vc.u32 %v734, %v730
      %v737 = vsel %vm736, 1, 0
      %v738 = vadd.s32 %v734, %v730
      %v739 = vadd.s32 %v735, %v737
      %v740 = vadd.s32 %v739, %v729
      %v741 = vadd.s32 %v740, %v731
      %v742 = vmul.u32 %v697, %v688
      %v743 = vadd.s32 %v719, %v738
      %vm744 = vc.u32 %v719, %v738
      %v745 = vadd.s32 %v741, 1
      %v746 = vsel %vm744, %v745, %v741
      %v747 = vadd.s32 %v742, %v746
      %v748 = vadd.s32 %v747, 536870912
      %v749 = vshrl.u32 %v748, 30
      %v750 = vshll.u32 %v749, 30
      %v751 = vsub.s32 %v747, %v750
      %vm752 = vcmp.lt.s32.totalorder %v751, 0
      %v753 = vsub.s32 0, %v751
      %v754 = vsel %vm752, %v753, %v751
      %v755 = vclz %v754
      %v756 = vsub.s32 %v755, 2
      %vm757 = vcmp.gt.s32.totalorder 0, %v756
      %v758 = vsel %vm757, 0, %v756
      %v759 = vsub.s32 32, %v758
      %v760 = vshll.u32 %v751, %v758
      %v761 = vshrl.u32 %v743, %v759
      %v762 = vor.u32 %v760, %v761
      %v763 = vsub.s32 4294967266, %v758
      %v764 = vadd.s32 %v763, 127
      %v765 = vshll.u32 %v764, 23
      %v766 = vor.u32 4788187, %v765
      %v767 = vand.u32 2147483647, %v766
      %v769 = vcvt.s32.f32 %v762
      %v770 = vmul.f32 %v769, %v767
      %v771 = vxor.u32 %v770, 2147483648
      %v772 = vsel %vm651, %v771, %v770
      %v773 = vsub.s32 4, %v749
      %v774 = vsel %vm651, %v773, %v749
      %v775 = vsel %vm650, %v633, %v772
      %v776 = vsel %vm650, 0, %v774
      %v777 = vmul.f32 %v775, %v775
      %v778 = vmul.f32 %v777, -0.001358992
      %v779 = vadd.f32 %v778, 0.041655596
      %v780 = vmul.f32 %v777, %v779
      %v781 = vadd.f32 %v780, -0.4999988
      %v782 = vmul.f32 %v777, %v781
      %v783 = vadd.f32 1.0, %v782
      %v784 = vmul.f32 %v775, %v775
      %v785 = vmul.f32 %v784, -0.00019511016
      %v786 = vadd.f32 %v785, 0.008332121
      %v787 = vmul.f32 %v784, %v786
      %v788 = vadd.f32 %v787, -0.16666654
      %v789 = vmul.f32 %v784, %v788
      %v790 = vadd.f32 %v789, 1.0
      %v791 = vmul.f32 %v790, %v775
      %vm792 = vweird.f32 %v633
      %v793 = vadd.s32 %v776, 3
      %v794 = vand.u32 %v793, 3
      %vm795 = vcmp.lt.s32.totalorder %v794, 2
      %vm796 = vcmp.eq.s32.totalorder %v794, 0
      %v797 = vxor.u32 %v791, 2147483648
      %v798 = vsel %vm796, %v783, %v797
      %vm799 = vcmp.eq.s32.totalorder %v794, 2
      %v800 = vxor.u32 %v783, 2147483648
      %v801 = vsel %vm799, %v800, %v791
      %v802 = vsel %vm795, %v798, %v801
      %v803 = vsel %vm792, nan, %v802
      %v804 = vand.u32 2147483647, %v634
      %vm805 = vcmp.le.f32.partialorder %v804, 0.7853982
      %vm806 = vcmp.lt.s32.totalorder %v634, 0
      %v807 = vand.u32 %v634, 2139095040
      %v808 = vshrl.u32 %v807, 23
      %v809 = vsub.s32 %v808, 127
      %v810 = vand.u32 2147483647, %v634
      %v811 = vand.u32 %v810, 8388607
      %v812 = vor.u32 %v811, 8388608
      %v813 = vsub.s32 0, %v812
      %v814 = vadd.s32 %v809, 1
      %vm815 = vcmp.gt.s32.totalorder %v814, 0
      %v816 = vsel %vm815, %v814, 0
      %v817 = vshrl.u32 %v816, 5
      %v818 = vand.u32 %v816, 31
      %v819 = vsub.s32 32, %v818
      %v820 = vshrl.u32 683565275, %v819
      %v821 = vshll.u32 683565275, %v818
      %v822 = vshrl.u32 2475754826, %v819
      %v823 = vor.u32 %v821, %v822
      %v824 = vshll.u32 2475754826, %v818
      %v825 = vshrl.u32 2131351028, %v819
      %v826 = vor.u32 %v824, %v825
      %v827 = vshll.u32 2131351028, %v818
      %v828 = vshrl.u32 2102212464, %v819
      %v829 = vor.u32 %v827, %v828
      %v830 = vshll.u32 2102212464, %v818
      %v831 = vshrl.u32 920167782, %v819
      %v832 = vor.u32 %v830, %v831
      %v833 = vshll.u32 920167782, %v818
      %v834 = vshrl.u32 1326507024, %v819
      %v835 = vor.u32 %v833, %v834
      %vm836 = vcmp.lt.s32.totalorder %v817, 1
      %vm837 = vcmp.lt.s32.totalorder %v817, 2
      %vm838 = vcmp.lt.s32.totalorder %v817, 3
      %vm839 = vcmp.lt.s32.totalorder %v817, 4
      %v840 = vsel %vm836, %v820, %v823
      %v841 = vsel %vm839, %v829, 2102212464
      %v842 = vsel %vm838, %v826, %v841
      %v843 = vsel %vm837, %v840, %v842
      %v844 = vsel %vm836, %v823, %v826
      %v845 = vsel %vm839, %v832, 920167782
      %v846 = vsel %vm838, %v829, %v845
      %v847 = vsel %vm837, %v844, %v846
      %v848 = vsel %vm836, %v826, %v829
      %v849 = vsel %vm839, %v835, 1326507024
      %v850 = vsel %vm838, %v832, %v849
      %v851 = vsel %vm837, %v848, %v850
      %v852 = vshll.u32 %v812, 8
      %v853 = vand.u32 %v852, 65535
      %v854 = vshrl.u32 %v852, 16
      %v855 = vand.u32 %v851, 65535
      %v856 = vshrl.u32 %v851, 16
      %v857 = vmul.u32 %v853, %v855
      %v858 = vmul.u32 %v853, %v856
      %v859 = vmul.u32 %v854, %v855
      %v860 = vmul.u32 %v854, %v856
      %v861 = vshll.u32 %v858, 16
      %v862 = vshrl.u32 %v858, 16
      %v863 = vshll.u32 %v859, 16
      %v864 = vshrl.u32 %v859, 16
      %vm865 = vc.u32 %v857, %v861
      %v866 = vsel %vm865, 1, 0
      %v867 = vadd.s32 %v857, %v861
      %v868 = vadd.s32 %v860, %v866
      %vm869 = vc.u32 %v867, %v863
      %v870 = vsel %vm869, 1, 0
      %v871 = vadd.s32 %v867, %v863
      %v872 = vadd.s32 %v868, %v870
      %v873 = vadd.s32 %v872, %v862
      %v874 = vadd.s32 %v873, %v864
      %v875 = vand.u32 %v852, 65535
      %v876 = vshrl.u32 %v852, 16
      %v877 = vand.u32 %v847, 65535
      %v878 = vshrl.u32 %v847, 16
      %v879 = vmul.u32 %v875, %v877
      %v880 = vmul.u32 %v875, %v878
      %v881 = vmul.u32 %v876, %v877
      %v882 = vmul.u32 %v876, %v878
      %v883 = vshll.u32 %v880, 16
      %v884 = vshrl.u32 %v880, 16
      %v885 = vshll.u32 %v881, 16
      %v886 = vshrl.u32 %v881, 16
      %vm887 = vc.u32 %v879, %v883
      %v888 = vsel %vm887, 1, 0
      %v889 = vadd.s32 %v879, %v883
      %v890 = vadd.s32 %v882, %v888
      %vm891 = vc.u32 %v889, %v885
      %v892 = vsel %vm891, 1, 0
      %v893 = vadd.s32 %v889, %v885
      %v894 = vadd.s32 %v890, %v892
      %v895 = vadd.s32 %v894, %v884
      %v896 = vadd.s32 %v895, %v886
      %v897 = vmul.u32 %v852, %v843
      %v898 = vadd.s32 %v874, %v893
      %vm899 = vc.u32 %v874, %v893
      %v900 = vadd.s32 %v896, 1
      %v901 = vsel %vm899, %v900, %v896
      %v902 = vadd.s32 %v897, %v901
      %v903 = vadd.s32 %v902, 536870912
      %v904 = vshrl.u32 %v903, 30
      %v905 = vshll.u32 %v904, 30
      %v906 = vsub.s32 %v902, %v905
      %vm907 = vcmp.lt.s32.totalorder %v906, 0
      %v908 = vsub.s32 0, %v906
      %v909 = vsel %vm907, %v908, %v906
      %v910 = vclz %v909
      %v911 = vsub.s32 %v910, 2
      %vm912 = vcmp.gt.s32.totalorder 0, %v911
      %v913 = vsel %vm912, 0, %v911
      %v914 = vsub.s32 32, %v913
      %v915 = vshll.u32 %v906, %v913
      %v916 = vshrl.u32 %v898, %v914
      %v917 = vor.u32 %v915, %v916
      %v918 = vsub.s32 4294967266, %v913
      %v919 = vadd.s32 %v918, 127
      %v920 = vshll.u32 %v919, 23
      %v921 = vor.u32 4788187, %v920
      %v922 = vand.u32 2147483647, %v921
      %v924 = vcvt.s32.f32 %v917
      %v925 = vmul.f32 %v924, %v922
      %v926 = vxor.u32 %v925, 2147483648
      %v927 = vsel %vm806, %v926, %v925
      %v928 = vsub.s32 4, %v904
      %v929 = vsel %vm806, %v928, %v904
      %v930 = vsel %vm805, %v634, %v927
      %v931 = vsel %vm805, 0, %v929
      %v932 = vmul.f32 %v930, %v930
      %v933 = vmul.f32 %v932, -0.001358992
      %v934 = vadd.f32 %v933, 0.041655596
      %v935 = vmul.f32 %v932, %v934
      %v936 = vadd.f32 %v935, -0.4999988
      %v937 = vmul.f32 %v932, %v936
      %v938 = vadd.f32 1.0, %v937
      %v939 = vmul.f32 %v930, %v930
      %v940 = vmul.f32 %v939, -0.00019511016
      %v941 = vadd.f32 %v940, 0.008332121
      %v942 = vmul.f32 %v939, %v941
      %v943 = vadd.f32 %v942, -0.16666654
      %v944 = vmul.f32 %v939, %v943
      %v945 = vadd.f32 %v944, 1.0
      %v946 = vmul.f32 %v945, %v930
      %vm947 = vweird.f32 %v634
      %v948 = vadd.s32 %v931, 3
      %v949 = vand.u32 %v948, 3
      %vm950 = vcmp.lt.s32.totalorder %v949, 2
      %vm951 = vcmp.eq.s32.totalorder %v949, 0
      %v952 = vxor.u32 %v946, 2147483648
      %v953 = vsel %vm951, %v938, %v952
      %vm954 = vcmp.eq.s32.totalorder %v949, 2
      %v955 = vxor.u32 %v938, 2147483648
      %v956 = vsel %vm954, %v955, %v946
      %v957 = vsel %vm950, %v953, %v956
      %v958 = vsel %vm947, nan, %v957
      %v959 = vand.u32 2147483647, %v635
      %vm960 = vcmp.le.f32.partialorder %v959, 0.7853982
      %vm961 = vcmp.lt.s32.totalorder %v635, 0
      %v962 = vand.u32 %v635, 2139095040
      %v963 = vshrl.u32 %v962, 23
      %v964 = vsub.s32 %v963, 127
      %v965 = vand.u32 2147483647, %v635
      %v966 = vand.u32 %v965, 8388607
      %v967 = vor.u32 %v966, 8388608
      %v968 = vsub.s32 0, %v967
      %v969 = vadd.s32 %v964, 1
      %vm970 = vcmp.gt.s32.totalorder %v969, 0
      %v971 = vsel %vm970, %v969, 0
      %v972 = vshrl.u32 %v971, 5
      %v973 = vand.u32 %v971, 31
      %v974 = vsub.s32 32, %v973
      %v975 = vshrl.u32 683565275, %v974
      %v976 = vshll.u32 683565275, %v973
      %v977 = vshrl.u32 2475754826, %v974
      %v978 = vor.u32 %v976, %v977
      %v979 = vshll.u32 2475754826, %v973
      %v980 = vshrl.u32 2131351028, %v974
      %v981 = vor.u32 %v979, %v980
      %v982 = vshll.u32 2131351028, %v973
      %v983 = vshrl.u32 2102212464, %v974
      %v984 = vor.u32 %v982, %v983
      %v985 = vshll.u32 2102212464, %v973
      %v986 = vshrl.u32 920167782, %v974
      %v987 = vor.u32 %v985, %v986
      %v988 = vshll.u32 920167782, %v973
      %v989 = vshrl.u32 1326507024, %v974
      %v990 = vor.u32 %v988, %v989
      %vm991 = vcmp.lt.s32.totalorder %v972, 1
      %vm992 = vcmp.lt.s32.totalorder %v972, 2
      %vm993 = vcmp.lt.s32.totalorder %v972, 3
      %vm994 = vcmp.lt.s32.totalorder %v972, 4
      %v995 = vsel %vm991, %v975, %v978
      %v996 = vsel %vm994, %v984, 2102212464
      %v997 = vsel %vm993, %v981, %v996
      %v998 = vsel %vm992, %v995, %v997
      %v999 = vsel %vm991, %v978, %v981
      %v1000 = vsel %vm994, %v987, 920167782
      %v1001 = vsel %vm993, %v984, %v1000
      %v1002 = vsel %vm992, %v999, %v1001
      %v1003 = vsel %vm991, %v981, %v984
      %v1004 = vsel %vm994, %v990, 1326507024
      %v1005 = vsel %vm993, %v987, %v1004
      %v1006 = vsel %vm992, %v1003, %v1005
      %v1007 = vshll.u32 %v967, 8
      %v1008 = vand.u32 %v1007, 65535
      %v1009 = vshrl.u32 %v1007, 16
      %v1010 = vand.u32 %v1006, 65535
      %v1011 = vshrl.u32 %v1006, 16
      %v1012 = vmul.u32 %v1008, %v1010
      %v1013 = vmul.u32 %v1008, %v1011
      %v1014 = vmul.u32 %v1009, %v1010
      %v1015 = vmul.u32 %v1009, %v1011
      %v1016 = vshll.u32 %v1013, 16
      %v1017 = vshrl.u32 %v1013, 16
      %v1018 = vshll.u32 %v1014, 16
      %v1019 = vshrl.u32 %v1014, 16
      %vm1020 = vc.u32 %v1012, %v1016
      %v1021 = vsel %vm1020, 1, 0
      %v1022 = vadd.s32 %v1012, %v1016
      %v1023 = vadd.s32 %v1015, %v1021
      %vm1024 = vc.u32 %v1022, %v1018
      %v1025 = vsel %vm1024, 1, 0
      %v1026 = vadd.s32 %v1022, %v1018
      %v1027 = vadd.s32 %v1023, %v1025
      %v1028 = vadd.s32 %v1027, %v1017
      %v1029 = vadd.s32 %v1028, %v1019
      %v1030 = vand.u32 %v1007, 65535
      %v1031 = vshrl.u32 %v1007, 16
      %v1032 = vand.u32 %v1002, 65535
      %v1033 = vshrl.u32 %v1002, 16
      %v1034 = vmul.u32 %v1030, %v1032
      %v1035 = vmul.u32 %v1030, %v1033
      %v1036 = vmul.u32 %v1031, %v1032
      %v1037 = vmul.u32 %v1031, %v1033
      %v1038 = vshll.u32 %v1035, 16
      %v1039 = vshrl.u32 %v1035, 16
      %v1040 = vshll.u32 %v1036, 16
      %v1041 = vshrl.u32 %v1036, 16
      %vm1042 = vc.u32 %v1034, %v1038
      %v1043 = vsel %vm1042, 1, 0
      %v1044 = vadd.s32 %v1034, %v1038
      %v1045 = vadd.s32 %v1037, %v1043
      %vm1046 = vc.u32 %v1044, %v1040
      %v1047 = vsel %vm1046, 1, 0
      %v1048 = vadd.s32 %v1044, %v1040
      %v1049 = vadd.s32 %v1045, %v1047
      %v1050 = vadd.s32 %v1049, %v1039
      %v1051 = vadd.s32 %v1050, %v1041
      %v1052 = vmul.u32 %v1007, %v998
      %v1053 = vadd.s32 %v1029, %v1048
      %vm1054 = vc.u32 %v1029, %v1048
      %v1055 = vadd.s32 %v1051, 1
      %v1056 = vsel %vm1054, %v1055, %v1051
      %v1057 = vadd.s32 %v1052, %v1056
      %v1058 = vadd.s32 %v1057, 536870912
      %v1059 = vshrl.u32 %v1058, 30
      %v1060 = vshll.u32 %v1059, 30
      %v1061 = vsub.s32 %v1057, %v1060
      %vm1062 = vcmp.lt.s32.totalorder %v1061, 0
      %v1063 = vsub.s32 0, %v1061
      %v1064 = vsel %vm1062, %v1063, %v1061
      %v1065 = vclz %v1064
      %v1066 = vsub.s32 %v1065, 2
      %vm1067 = vcmp.gt.s32.totalorder 0, %v1066
      %v1068 = vsel %vm1067, 0, %v1066
      %v1069 = vsub.s32 32, %v1068
      %v1070 = vshll.u32 %v1061, %v1068
      %v1071 = vshrl.u32 %v1053, %v1069
      %v1072 = vor.u32 %v1070, %v1071
      %v1073 = vsub.s32 4294967266, %v1068
      %v1074 = vadd.s32 %v1073, 127
      %v1075 = vshll.u32 %v1074, 23
      %v1076 = vor.u32 4788187, %v1075
      %v1077 = vand.u32 2147483647, %v1076
      %v1079 = vcvt.s32.f32 %v1072
      %v1080 = vmul.f32 %v1079, %v1077
      %v1081 = vxor.u32 %v1080, 2147483648
      %v1082 = vsel %vm961, %v1081, %v1080
      %v1083 = vsub.s32 4, %v1059
      %v1084 = vsel %vm961, %v1083, %v1059
      %v1085 = vsel %vm960, %v635, %v1082
      %v1086 = vsel %vm960, 0, %v1084
      %v1087 = vmul.f32 %v1085, %v1085
      %v1088 = vmul.f32 %v1087, -0.001358992
      %v1089 = vadd.f32 %v1088, 0.041655596
      %v1090 = vmul.f32 %v1087, %v1089
      %v1091 = vadd.f32 %v1090, -0.4999988
      %v1092 = vmul.f32 %v1087, %v1091
      %v1093 = vadd.f32 1.0, %v1092
      %v1094 = vmul.f32 %v1085, %v1085
      %v1095 = vmul.f32 %v1094, -0.00019511016
      %v1096 = vadd.f32 %v1095, 0.008332121
      %v1097 = vmul.f32 %v1094, %v1096
      %v1098 = vadd.f32 %v1097, -0.16666654
      %v1099 = vmul.f32 %v1094, %v1098
      %v1100 = vadd.f32 %v1099, 1.0
      %v1101 = vmul.f32 %v1100, %v1085
      %vm1102 = vweird.f32 %v635
      %v1103 = vadd.s32 %v1086, 3
      %v1104 = vand.u32 %v1103, 3
      %vm1105 = vcmp.lt.s32.totalorder %v1104, 2
      %vm1106 = vcmp.eq.s32.totalorder %v1104, 0
      %v1107 = vxor.u32 %v1101, 2147483648
      %v1108 = vsel %vm1106, %v1093, %v1107
      %vm1109 = vcmp.eq.s32.totalorder %v1104, 2
      %v1110 = vxor.u32 %v1093, 2147483648
      %v1111 = vsel %vm1109, %v1110, %v1101
      %v1112 = vsel %vm1105, %v1108, %v1111
      %v1113 = vsel %vm1102, nan, %v1112
      %v1114 = vand.u32 2147483647, %v636
      %vm1115 = vcmp.le.f32.partialorder %v1114, 0.7853982
      %vm1116 = vcmp.lt.s32.totalorder %v636, 0
      %v1117 = vand.u32 %v636, 2139095040
      %v1118 = vshrl.u32 %v1117, 23
      %v1119 = vsub.s32 %v1118, 127
      %v1120 = vand.u32 2147483647, %v636
      %v1121 = vand.u32 %v1120, 8388607
      %v1122 = vor.u32 %v1121, 8388608
      %v1123 = vsub.s32 0, %v1122
      %v1124 = vadd.s32 %v1119, 1
      %vm1125 = vcmp.gt.s32.totalorder %v1124, 0
      %v1126 = vsel %vm1125, %v1124, 0
      %v1127 = vshrl.u32 %v1126, 5
      %v1128 = vand.u32 %v1126, 31
      %v1129 = vsub.s32 32, %v1128
      %v1130 = vshrl.u32 683565275, %v1129
      %v1131 = vshll.u32 683565275, %v1128
      %v1132 = vshrl.u32 2475754826, %v1129
      %v1133 = vor.u32 %v1131, %v1132
      %v1134 = vshll.u32 2475754826, %v1128
      %v1135 = vshrl.u32 2131351028, %v1129
      %v1136 = vor.u32 %v1134, %v1135
      %v1137 = vshll.u32 2131351028, %v1128
      %v1138 = vshrl.u32 2102212464, %v1129
      %v1139 = vor.u32 %v1137, %v1138
      %v1140 = vshll.u32 2102212464, %v1128
      %v1141 = vshrl.u32 920167782, %v1129
      %v1142 = vor.u32 %v1140, %v1141
      %v1143 = vshll.u32 920167782, %v1128
      %v1144 = vshrl.u32 1326507024, %v1129
      %v1145 = vor.u32 %v1143, %v1144
      %vm1146 = vcmp.lt.s32.totalorder %v1127, 1
      %vm1147 = vcmp.lt.s32.totalorder %v1127, 2
      %vm1148 = vcmp.lt.s32.totalorder %v1127, 3
      %vm1149 = vcmp.lt.s32.totalorder %v1127, 4
      %v1150 = vsel %vm1146, %v1130, %v1133
      %v1151 = vsel %vm1149, %v1139, 2102212464
      %v1152 = vsel %vm1148, %v1136, %v1151
      %v1153 = vsel %vm1147, %v1150, %v1152
      %v1154 = vsel %vm1146, %v1133, %v1136
      %v1155 = vsel %vm1149, %v1142, 920167782
      %v1156 = vsel %vm1148, %v1139, %v1155
      %v1157 = vsel %vm1147, %v1154, %v1156
      %v1158 = vsel %vm1146, %v1136, %v1139
      %v1159 = vsel %vm1149, %v1145, 1326507024
      %v1160 = vsel %vm1148, %v1142, %v1159
      %v1161 = vsel %vm1147, %v1158, %v1160
      %v1162 = vshll.u32 %v1122, 8
      %v1163 = vand.u32 %v1162, 65535
      %v1164 = vshrl.u32 %v1162, 16
      %v1165 = vand.u32 %v1161, 65535
      %v1166 = vshrl.u32 %v1161, 16
      %v1167 = vmul.u32 %v1163, %v1165
      %v1168 = vmul.u32 %v1163, %v1166
      %v1169 = vmul.u32 %v1164, %v1165
      %v1170 = vmul.u32 %v1164, %v1166
      %v1171 = vshll.u32 %v1168, 16
      %v1172 = vshrl.u32 %v1168, 16
      %v1173 = vshll.u32 %v1169, 16
      %v1174 = vshrl.u32 %v1169, 16
      %vm1175 = vc.u32 %v1167, %v1171
      %v1176 = vsel %vm1175, 1, 0
      %v1177 = vadd.s32 %v1167, %v1171
      %v1178 = vadd.s32 %v1170, %v1176
      %vm1179 = vc.u32 %v1177, %v1173
      %v1180 = vsel %vm1179, 1, 0
      %v1181 = vadd.s32 %v1177, %v1173
      %v1182 = vadd.s32 %v1178, %v1180
      %v1183 = vadd.s32 %v1182, %v1172
      %v1184 = vadd.s32 %v1183, %v1174
      %v1185 = vand.u32 %v1162, 65535
      %v1186 = vshrl.u32 %v1162, 16
      %v1187 = vand.u32 %v1157, 65535
      %v1188 = vshrl.u32 %v1157, 16
      %v1189 = vmul.u32 %v1185, %v1187
      %v1190 = vmul.u32 %v1185, %v1188
      %v1191 = vmul.u32 %v1186, %v1187
      %v1192 = vmul.u32 %v1186, %v1188
      %v1193 = vshll.u32 %v1190, 16
      %v1194 = vshrl.u32 %v1190, 16
      %v1195 = vshll.u32 %v1191, 16
      %v1196 = vshrl.u32 %v1191, 16
      %vm1197 = vc.u32 %v1189, %v1193
      %v1198 = vsel %vm1197, 1, 0
      %v1199 = vadd.s32 %v1189, %v1193
      %v1200 = vadd.s32 %v1192, %v1198
      %vm1201 = vc.u32 %v1199, %v1195
      %v1202 = vsel %vm1201, 1, 0
      %v1203 = vadd.s32 %v1199, %v1195
      %v1204 = vadd.s32 %v1200, %v1202
      %v1205 = vadd.s32 %v1204, %v1194
      %v1206 = vadd.s32 %v1205, %v1196
      %v1207 = vmul.u32 %v1162, %v1153
      %v1208 = vadd.s32 %v1184, %v1203
      %vm1209 = vc.u32 %v1184, %v1203
      %v1210 = vadd.s32 %v1206, 1
      %v1211 = vsel %vm1209, %v1210, %v1206
      %v1212 = vadd.s32 %v1207, %v1211
      %v1213 = vadd.s32 %v1212, 536870912
      %v1214 = vshrl.u32 %v1213, 30
      %v1215 = vshll.u32 %v1214, 30
      %v1216 = vsub.s32 %v1212, %v1215
      %vm1217 = vcmp.lt.s32.totalorder %v1216, 0
      %v1218 = vsub.s32 0, %v1216
      %v1219 = vsel %vm1217, %v1218, %v1216
      %v1220 = vclz %v1219
      %v1221 = vsub.s32 %v1220, 2
      %vm1222 = vcmp.gt.s32.totalorder 0, %v1221
      %v1223 = vsel %vm1222, 0, %v1221
      %v1224 = vsub.s32 32, %v1223
      %v1225 = vshll.u32 %v1216, %v1223
      %v1226 = vshrl.u32 %v1208, %v1224
      %v1227 = vor.u32 %v1225, %v1226
      %v1228 = vsub.s32 4294967266, %v1223
      %v1229 = vadd.s32 %v1228, 127
      %v1230 = vshll.u32 %v1229, 23
      %v1231 = vor.u32 4788187, %v1230
      %v1232 = vand.u32 2147483647, %v1231
      %v1234 = vcvt.s32.f32 %v1227
      %v1235 = vmul.f32 %v1234, %v1232
      %v1236 = vxor.u32 %v1235, 2147483648
      %v1237 = vsel %vm1116, %v1236, %v1235
      %v1238 = vsub.s32 4, %v1214
      %v1239 = vsel %vm1116, %v1238, %v1214
      %v1240 = vsel %vm1115, %v636, %v1237
      %v1241 = vsel %vm1115, 0, %v1239
      %v1242 = vmul.f32 %v1240, %v1240
      %v1243 = vmul.f32 %v1242, -0.001358992
      %v1244 = vadd.f32 %v1243, 0.041655596
      %v1245 = vmul.f32 %v1242, %v1244
      %v1246 = vadd.f32 %v1245, -0.4999988
      %v1247 = vmul.f32 %v1242, %v1246
      %v1248 = vadd.f32 1.0, %v1247
      %v1249 = vmul.f32 %v1240, %v1240
      %v1250 = vmul.f32 %v1249, -0.00019511016
      %v1251 = vadd.f32 %v1250, 0.008332121
      %v1252 = vmul.f32 %v1249, %v1251
      %v1253 = vadd.f32 %v1252, -0.16666654
      %v1254 = vmul.f32 %v1249, %v1253
      %v1255 = vadd.f32 %v1254, 1.0
      %v1256 = vmul.f32 %v1255, %v1240
      %vm1257 = vweird.f32 %v636
      %v1258 = vadd.s32 %v1241, 3
      %v1259 = vand.u32 %v1258, 3
      %vm1260 = vcmp.lt.s32.totalorder %v1259, 2
      %vm1261 = vcmp.eq.s32.totalorder %v1259, 0
      %v1262 = vxor.u32 %v1256, 2147483648
      %v1263 = vsel %vm1261, %v1248, %v1262
      %vm1264 = vcmp.eq.s32.totalorder %v1259, 2
      %v1265 = vxor.u32 %v1248, 2147483648
      %v1266 = vsel %vm1264, %v1265, %v1256
      %v1267 = vsel %vm1260, %v1263, %v1266
      %v1268 = vsel %vm1257, nan, %v1267
      %v1269 = vand.u32 2147483647, %v637
      %vm1270 = vcmp.le.f32.partialorder %v1269, 0.7853982
      %vm1271 = vcmp.lt.s32.totalorder %v637, 0
      %v1272 = vand.u32 %v637, 2139095040
      %v1273 = vshrl.u32 %v1272, 23
      %v1274 = vsub.s32 %v1273, 127
      %v1275 = vand.u32 2147483647, %v637
      %v1276 = vand.u32 %v1275, 8388607
      %v1277 = vor.u32 %v1276, 8388608
      %v1278 = vsub.s32 0, %v1277
      %v1279 = vadd.s32 %v1274, 1
      %vm1280 = vcmp.gt.s32.totalorder %v1279, 0
      %v1281 = vsel %vm1280, %v1279, 0
      %v1282 = vshrl.u32 %v1281, 5
      %v1283 = vand.u32 %v1281, 31
      %v1284 = vsub.s32 32, %v1283
      %v1285 = vshrl.u32 683565275, %v1284
      %v1286 = vshll.u32 683565275, %v1283
      %v1287 = vshrl.u32 2475754826, %v1284
      %v1288 = vor.u32 %v1286, %v1287
      %v1289 = vshll.u32 2475754826, %v1283
      %v1290 = vshrl.u32 2131351028, %v1284
      %v1291 = vor.u32 %v1289, %v1290
      %v1292 = vshll.u32 2131351028, %v1283
      %v1293 = vshrl.u32 2102212464, %v1284
      %v1294 = vor.u32 %v1292, %v1293
      %v1295 = vshll.u32 2102212464, %v1283
      %v1296 = vshrl.u32 920167782, %v1284
      %v1297 = vor.u32 %v1295, %v1296
      %v1298 = vshll.u32 920167782, %v1283
      %v1299 = vshrl.u32 1326507024, %v1284
      %v1300 = vor.u32 %v1298, %v1299
      %vm1301 = vcmp.lt.s32.totalorder %v1282, 1
      %vm1302 = vcmp.lt.s32.totalorder %v1282, 2
      %vm1303 = vcmp.lt.s32.totalorder %v1282, 3
      %vm1304 = vcmp.lt.s32.totalorder %v1282, 4
      %v1305 = vsel %vm1301, %v1285, %v1288
      %v1306 = vsel %vm1304, %v1294, 2102212464
      %v1307 = vsel %vm1303, %v1291, %v1306
      %v1308 = vsel %vm1302, %v1305, %v1307
      %v1309 = vsel %vm1301, %v1288, %v1291
      %v1310 = vsel %vm1304, %v1297, 920167782
      %v1311 = vsel %vm1303, %v1294, %v1310
      %v1312 = vsel %vm1302, %v1309, %v1311
      %v1313 = vsel %vm1301, %v1291, %v1294
      %v1314 = vsel %vm1304, %v1300, 1326507024
      %v1315 = vsel %vm1303, %v1297, %v1314
      %v1316 = vsel %vm1302, %v1313, %v1315
      %v1317 = vshll.u32 %v1277, 8
      %v1318 = vand.u32 %v1317, 65535
      %v1319 = vshrl.u32 %v1317, 16
      %v1320 = vand.u32 %v1316, 65535
      %v1321 = vshrl.u32 %v1316, 16
      %v1322 = vmul.u32 %v1318, %v1320
      %v1323 = vmul.u32 %v1318, %v1321
      %v1324 = vmul.u32 %v1319, %v1320
      %v1325 = vmul.u32 %v1319, %v1321
      %v1326 = vshll.u32 %v1323, 16
      %v1327 = vshrl.u32 %v1323, 16
      %v1328 = vshll.u32 %v1324, 16
      %v1329 = vshrl.u32 %v1324, 16
      %vm1330 = vc.u32 %v1322, %v1326
      %v1331 = vsel %vm1330, 1, 0
      %v1332 = vadd.s32 %v1322, %v1326
      %v1333 = vadd.s32 %v1325, %v1331
      %vm1334 = vc.u32 %v1332, %v1328
      %v1335 = vsel %vm1334, 1, 0
      %v1336 = vadd.s32 %v1332, %v1328
      %v1337 = vadd.s32 %v1333, %v1335
      %v1338 = vadd.s32 %v1337, %v1327
      %v1339 = vadd.s32 %v1338, %v1329
      %v1340 = vand.u32 %v1317, 65535
      %v1341 = vshrl.u32 %v1317, 16
      %v1342 = vand.u32 %v1312, 65535
      %v1343 = vshrl.u32 %v1312, 16
      %v1344 = vmul.u32 %v1340, %v1342
      %v1345 = vmul.u32 %v1340, %v1343
      %v1346 = vmul.u32 %v1341, %v1342
      %v1347 = vmul.u32 %v1341, %v1343
      %v1348 = vshll.u32 %v1345, 16
      %v1349 = vshrl.u32 %v1345, 16
      %v1350 = vshll.u32 %v1346, 16
      %v1351 = vshrl.u32 %v1346, 16
      %vm1352 = vc.u32 %v1344, %v1348
      %v1353 = vsel %vm1352, 1, 0
      %v1354 = vadd.s32 %v1344, %v1348
      %v1355 = vadd.s32 %v1347, %v1353
      %vm1356 = vc.u32 %v1354, %v1350
      %v1357 = vsel %vm1356, 1, 0
      %v1358 = vadd.s32 %v1354, %v1350
      %v1359 = vadd.s32 %v1355, %v1357
      %v1360 = vadd.s32 %v1359, %v1349
      %v1361 = vadd.s32 %v1360, %v1351
      %v1362 = vmul.u32 %v1317, %v1308
      %v1363 = vadd.s32 %v1339, %v1358
      %vm1364 = vc.u32 %v1339, %v1358
      %v1365 = vadd.s32 %v1361, 1
      %v1366 = vsel %vm1364, %v1365, %v1361
      %v1367 = vadd.s32 %v1362, %v1366
      %v1368 = vadd.s32 %v1367, 536870912
      %v1369 = vshrl.u32 %v1368, 30
      %v1370 = vshll.u32 %v1369, 30
      %v1371 = vsub.s32 %v1367, %v1370
      %vm1372 = vcmp.lt.s32.totalorder %v1371, 0
      %v1373 = vsub.s32 0, %v1371
      %v1374 = vsel %vm1372, %v1373, %v1371
      %v1375 = vclz %v1374
      %v1376 = vsub.s32 %v1375, 2
      %vm1377 = vcmp.gt.s32.totalorder 0, %v1376
      %v1378 = vsel %vm1377, 0, %v1376
      %v1379 = vsub.s32 32, %v1378
      %v1380 = vshll.u32 %v1371, %v1378
      %v1381 = vshrl.u32 %v1363, %v1379
      %v1382 = vor.u32 %v1380, %v1381
      %v1383 = vsub.s32 4294967266, %v1378
      %v1384 = vadd.s32 %v1383, 127
      %v1385 = vshll.u32 %v1384, 23
      %v1386 = vor.u32 4788187, %v1385
      %v1387 = vand.u32 2147483647, %v1386
      %v1389 = vcvt.s32.f32 %v1382
      %v1390 = vmul.f32 %v1389, %v1387
      %v1391 = vxor.u32 %v1390, 2147483648
      %v1392 = vsel %vm1271, %v1391, %v1390
      %v1393 = vsub.s32 4, %v1369
      %v1394 = vsel %vm1271, %v1393, %v1369
      %v1395 = vsel %vm1270, %v637, %v1392
      %v1396 = vsel %vm1270, 0, %v1394
      %v1397 = vmul.f32 %v1395, %v1395
      %v1398 = vmul.f32 %v1397, -0.001358992
      %v1399 = vadd.f32 %v1398, 0.041655596
      %v1400 = vmul.f32 %v1397, %v1399
      %v1401 = vadd.f32 %v1400, -0.4999988
      %v1402 = vmul.f32 %v1397, %v1401
      %v1403 = vadd.f32 1.0, %v1402
      %v1404 = vmul.f32 %v1395, %v1395
      %v1405 = vmul.f32 %v1404, -0.00019511016
      %v1406 = vadd.f32 %v1405, 0.008332121
      %v1407 = vmul.f32 %v1404, %v1406
      %v1408 = vadd.f32 %v1407, -0.16666654
      %v1409 = vmul.f32 %v1404, %v1408
      %v1410 = vadd.f32 %v1409, 1.0
      %v1411 = vmul.f32 %v1410, %v1395
      %vm1412 = vweird.f32 %v637
      %v1413 = vadd.s32 %v1396, 3
      %v1414 = vand.u32 %v1413, 3
      %vm1415 = vcmp.lt.s32.totalorder %v1414, 2
      %vm1416 = vcmp.eq.s32.totalorder %v1414, 0
      %v1417 = vxor.u32 %v1411, 2147483648
      %v1418 = vsel %vm1416, %v1403, %v1417
      %vm1419 = vcmp.eq.s32.totalorder %v1414, 2
      %v1420 = vxor.u32 %v1403, 2147483648
      %v1421 = vsel %vm1419, %v1420, %v1411
      %v1422 = vsel %vm1415, %v1418, %v1421
      %v1423 = vsel %vm1412, nan, %v1422
      %v1424 = vand.u32 2147483647, %v638
      %vm1425 = vcmp.le.f32.partialorder %v1424, 0.7853982
      %vm1426 = vcmp.lt.s32.totalorder %v638, 0
      %v1427 = vand.u32 %v638, 2139095040
      %v1428 = vshrl.u32 %v1427, 23
      %v1429 = vsub.s32 %v1428, 127
      %v1430 = vand.u32 2147483647, %v638
      %v1431 = vand.u32 %v1430, 8388607
      %v1432 = vor.u32 %v1431, 8388608
      %v1433 = vsub.s32 0, %v1432
      %v1434 = vadd.s32 %v1429, 1
      %vm1435 = vcmp.gt.s32.totalorder %v1434, 0
      %v1436 = vsel %vm1435, %v1434, 0
      %v1437 = vshrl.u32 %v1436, 5
      %v1438 = vand.u32 %v1436, 31
      %v1439 = vsub.s32 32, %v1438
      %v1440 = vshrl.u32 683565275, %v1439
      %v1441 = vshll.u32 683565275, %v1438
      %v1442 = vshrl.u32 2475754826, %v1439
      %v1443 = vor.u32 %v1441, %v1442
      %v1444 = vshll.u32 2475754826, %v1438
      %v1445 = vshrl.u32 2131351028, %v1439
      %v1446 = vor.u32 %v1444, %v1445
      %v1447 = vshll.u32 2131351028, %v1438
      %v1448 = vshrl.u32 2102212464, %v1439
      %v1449 = vor.u32 %v1447, %v1448
      %v1450 = vshll.u32 2102212464, %v1438
      %v1451 = vshrl.u32 920167782, %v1439
      %v1452 = vor.u32 %v1450, %v1451
      %v1453 = vshll.u32 920167782, %v1438
      %v1454 = vshrl.u32 1326507024, %v1439
      %v1455 = vor.u32 %v1453, %v1454
      %vm1456 = vcmp.lt.s32.totalorder %v1437, 1
      %vm1457 = vcmp.lt.s32.totalorder %v1437, 2
      %vm1458 = vcmp.lt.s32.totalorder %v1437, 3
      %vm1459 = vcmp.lt.s32.totalorder %v1437, 4
      %v1460 = vsel %vm1456, %v1440, %v1443
      %v1461 = vsel %vm1459, %v1449, 2102212464
      %v1462 = vsel %vm1458, %v1446, %v1461
      %v1463 = vsel %vm1457, %v1460, %v1462
      %v1464 = vsel %vm1456, %v1443, %v1446
      %v1465 = vsel %vm1459, %v1452, 920167782
      %v1466 = vsel %vm1458, %v1449, %v1465
      %v1467 = vsel %vm1457, %v1464, %v1466
      %v1468 = vsel %vm1456, %v1446, %v1449
      %v1469 = vsel %vm1459, %v1455, 1326507024
      %v1470 = vsel %vm1458, %v1452, %v1469
      %v1471 = vsel %vm1457, %v1468, %v1470
      %v1472 = vshll.u32 %v1432, 8
      %v1473 = vand.u32 %v1472, 65535
      %v1474 = vshrl.u32 %v1472, 16
      %v1475 = vand.u32 %v1471, 65535
      %v1476 = vshrl.u32 %v1471, 16
      %v1477 = vmul.u32 %v1473, %v1475
      %v1478 = vmul.u32 %v1473, %v1476
      %v1479 = vmul.u32 %v1474, %v1475
      %v1480 = vmul.u32 %v1474, %v1476
      %v1481 = vshll.u32 %v1478, 16
      %v1482 = vshrl.u32 %v1478, 16
      %v1483 = vshll.u32 %v1479, 16
      %v1484 = vshrl.u32 %v1479, 16
      %vm1485 = vc.u32 %v1477, %v1481
      %v1486 = vsel %vm1485, 1, 0
      %v1487 = vadd.s32 %v1477, %v1481
      %v1488 = vadd.s32 %v1480, %v1486
      %vm1489 = vc.u32 %v1487, %v1483
      %v1490 = vsel %vm1489, 1, 0
      %v1491 = vadd.s32 %v1487, %v1483
      %v1492 = vadd.s32 %v1488, %v1490
      %v1493 = vadd.s32 %v1492, %v1482
      %v1494 = vadd.s32 %v1493, %v1484
      %v1495 = vand.u32 %v1472, 65535
      %v1496 = vshrl.u32 %v1472, 16
      %v1497 = vand.u32 %v1467, 65535
      %v1498 = vshrl.u32 %v1467, 16
      %v1499 = vmul.u32 %v1495, %v1497
      %v1500 = vmul.u32 %v1495, %v1498
      %v1501 = vmul.u32 %v1496, %v1497
      %v1502 = vmul.u32 %v1496, %v1498
      %v1503 = vshll.u32 %v1500, 16
      %v1504 = vshrl.u32 %v1500, 16
      %v1505 = vshll.u32 %v1501, 16
      %v1506 = vshrl.u32 %v1501, 16
      %vm1507 = vc.u32 %v1499, %v1503
      %v1508 = vsel %vm1507, 1, 0
      %v1509 = vadd.s32 %v1499, %v1503
      %v1510 = vadd.s32 %v1502, %v1508
      %vm1511 = vc.u32 %v1509, %v1505
      %v1512 = vsel %vm1511, 1, 0
      %v1513 = vadd.s32 %v1509, %v1505
      %v1514 = vadd.s32 %v1510, %v1512
      %v1515 = vadd.s32 %v1514, %v1504
      %v1516 = vadd.s32 %v1515, %v1506
      %v1517 = vmul.u32 %v1472, %v1463
      %v1518 = vadd.s32 %v1494, %v1513
      %vm1519 = vc.u32 %v1494, %v1513
      %v1520 = vadd.s32 %v1516, 1
      %v1521 = vsel %vm1519, %v1520, %v1516
      %v1522 = vadd.s32 %v1517, %v1521
      %v1523 = vadd.s32 %v1522, 536870912
      %v1524 = vshrl.u32 %v1523, 30
      %v1525 = vshll.u32 %v1524, 30
      %v1526 = vsub.s32 %v1522, %v1525
      %vm1527 = vcmp.lt.s32.totalorder %v1526, 0
      %v1528 = vsub.s32 0, %v1526
      %v1529 = vsel %vm1527, %v1528, %v1526
      %v1530 = vclz %v1529
      %v1531 = vsub.s32 %v1530, 2
      %vm1532 = vcmp.gt.s32.totalorder 0, %v1531
      %v1533 = vsel %vm1532, 0, %v1531
      %v1534 = vsub.s32 32, %v1533
      %v1535 = vshll.u32 %v1526, %v1533
      %v1536 = vshrl.u32 %v1518, %v1534
      %v1537 = vor.u32 %v1535, %v1536
      %v1538 = vsub.s32 4294967266, %v1533
      %v1539 = vadd.s32 %v1538, 127
      %v1540 = vshll.u32 %v1539, 23
      %v1541 = vor.u32 4788187, %v1540
      %v1542 = vand.u32 2147483647, %v1541
      %v1544 = vcvt.s32.f32 %v1537
      %v1545 = vmul.f32 %v1544, %v1542
      %v1546 = vxor.u32 %v1545, 2147483648
      %v1547 = vsel %vm1426, %v1546, %v1545
      %v1548 = vsub.s32 4, %v1524
      %v1549 = vsel %vm1426, %v1548, %v1524
      %v1550 = vsel %vm1425, %v638, %v1547
      %v1551 = vsel %vm1425, 0, %v1549
      %v1552 = vmul.f32 %v1550, %v1550
      %v1553 = vmul.f32 %v1552, -0.001358992
      %v1554 = vadd.f32 %v1553, 0.041655596
      %v1555 = vmul.f32 %v1552, %v1554
      %v1556 = vadd.f32 %v1555, -0.4999988
      %v1557 = vmul.f32 %v1552, %v1556
      %v1558 = vadd.f32 1.0, %v1557
      %v1559 = vmul.f32 %v1550, %v1550
      %v1560 = vmul.f32 %v1559, -0.00019511016
      %v1561 = vadd.f32 %v1560, 0.008332121
      %v1562 = vmul.f32 %v1559, %v1561
      %v1563 = vadd.f32 %v1562, -0.16666654
      %v1564 = vmul.f32 %v1559, %v1563
      %v1565 = vadd.f32 %v1564, 1.0
      %v1566 = vmul.f32 %v1565, %v1550
      %vm1567 = vweird.f32 %v638
      %v1568 = vadd.s32 %v1551, 3
      %v1569 = vand.u32 %v1568, 3
      %vm1570 = vcmp.lt.s32.totalorder %v1569, 2
      %vm1571 = vcmp.eq.s32.totalorder %v1569, 0
      %v1572 = vxor.u32 %v1566, 2147483648
      %v1573 = vsel %vm1571, %v1558, %v1572
      %vm1574 = vcmp.eq.s32.totalorder %v1569, 2
      %v1575 = vxor.u32 %v1558, 2147483648
      %v1576 = vsel %vm1574, %v1575, %v1566
      %v1577 = vsel %vm1570, %v1573, %v1576
      %v1578 = vsel %vm1567, nan, %v1577
      %v1579 = vand.u32 2147483647, %v639
      %vm1580 = vcmp.le.f32.partialorder %v1579, 0.7853982
      %vm1581 = vcmp.lt.s32.totalorder %v639, 0
      %v1582 = vand.u32 %v639, 2139095040
      %v1583 = vshrl.u32 %v1582, 23
      %v1584 = vsub.s32 %v1583, 127
      %v1585 = vand.u32 2147483647, %v639
      %v1586 = vand.u32 %v1585, 8388607
      %v1587 = vor.u32 %v1586, 8388608
      %v1588 = vsub.s32 0, %v1587
      %v1589 = vadd.s32 %v1584, 1
      %vm1590 = vcmp.gt.s32.totalorder %v1589, 0
      %v1591 = vsel %vm1590, %v1589, 0
      %v1592 = vshrl.u32 %v1591, 5
      %v1593 = vand.u32 %v1591, 31
      %v1594 = vsub.s32 32, %v1593
      %v1595 = vshrl.u32 683565275, %v1594
      %v1596 = vshll.u32 683565275, %v1593
      %v1597 = vshrl.u32 2475754826, %v1594
      %v1598 = vor.u32 %v1596, %v1597
      %v1599 = vshll.u32 2475754826, %v1593
      %v1600 = vshrl.u32 2131351028, %v1594
      %v1601 = vor.u32 %v1599, %v1600
      %v1602 = vshll.u32 2131351028, %v1593
      %v1603 = vshrl.u32 2102212464, %v1594
      %v1604 = vor.u32 %v1602, %v1603
      %v1605 = vshll.u32 2102212464, %v1593
      %v1606 = vshrl.u32 920167782, %v1594
      %v1607 = vor.u32 %v1605, %v1606
      %v1608 = vshll.u32 920167782, %v1593
      %v1609 = vshrl.u32 1326507024, %v1594
      %v1610 = vor.u32 %v1608, %v1609
      %vm1611 = vcmp.lt.s32.totalorder %v1592, 1
      %vm1612 = vcmp.lt.s32.totalorder %v1592, 2
      %vm1613 = vcmp.lt.s32.totalorder %v1592, 3
      %vm1614 = vcmp.lt.s32.totalorder %v1592, 4
      %v1615 = vsel %vm1611, %v1595, %v1598
      %v1616 = vsel %vm1614, %v1604, 2102212464
      %v1617 = vsel %vm1613, %v1601, %v1616
      %v1618 = vsel %vm1612, %v1615, %v1617
      %v1619 = vsel %vm1611, %v1598, %v1601
      %v1620 = vsel %vm1614, %v1607, 920167782
      %v1621 = vsel %vm1613, %v1604, %v1620
      %v1622 = vsel %vm1612, %v1619, %v1621
      %v1623 = vsel %vm1611, %v1601, %v1604
      %v1624 = vsel %vm1614, %v1610, 1326507024
      %v1625 = vsel %vm1613, %v1607, %v1624
      %v1626 = vsel %vm1612, %v1623, %v1625
      %v1627 = vshll.u32 %v1587, 8
      %v1628 = vand.u32 %v1627, 65535
      %v1629 = vshrl.u32 %v1627, 16
      %v1630 = vand.u32 %v1626, 65535
      %v1631 = vshrl.u32 %v1626, 16
      %v1632 = vmul.u32 %v1628, %v1630
      %v1633 = vmul.u32 %v1628, %v1631
      %v1634 = vmul.u32 %v1629, %v1630
      %v1635 = vmul.u32 %v1629, %v1631
      %v1636 = vshll.u32 %v1633, 16
      %v1637 = vshrl.u32 %v1633, 16
      %v1638 = vshll.u32 %v1634, 16
      %v1639 = vshrl.u32 %v1634, 16
      %vm1640 = vc.u32 %v1632, %v1636
      %v1641 = vsel %vm1640, 1, 0
      %v1642 = vadd.s32 %v1632, %v1636
      %v1643 = vadd.s32 %v1635, %v1641
      %vm1644 = vc.u32 %v1642, %v1638
      %v1645 = vsel %vm1644, 1, 0
      %v1646 = vadd.s32 %v1642, %v1638
      %v1647 = vadd.s32 %v1643, %v1645
      %v1648 = vadd.s32 %v1647, %v1637
      %v1649 = vadd.s32 %v1648, %v1639
      %v1650 = vand.u32 %v1627, 65535
      %v1651 = vshrl.u32 %v1627, 16
      %v1652 = vand.u32 %v1622, 65535
      %v1653 = vshrl.u32 %v1622, 16
      %v1654 = vmul.u32 %v1650, %v1652
      %v1655 = vmul.u32 %v1650, %v1653
      %v1656 = vmul.u32 %v1651, %v1652
      %v1657 = vmul.u32 %v1651, %v1653
      %v1658 = vshll.u32 %v1655, 16
      %v1659 = vshrl.u32 %v1655, 16
      %v1660 = vshll.u32 %v1656, 16
      %v1661 = vshrl.u32 %v1656, 16
      %vm1662 = vc.u32 %v1654, %v1658
      %v1663 = vsel %vm1662, 1, 0
      %v1664 = vadd.s32 %v1654, %v1658
      %v1665 = vadd.s32 %v1657, %v1663
      %vm1666 = vc.u32 %v1664, %v1660
      %v1667 = vsel %vm1666, 1, 0
      %v1668 = vadd.s32 %v1664, %v1660
      %v1669 = vadd.s32 %v1665, %v1667
      %v1670 = vadd.s32 %v1669, %v1659
      %v1671 = vadd.s32 %v1670, %v1661
      %v1672 = vmul.u32 %v1627, %v1618
      %v1673 = vadd.s32 %v1649, %v1668
      %vm1674 = vc.u32 %v1649, %v1668
      %v1675 = vadd.s32 %v1671, 1
      %v1676 = vsel %vm1674, %v1675, %v1671
      %v1677 = vadd.s32 %v1672, %v1676
      %v1678 = vadd.s32 %v1677, 536870912
      %v1679 = vshrl.u32 %v1678, 30
      %v1680 = vshll.u32 %v1679, 30
      %v1681 = vsub.s32 %v1677, %v1680
      %vm1682 = vcmp.lt.s32.totalorder %v1681, 0
      %v1683 = vsub.s32 0, %v1681
      %v1684 = vsel %vm1682, %v1683, %v1681
      %v1685 = vclz %v1684
      %v1686 = vsub.s32 %v1685, 2
      %vm1687 = vcmp.gt.s32.totalorder 0, %v1686
      %v1688 = vsel %vm1687, 0, %v1686
      %v1689 = vsub.s32 32, %v1688
      %v1690 = vshll.u32 %v1681, %v1688
      %v1691 = vshrl.u32 %v1673, %v1689
      %v1692 = vor.u32 %v1690, %v1691
      %v1693 = vsub.s32 4294967266, %v1688
      %v1694 = vadd.s32 %v1693, 127
      %v1695 = vshll.u32 %v1694, 23
      %v1696 = vor.u32 4788187, %v1695
      %v1697 = vand.u32 2147483647, %v1696
      %v1699 = vcvt.s32.f32 %v1692
      %v1700 = vmul.f32 %v1699, %v1697
      %v1701 = vxor.u32 %v1700, 2147483648
      %v1702 = vsel %vm1581, %v1701, %v1700
      %v1703 = vsub.s32 4, %v1679
      %v1704 = vsel %vm1581, %v1703, %v1679
      %v1705 = vsel %vm1580, %v639, %v1702
      %v1706 = vsel %vm1580, 0, %v1704
      %v1707 = vmul.f32 %v1705, %v1705
      %v1708 = vmul.f32 %v1707, -0.001358992
      %v1709 = vadd.f32 %v1708, 0.041655596
      %v1710 = vmul.f32 %v1707, %v1709
      %v1711 = vadd.f32 %v1710, -0.4999988
      %v1712 = vmul.f32 %v1707, %v1711
      %v1713 = vadd.f32 1.0, %v1712
      %v1714 = vmul.f32 %v1705, %v1705
      %v1715 = vmul.f32 %v1714, -0.00019511016
      %v1716 = vadd.f32 %v1715, 0.008332121
      %v1717 = vmul.f32 %v1714, %v1716
      %v1718 = vadd.f32 %v1717, -0.16666654
      %v1719 = vmul.f32 %v1714, %v1718
      %v1720 = vadd.f32 %v1719, 1.0
      %v1721 = vmul.f32 %v1720, %v1705
      %vm1722 = vweird.f32 %v639
      %v1723 = vadd.s32 %v1706, 3
      %v1724 = vand.u32 %v1723, 3
      %vm1725 = vcmp.lt.s32.totalorder %v1724, 2
      %vm1726 = vcmp.eq.s32.totalorder %v1724, 0
      %v1727 = vxor.u32 %v1721, 2147483648
      %v1728 = vsel %vm1726, %v1713, %v1727
      %vm1729 = vcmp.eq.s32.totalorder %v1724, 2
      %v1730 = vxor.u32 %v1713, 2147483648
      %v1731 = vsel %vm1729, %v1730, %v1721
      %v1732 = vsel %vm1725, %v1728, %v1731
      %v1733 = vsel %vm1722, nan, %v1732
      %v1734 = vand.u32 2147483647, %v640
      %vm1735 = vcmp.le.f32.partialorder %v1734, 0.7853982
      %vm1736 = vcmp.lt.s32.totalorder %v640, 0
      %v1737 = vand.u32 %v640, 2139095040
      %v1738 = vshrl.u32 %v1737, 23
      %v1739 = vsub.s32 %v1738, 127
      %v1740 = vand.u32 2147483647, %v640
      %v1741 = vand.u32 %v1740, 8388607
      %v1742 = vor.u32 %v1741, 8388608
      %v1743 = vsub.s32 0, %v1742
      %v1744 = vadd.s32 %v1739, 1
      %vm1745 = vcmp.gt.s32.totalorder %v1744, 0
      %v1746 = vsel %vm1745, %v1744, 0
      %v1747 = vshrl.u32 %v1746, 5
      %v1748 = vand.u32 %v1746, 31
      %v1749 = vsub.s32 32, %v1748
      %v1750 = vshrl.u32 683565275, %v1749
      %v1751 = vshll.u32 683565275, %v1748
      %v1752 = vshrl.u32 2475754826, %v1749
      %v1753 = vor.u32 %v1751, %v1752
      %v1754 = vshll.u32 2475754826, %v1748
      %v1755 = vshrl.u32 2131351028, %v1749
      %v1756 = vor.u32 %v1754, %v1755
      %v1757 = vshll.u32 2131351028, %v1748
      %v1758 = vshrl.u32 2102212464, %v1749
      %v1759 = vor.u32 %v1757, %v1758
      %v1760 = vshll.u32 2102212464, %v1748
      %v1761 = vshrl.u32 920167782, %v1749
      %v1762 = vor.u32 %v1760, %v1761
      %v1763 = vshll.u32 920167782, %v1748
      %v1764 = vshrl.u32 1326507024, %v1749
      %v1765 = vor.u32 %v1763, %v1764
      %vm1766 = vcmp.lt.s32.totalorder %v1747, 1
      %vm1767 = vcmp.lt.s32.totalorder %v1747, 2
      %vm1768 = vcmp.lt.s32.totalorder %v1747, 3
      %vm1769 = vcmp.lt.s32.totalorder %v1747, 4
      %v1770 = vsel %vm1766, %v1750, %v1753
      %v1771 = vsel %vm1769, %v1759, 2102212464
      %v1772 = vsel %vm1768, %v1756, %v1771
      %v1773 = vsel %vm1767, %v1770, %v1772
      %v1774 = vsel %vm1766, %v1753, %v1756
      %v1775 = vsel %vm1769, %v1762, 920167782
      %v1776 = vsel %vm1768, %v1759, %v1775
      %v1777 = vsel %vm1767, %v1774, %v1776
      %v1778 = vsel %vm1766, %v1756, %v1759
      %v1779 = vsel %vm1769, %v1765, 1326507024
      %v1780 = vsel %vm1768, %v1762, %v1779
      %v1781 = vsel %vm1767, %v1778, %v1780
      %v1782 = vshll.u32 %v1742, 8
      %v1783 = vand.u32 %v1782, 65535
      %v1784 = vshrl.u32 %v1782, 16
      %v1785 = vand.u32 %v1781, 65535
      %v1786 = vshrl.u32 %v1781, 16
      %v1787 = vmul.u32 %v1783, %v1785
      %v1788 = vmul.u32 %v1783, %v1786
      %v1789 = vmul.u32 %v1784, %v1785
      %v1790 = vmul.u32 %v1784, %v1786
      %v1791 = vshll.u32 %v1788, 16
      %v1792 = vshrl.u32 %v1788, 16
      %v1793 = vshll.u32 %v1789, 16
      %v1794 = vshrl.u32 %v1789, 16
      %vm1795 = vc.u32 %v1787, %v1791
      %v1796 = vsel %vm1795, 1, 0
      %v1797 = vadd.s32 %v1787, %v1791
      %v1798 = vadd.s32 %v1790, %v1796
      %vm1799 = vc.u32 %v1797, %v1793
      %v1800 = vsel %vm1799, 1, 0
      %v1801 = vadd.s32 %v1797, %v1793
      %v1802 = vadd.s32 %v1798, %v1800
      %v1803 = vadd.s32 %v1802, %v1792
      %v1804 = vadd.s32 %v1803, %v1794
      %v1805 = vand.u32 %v1782, 65535
      %v1806 = vshrl.u32 %v1782, 16
      %v1807 = vand.u32 %v1777, 65535
      %v1808 = vshrl.u32 %v1777, 16
      %v1809 = vmul.u32 %v1805, %v1807
      %v1810 = vmul.u32 %v1805, %v1808
      %v1811 = vmul.u32 %v1806, %v1807
      %v1812 = vmul.u32 %v1806, %v1808
      %v1813 = vshll.u32 %v1810, 16
      %v1814 = vshrl.u32 %v1810, 16
      %v1815 = vshll.u32 %v1811, 16
      %v1816 = vshrl.u32 %v1811, 16
      %vm1817 = vc.u32 %v1809, %v1813
      %v1818 = vsel %vm1817, 1, 0
      %v1819 = vadd.s32 %v1809, %v1813
      %v1820 = vadd.s32 %v1812, %v1818
      %vm1821 = vc.u32 %v1819, %v1815
      %v1822 = vsel %vm1821, 1, 0
      %v1823 = vadd.s32 %v1819, %v1815
      %v1824 = vadd.s32 %v1820, %v1822
      %v1825 = vadd.s32 %v1824, %v1814
      %v1826 = vadd.s32 %v1825, %v1816
      %v1827 = vmul.u32 %v1782, %v1773
      %v1828 = vadd.s32 %v1804, %v1823
      %vm1829 = vc.u32 %v1804, %v1823
      %v1830 = vadd.s32 %v1826, 1
      %v1831 = vsel %vm1829, %v1830, %v1826
      %v1832 = vadd.s32 %v1827, %v1831
      %v1833 = vadd.s32 %v1832, 536870912
      %v1834 = vshrl.u32 %v1833, 30
      %v1835 = vshll.u32 %v1834, 30
      %v1836 = vsub.s32 %v1832, %v1835
      %vm1837 = vcmp.lt.s32.totalorder %v1836, 0
      %v1838 = vsub.s32 0, %v1836
      %v1839 = vsel %vm1837, %v1838, %v1836
      %v1840 = vclz %v1839
      %v1841 = vsub.s32 %v1840, 2
      %vm1842 = vcmp.gt.s32.totalorder 0, %v1841
      %v1843 = vsel %vm1842, 0, %v1841
      %v1844 = vsub.s32 32, %v1843
      %v1845 = vshll.u32 %v1836, %v1843
      %v1846 = vshrl.u32 %v1828, %v1844
      %v1847 = vor.u32 %v1845, %v1846
      %v1848 = vsub.s32 4294967266, %v1843
      %v1849 = vadd.s32 %v1848, 127
      %v1850 = vshll.u32 %v1849, 23
      %v1851 = vor.u32 4788187, %v1850
      %v1852 = vand.u32 2147483647, %v1851
      %v1854 = vcvt.s32.f32 %v1847
      %v1855 = vmul.f32 %v1854, %v1852
      %v1856 = vxor.u32 %v1855, 2147483648
      %v1857 = vsel %vm1736, %v1856, %v1855
      %v1858 = vsub.s32 4, %v1834
      %v1859 = vsel %vm1736, %v1858, %v1834
      %v1860 = vsel %vm1735, %v640, %v1857
      %v1861 = vsel %vm1735, 0, %v1859
      %v1862 = vmul.f32 %v1860, %v1860
      %v1863 = vmul.f32 %v1862, -0.001358992
      %v1864 = vadd.f32 %v1863, 0.041655596
      %v1865 = vmul.f32 %v1862, %v1864
      %v1866 = vadd.f32 %v1865, -0.4999988
      %v1867 = vmul.f32 %v1862, %v1866
      %v1868 = vadd.f32 1.0, %v1867
      %v1869 = vmul.f32 %v1860, %v1860
      %v1870 = vmul.f32 %v1869, -0.00019511016
      %v1871 = vadd.f32 %v1870, 0.008332121
      %v1872 = vmul.f32 %v1869, %v1871
      %v1873 = vadd.f32 %v1872, -0.16666654
      %v1874 = vmul.f32 %v1869, %v1873
      %v1875 = vadd.f32 %v1874, 1.0
      %v1876 = vmul.f32 %v1875, %v1860
      %vm1877 = vweird.f32 %v640
      %v1878 = vadd.s32 %v1861, 3
      %v1879 = vand.u32 %v1878, 3
      %vm1880 = vcmp.lt.s32.totalorder %v1879, 2
      %vm1881 = vcmp.eq.s32.totalorder %v1879, 0
      %v1882 = vxor.u32 %v1876, 2147483648
      %v1883 = vsel %vm1881, %v1868, %v1882
      %vm1884 = vcmp.eq.s32.totalorder %v1879, 2
      %v1885 = vxor.u32 %v1868, 2147483648
      %v1886 = vsel %vm1884, %v1885, %v1876
      %v1887 = vsel %vm1880, %v1883, %v1886
      %v1888 = vsel %vm1877, nan, %v1887
      %v1889 = vand.u32 2147483647, %v633
      %vm1890 = vcmp.le.f32.partialorder %v1889, 0.7853982
      %vm1891 = vcmp.lt.s32.totalorder %v633, 0
      %v1892 = vand.u32 %v633, 2139095040
      %v1893 = vshrl.u32 %v1892, 23
      %v1894 = vsub.s32 %v1893, 127
      %v1895 = vand.u32 2147483647, %v633
      %v1896 = vand.u32 %v1895, 8388607
      %v1897 = vor.u32 %v1896, 8388608
      %v1898 = vsub.s32 0, %v1897
      %v1899 = vadd.s32 %v1894, 1
      %vm1900 = vcmp.gt.s32.totalorder %v1899, 0
      %v1901 = vsel %vm1900, %v1899, 0
      %v1902 = vshrl.u32 %v1901, 5
      %v1903 = vand.u32 %v1901, 31
      %v1904 = vsub.s32 32, %v1903
      %v1905 = vshrl.u32 683565275, %v1904
      %v1906 = vshll.u32 683565275, %v1903
      %v1907 = vshrl.u32 2475754826, %v1904
      %v1908 = vor.u32 %v1906, %v1907
      %v1909 = vshll.u32 2475754826, %v1903
      %v1910 = vshrl.u32 2131351028, %v1904
      %v1911 = vor.u32 %v1909, %v1910
      %v1912 = vshll.u32 2131351028, %v1903
      %v1913 = vshrl.u32 2102212464, %v1904
      %v1914 = vor.u32 %v1912, %v1913
      %v1915 = vshll.u32 2102212464, %v1903
      %v1916 = vshrl.u32 920167782, %v1904
      %v1917 = vor.u32 %v1915, %v1916
      %v1918 = vshll.u32 920167782, %v1903
      %v1919 = vshrl.u32 1326507024, %v1904
      %v1920 = vor.u32 %v1918, %v1919
      %vm1921 = vcmp.lt.s32.totalorder %v1902, 1
      %vm1922 = vcmp.lt.s32.totalorder %v1902, 2
      %vm1923 = vcmp.lt.s32.totalorder %v1902, 3
      %vm1924 = vcmp.lt.s32.totalorder %v1902, 4
      %v1925 = vsel %vm1921, %v1905, %v1908
      %v1926 = vsel %vm1924, %v1914, 2102212464
      %v1927 = vsel %vm1923, %v1911, %v1926
      %v1928 = vsel %vm1922, %v1925, %v1927
      %v1929 = vsel %vm1921, %v1908, %v1911
      %v1930 = vsel %vm1924, %v1917, 920167782
      %v1931 = vsel %vm1923, %v1914, %v1930
      %v1932 = vsel %vm1922, %v1929, %v1931
      %v1933 = vsel %vm1921, %v1911, %v1914
      %v1934 = vsel %vm1924, %v1920, 1326507024
      %v1935 = vsel %vm1923, %v1917, %v1934
      %v1936 = vsel %vm1922, %v1933, %v1935
      %v1937 = vshll.u32 %v1897, 8
      %v1938 = vand.u32 %v1937, 65535
      %v1939 = vshrl.u32 %v1937, 16
      %v1940 = vand.u32 %v1936, 65535
      %v1941 = vshrl.u32 %v1936, 16
      %v1942 = vmul.u32 %v1938, %v1940
      %v1943 = vmul.u32 %v1938, %v1941
      %v1944 = vmul.u32 %v1939, %v1940
      %v1945 = vmul.u32 %v1939, %v1941
      %v1946 = vshll.u32 %v1943, 16
      %v1947 = vshrl.u32 %v1943, 16
      %v1948 = vshll.u32 %v1944, 16
      %v1949 = vshrl.u32 %v1944, 16
      %vm1950 = vc.u32 %v1942, %v1946
      %v1951 = vsel %vm1950, 1, 0
      %v1952 = vadd.s32 %v1942, %v1946
      %v1953 = vadd.s32 %v1945, %v1951
      %vm1954 = vc.u32 %v1952, %v1948
      %v1955 = vsel %vm1954, 1, 0
      %v1956 = vadd.s32 %v1952, %v1948
      %v1957 = vadd.s32 %v1953, %v1955
      %v1958 = vadd.s32 %v1957, %v1947
      %v1959 = vadd.s32 %v1958, %v1949
      %v1960 = vand.u32 %v1937, 65535
      %v1961 = vshrl.u32 %v1937, 16
      %v1962 = vand.u32 %v1932, 65535
      %v1963 = vshrl.u32 %v1932, 16
      %v1964 = vmul.u32 %v1960, %v1962
      %v1965 = vmul.u32 %v1960, %v1963
      %v1966 = vmul.u32 %v1961, %v1962
      %v1967 = vmul.u32 %v1961, %v1963
      %v1968 = vshll.u32 %v1965, 16
      %v1969 = vshrl.u32 %v1965, 16
      %v1970 = vshll.u32 %v1966, 16
      %v1971 = vshrl.u32 %v1966, 16
      %vm1972 = vc.u32 %v1964, %v1968
      %v1973 = vsel %vm1972, 1, 0
      %v1974 = vadd.s32 %v1964, %v1968
      %v1975 = vadd.s32 %v1967, %v1973
      %vm1976 = vc.u32 %v1974, %v1970
      %v1977 = vsel %vm1976, 1, 0
      %v1978 = vadd.s32 %v1974, %v1970
      %v1979 = vadd.s32 %v1975, %v1977
      %v1980 = vadd.s32 %v1979, %v1969
      %v1981 = vadd.s32 %v1980, %v1971
      %v1982 = vmul.u32 %v1937, %v1928
      %v1983 = vadd.s32 %v1959, %v1978
      %vm1984 = vc.u32 %v1959, %v1978
      %v1985 = vadd.s32 %v1981, 1
      %v1986 = vsel %vm1984, %v1985, %v1981
      %v1987 = vadd.s32 %v1982, %v1986
      %v1988 = vadd.s32 %v1987, 536870912
      %v1989 = vshrl.u32 %v1988, 30
      %v1990 = vshll.u32 %v1989, 30
      %v1991 = vsub.s32 %v1987, %v1990
      %vm1992 = vcmp.lt.s32.totalorder %v1991, 0
      %v1993 = vsub.s32 0, %v1991
      %v1994 = vsel %vm1992, %v1993, %v1991
      %v1995 = vclz %v1994
      %v1996 = vsub.s32 %v1995, 2
      %vm1997 = vcmp.gt.s32.totalorder 0, %v1996
      %v1998 = vsel %vm1997, 0, %v1996
      %v1999 = vsub.s32 32, %v1998
      %v2000 = vshll.u32 %v1991, %v1998
      %v2001 = vshrl.u32 %v1983, %v1999
      %v2002 = vor.u32 %v2000, %v2001
      %v2003 = vsub.s32 4294967266, %v1998
      %v2004 = vadd.s32 %v2003, 127
      %v2005 = vshll.u32 %v2004, 23
      %v2006 = vor.u32 4788187, %v2005
      %v2007 = vand.u32 2147483647, %v2006
      %v2009 = vcvt.s32.f32 %v2002
      %v2010 = vmul.f32 %v2009, %v2007
      %v2011 = vxor.u32 %v2010, 2147483648
      %v2012 = vsel %vm1891, %v2011, %v2010
      %v2013 = vsub.s32 4, %v1989
      %v2014 = vsel %vm1891, %v2013, %v1989
      %v2015 = vsel %vm1890, %v633, %v2012
      %v2016 = vsel %vm1890, 0, %v2014
      %v2017 = vmul.f32 %v2015, %v2015
      %v2018 = vmul.f32 %v2017, -0.001358992
      %v2019 = vadd.f32 %v2018, 0.041655596
      %v2020 = vmul.f32 %v2017, %v2019
      %v2021 = vadd.f32 %v2020, -0.4999988
      %v2022 = vmul.f32 %v2017, %v2021
      %v2023 = vadd.f32 1.0, %v2022
      %v2024 = vmul.f32 %v2015, %v2015
      %v2025 = vmul.f32 %v2024, -0.00019511016
      %v2026 = vadd.f32 %v2025, 0.008332121
      %v2027 = vmul.f32 %v2024, %v2026
      %v2028 = vadd.f32 %v2027, -0.16666654
      %v2029 = vmul.f32 %v2024, %v2028
      %v2030 = vadd.f32 %v2029, 1.0
      %v2031 = vmul.f32 %v2030, %v2015
      %vm2032 = vweird.f32 %v633
      %v2033 = vand.u32 %v2016, 3
      %vm2034 = vcmp.lt.s32.totalorder %v2033, 2
      %vm2035 = vcmp.eq.s32.totalorder %v2033, 0
      %v2036 = vxor.u32 %v2031, 2147483648
      %v2037 = vsel %vm2035, %v2023, %v2036
      %vm2038 = vcmp.eq.s32.totalorder %v2033, 2
      %v2039 = vxor.u32 %v2023, 2147483648
      %v2040 = vsel %vm2038, %v2039, %v2031
      %v2041 = vsel %vm2034, %v2037, %v2040
      %v2042 = vsel %vm2032, nan, %v2041
      %v2043 = vand.u32 2147483647, %v634
      %vm2044 = vcmp.le.f32.partialorder %v2043, 0.7853982
      %vm2045 = vcmp.lt.s32.totalorder %v634, 0
      %v2046 = vand.u32 %v634, 2139095040
      %v2047 = vshrl.u32 %v2046, 23
      %v2048 = vsub.s32 %v2047, 127
      %v2049 = vand.u32 2147483647, %v634
      %v2050 = vand.u32 %v2049, 8388607
      %v2051 = vor.u32 %v2050, 8388608
      %v2052 = vsub.s32 0, %v2051
      %v2053 = vadd.s32 %v2048, 1
      %vm2054 = vcmp.gt.s32.totalorder %v2053, 0
      %v2055 = vsel %vm2054, %v2053, 0
      %v2056 = vshrl.u32 %v2055, 5
      %v2057 = vand.u32 %v2055, 31
      %v2058 = vsub.s32 32, %v2057
      %v2059 = vshrl.u32 683565275, %v2058
      %v2060 = vshll.u32 683565275, %v2057
      %v2061 = vshrl.u32 2475754826, %v2058
      %v2062 = vor.u32 %v2060, %v2061
      %v2063 = vshll.u32 2475754826, %v2057
      %v2064 = vshrl.u32 2131351028, %v2058
      %v2065 = vor.u32 %v2063, %v2064
      %v2066 = vshll.u32 2131351028, %v2057
      %v2067 = vshrl.u32 2102212464, %v2058
      %v2068 = vor.u32 %v2066, %v2067
      %v2069 = vshll.u32 2102212464, %v2057
      %v2070 = vshrl.u32 920167782, %v2058
      %v2071 = vor.u32 %v2069, %v2070
      %v2072 = vshll.u32 920167782, %v2057
      %v2073 = vshrl.u32 1326507024, %v2058
      %v2074 = vor.u32 %v2072, %v2073
      %vm2075 = vcmp.lt.s32.totalorder %v2056, 1
      %vm2076 = vcmp.lt.s32.totalorder %v2056, 2
      %vm2077 = vcmp.lt.s32.totalorder %v2056, 3
      %vm2078 = vcmp.lt.s32.totalorder %v2056, 4
      %v2079 = vsel %vm2075, %v2059, %v2062
      %v2080 = vsel %vm2078, %v2068, 2102212464
      %v2081 = vsel %vm2077, %v2065, %v2080
      %v2082 = vsel %vm2076, %v2079, %v2081
      %v2083 = vsel %vm2075, %v2062, %v2065
      %v2084 = vsel %vm2078, %v2071, 920167782
      %v2085 = vsel %vm2077, %v2068, %v2084
      %v2086 = vsel %vm2076, %v2083, %v2085
      %v2087 = vsel %vm2075, %v2065, %v2068
      %v2088 = vsel %vm2078, %v2074, 1326507024
      %v2089 = vsel %vm2077, %v2071, %v2088
      %v2090 = vsel %vm2076, %v2087, %v2089
      %v2091 = vshll.u32 %v2051, 8
      %v2092 = vand.u32 %v2091, 65535
      %v2093 = vshrl.u32 %v2091, 16
      %v2094 = vand.u32 %v2090, 65535
      %v2095 = vshrl.u32 %v2090, 16
      %v2096 = vmul.u32 %v2092, %v2094
      %v2097 = vmul.u32 %v2092, %v2095
      %v2098 = vmul.u32 %v2093, %v2094
      %v2099 = vmul.u32 %v2093, %v2095
      %v2100 = vshll.u32 %v2097, 16
      %v2101 = vshrl.u32 %v2097, 16
      %v2102 = vshll.u32 %v2098, 16
      %v2103 = vshrl.u32 %v2098, 16
      %vm2104 = vc.u32 %v2096, %v2100
      %v2105 = vsel %vm2104, 1, 0
      %v2106 = vadd.s32 %v2096, %v2100
      %v2107 = vadd.s32 %v2099, %v2105
      %vm2108 = vc.u32 %v2106, %v2102
      %v2109 = vsel %vm2108, 1, 0
      %v2110 = vadd.s32 %v2106, %v2102
      %v2111 = vadd.s32 %v2107, %v2109
      %v2112 = vadd.s32 %v2111, %v2101
      %v2113 = vadd.s32 %v2112, %v2103
      %v2114 = vand.u32 %v2091, 65535
      %v2115 = vshrl.u32 %v2091, 16
      %v2116 = vand.u32 %v2086, 65535
      %v2117 = vshrl.u32 %v2086, 16
      %v2118 = vmul.u32 %v2114, %v2116
      %v2119 = vmul.u32 %v2114, %v2117
      %v2120 = vmul.u32 %v2115, %v2116
      %v2121 = vmul.u32 %v2115, %v2117
      %v2122 = vshll.u32 %v2119, 16
      %v2123 = vshrl.u32 %v2119, 16
      %v2124 = vshll.u32 %v2120, 16
      %v2125 = vshrl.u32 %v2120, 16
      %vm2126 = vc.u32 %v2118, %v2122
      %v2127 = vsel %vm2126, 1, 0
      %v2128 = vadd.s32 %v2118, %v2122
      %v2129 = vadd.s32 %v2121, %v2127
      %vm2130 = vc.u32 %v2128, %v2124
      %v2131 = vsel %vm2130, 1, 0
      %v2132 = vadd.s32 %v2128, %v2124
      %v2133 = vadd.s32 %v2129, %v2131
      %v2134 = vadd.s32 %v2133, %v2123
      %v2135 = vadd.s32 %v2134, %v2125
      %v2136 = vmul.u32 %v2091, %v2082
      %v2137 = vadd.s32 %v2113, %v2132
      %vm2138 = vc.u32 %v2113, %v2132
      %v2139 = vadd.s32 %v2135, 1
      %v2140 = vsel %vm2138, %v2139, %v2135
      %v2141 = vadd.s32 %v2136, %v2140
      %v2142 = vadd.s32 %v2141, 536870912
      %v2143 = vshrl.u32 %v2142, 30
      %v2144 = vshll.u32 %v2143, 30
      %v2145 = vsub.s32 %v2141, %v2144
      %vm2146 = vcmp.lt.s32.totalorder %v2145, 0
      %v2147 = vsub.s32 0, %v2145
      %v2148 = vsel %vm2146, %v2147, %v2145
      %v2149 = vclz %v2148
      %v2150 = vsub.s32 %v2149, 2
      %vm2151 = vcmp.gt.s32.totalorder 0, %v2150
      %v2152 = vsel %vm2151, 0, %v2150
      %v2153 = vsub.s32 32, %v2152
      %v2154 = vshll.u32 %v2145, %v2152
      %v2155 = vshrl.u32 %v2137, %v2153
      %v2156 = vor.u32 %v2154, %v2155
      %v2157 = vsub.s32 4294967266, %v2152
      %v2158 = vadd.s32 %v2157, 127
      %v2159 = vshll.u32 %v2158, 23
      %v2160 = vor.u32 4788187, %v2159
      %v2161 = vand.u32 2147483647, %v2160
      %v2163 = vcvt.s32.f32 %v2156
      %v2164 = vmul.f32 %v2163, %v2161
      %v2165 = vxor.u32 %v2164, 2147483648
      %v2166 = vsel %vm2045, %v2165, %v2164
      %v2167 = vsub.s32 4, %v2143
      %v2168 = vsel %vm2045, %v2167, %v2143
      %v2169 = vsel %vm2044, %v634, %v2166
      %v2170 = vsel %vm2044, 0, %v2168
      %v2171 = vmul.f32 %v2169, %v2169
      %v2172 = vmul.f32 %v2171, -0.001358992
      %v2173 = vadd.f32 %v2172, 0.041655596
      %v2174 = vmul.f32 %v2171, %v2173
      %v2175 = vadd.f32 %v2174, -0.4999988
      %v2176 = vmul.f32 %v2171, %v2175
      %v2177 = vadd.f32 1.0, %v2176
      %v2178 = vmul.f32 %v2169, %v2169
      %v2179 = vmul.f32 %v2178, -0.00019511016
      %v2180 = vadd.f32 %v2179, 0.008332121
      %v2181 = vmul.f32 %v2178, %v2180
      %v2182 = vadd.f32 %v2181, -0.16666654
      %v2183 = vmul.f32 %v2178, %v2182
      %v2184 = vadd.f32 %v2183, 1.0
      %v2185 = vmul.f32 %v2184, %v2169
      %vm2186 = vweird.f32 %v634
      %v2187 = vand.u32 %v2170, 3
      %vm2188 = vcmp.lt.s32.totalorder %v2187, 2
      %vm2189 = vcmp.eq.s32.totalorder %v2187, 0
      %v2190 = vxor.u32 %v2185, 2147483648
      %v2191 = vsel %vm2189, %v2177, %v2190
      %vm2192 = vcmp.eq.s32.totalorder %v2187, 2
      %v2193 = vxor.u32 %v2177, 2147483648
      %v2194 = vsel %vm2192, %v2193, %v2185
      %v2195 = vsel %vm2188, %v2191, %v2194
      %v2196 = vsel %vm2186, nan, %v2195
      %v2197 = vand.u32 2147483647, %v635
      %vm2198 = vcmp.le.f32.partialorder %v2197, 0.7853982
      %vm2199 = vcmp.lt.s32.totalorder %v635, 0
      %v2200 = vand.u32 %v635, 2139095040
      %v2201 = vshrl.u32 %v2200, 23
      %v2202 = vsub.s32 %v2201, 127
      %v2203 = vand.u32 2147483647, %v635
      %v2204 = vand.u32 %v2203, 8388607
      %v2205 = vor.u32 %v2204, 8388608
      %v2206 = vsub.s32 0, %v2205
      %v2207 = vadd.s32 %v2202, 1
      %vm2208 = vcmp.gt.s32.totalorder %v2207, 0
      %v2209 = vsel %vm2208, %v2207, 0
      %v2210 = vshrl.u32 %v2209, 5
      %v2211 = vand.u32 %v2209, 31
      %v2212 = vsub.s32 32, %v2211
      %v2213 = vshrl.u32 683565275, %v2212
      %v2214 = vshll.u32 683565275, %v2211
      %v2215 = vshrl.u32 2475754826, %v2212
      %v2216 = vor.u32 %v2214, %v2215
      %v2217 = vshll.u32 2475754826, %v2211
      %v2218 = vshrl.u32 2131351028, %v2212
      %v2219 = vor.u32 %v2217, %v2218
      %v2220 = vshll.u32 2131351028, %v2211
      %v2221 = vshrl.u32 2102212464, %v2212
      %v2222 = vor.u32 %v2220, %v2221
      %v2223 = vshll.u32 2102212464, %v2211
      %v2224 = vshrl.u32 920167782, %v2212
      %v2225 = vor.u32 %v2223, %v2224
      %v2226 = vshll.u32 920167782, %v2211
      %v2227 = vshrl.u32 1326507024, %v2212
      %v2228 = vor.u32 %v2226, %v2227
      %vm2229 = vcmp.lt.s32.totalorder %v2210, 1
      %vm2230 = vcmp.lt.s32.totalorder %v2210, 2
      %vm2231 = vcmp.lt.s32.totalorder %v2210, 3
      %vm2232 = vcmp.lt.s32.totalorder %v2210, 4
      %v2233 = vsel %vm2229, %v2213, %v2216
      %v2234 = vsel %vm2232, %v2222, 2102212464
      %v2235 = vsel %vm2231, %v2219, %v2234
      %v2236 = vsel %vm2230, %v2233, %v2235
      %v2237 = vsel %vm2229, %v2216, %v2219
      %v2238 = vsel %vm2232, %v2225, 920167782
      %v2239 = vsel %vm2231, %v2222, %v2238
      %v2240 = vsel %vm2230, %v2237, %v2239
      %v2241 = vsel %vm2229, %v2219, %v2222
      %v2242 = vsel %vm2232, %v2228, 1326507024
      %v2243 = vsel %vm2231, %v2225, %v2242
      %v2244 = vsel %vm2230, %v2241, %v2243
      %v2245 = vshll.u32 %v2205, 8
      %v2246 = vand.u32 %v2245, 65535
      %v2247 = vshrl.u32 %v2245, 16
      %v2248 = vand.u32 %v2244, 65535
      %v2249 = vshrl.u32 %v2244, 16
      %v2250 = vmul.u32 %v2246, %v2248
      %v2251 = vmul.u32 %v2246, %v2249
      %v2252 = vmul.u32 %v2247, %v2248
      %v2253 = vmul.u32 %v2247, %v2249
      %v2254 = vshll.u32 %v2251, 16
      %v2255 = vshrl.u32 %v2251, 16
      %v2256 = vshll.u32 %v2252, 16
      %v2257 = vshrl.u32 %v2252, 16
      %vm2258 = vc.u32 %v2250, %v2254
      %v2259 = vsel %vm2258, 1, 0
      %v2260 = vadd.s32 %v2250, %v2254
      %v2261 = vadd.s32 %v2253, %v2259
      %vm2262 = vc.u32 %v2260, %v2256
      %v2263 = vsel %vm2262, 1, 0
      %v2264 = vadd.s32 %v2260, %v2256
      %v2265 = vadd.s32 %v2261, %v2263
      %v2266 = vadd.s32 %v2265, %v2255
      %v2267 = vadd.s32 %v2266, %v2257
      %v2268 = vand.u32 %v2245, 65535
      %v2269 = vshrl.u32 %v2245, 16
      %v2270 = vand.u32 %v2240, 65535
      %v2271 = vshrl.u32 %v2240, 16
      %v2272 = vmul.u32 %v2268, %v2270
      %v2273 = vmul.u32 %v2268, %v2271
      %v2274 = vmul.u32 %v2269, %v2270
      %v2275 = vmul.u32 %v2269, %v2271
      %v2276 = vshll.u32 %v2273, 16
      %v2277 = vshrl.u32 %v2273, 16
      %v2278 = vshll.u32 %v2274, 16
      %v2279 = vshrl.u32 %v2274, 16
      %vm2280 = vc.u32 %v2272, %v2276
      %v2281 = vsel %vm2280, 1, 0
      %v2282 = vadd.s32 %v2272, %v2276
      %v2283 = vadd.s32 %v2275, %v2281
      %vm2284 = vc.u32 %v2282, %v2278
      %v2285 = vsel %vm2284, 1, 0
      %v2286 = vadd.s32 %v2282, %v2278
      %v2287 = vadd.s32 %v2283, %v2285
      %v2288 = vadd.s32 %v2287, %v2277
      %v2289 = vadd.s32 %v2288, %v2279
      %v2290 = vmul.u32 %v2245, %v2236
      %v2291 = vadd.s32 %v2267, %v2286
      %vm2292 = vc.u32 %v2267, %v2286
      %v2293 = vadd.s32 %v2289, 1
      %v2294 = vsel %vm2292, %v2293, %v2289
      %v2295 = vadd.s32 %v2290, %v2294
      %v2296 = vadd.s32 %v2295, 536870912
      %v2297 = vshrl.u32 %v2296, 30
      %v2298 = vshll.u32 %v2297, 30
      %v2299 = vsub.s32 %v2295, %v2298
      %vm2300 = vcmp.lt.s32.totalorder %v2299, 0
      %v2301 = vsub.s32 0, %v2299
      %v2302 = vsel %vm2300, %v2301, %v2299
      %v2303 = vclz %v2302
      %v2304 = vsub.s32 %v2303, 2
      %vm2305 = vcmp.gt.s32.totalorder 0, %v2304
      %v2306 = vsel %vm2305, 0, %v2304
      %v2307 = vsub.s32 32, %v2306
      %v2308 = vshll.u32 %v2299, %v2306
      %v2309 = vshrl.u32 %v2291, %v2307
      %v2310 = vor.u32 %v2308, %v2309
      %v2311 = vsub.s32 4294967266, %v2306
      %v2312 = vadd.s32 %v2311, 127
      %v2313 = vshll.u32 %v2312, 23
      %v2314 = vor.u32 4788187, %v2313
      %v2315 = vand.u32 2147483647, %v2314
      %v2317 = vcvt.s32.f32 %v2310
      %v2318 = vmul.f32 %v2317, %v2315
      %v2319 = vxor.u32 %v2318, 2147483648
      %v2320 = vsel %vm2199, %v2319, %v2318
      %v2321 = vsub.s32 4, %v2297
      %v2322 = vsel %vm2199, %v2321, %v2297
      %v2323 = vsel %vm2198, %v635, %v2320
      %v2324 = vsel %vm2198, 0, %v2322
      %v2325 = vmul.f32 %v2323, %v2323
      %v2326 = vmul.f32 %v2325, -0.001358992
      %v2327 = vadd.f32 %v2326, 0.041655596
      %v2328 = vmul.f32 %v2325, %v2327
      %v2329 = vadd.f32 %v2328, -0.4999988
      %v2330 = vmul.f32 %v2325, %v2329
      %v2331 = vadd.f32 1.0, %v2330
      %v2332 = vmul.f32 %v2323, %v2323
      %v2333 = vmul.f32 %v2332, -0.00019511016
      %v2334 = vadd.f32 %v2333, 0.008332121
      %v2335 = vmul.f32 %v2332, %v2334
      %v2336 = vadd.f32 %v2335, -0.16666654
      %v2337 = vmul.f32 %v2332, %v2336
      %v2338 = vadd.f32 %v2337, 1.0
      %v2339 = vmul.f32 %v2338, %v2323
      %vm2340 = vweird.f32 %v635
      %v2341 = vand.u32 %v2324, 3
      %vm2342 = vcmp.lt.s32.totalorder %v2341, 2
      %vm2343 = vcmp.eq.s32.totalorder %v2341, 0
      %v2344 = vxor.u32 %v2339, 2147483648
      %v2345 = vsel %vm2343, %v2331, %v2344
      %vm2346 = vcmp.eq.s32.totalorder %v2341, 2
      %v2347 = vxor.u32 %v2331, 2147483648
      %v2348 = vsel %vm2346, %v2347, %v2339
      %v2349 = vsel %vm2342, %v2345, %v2348
      %v2350 = vsel %vm2340, nan, %v2349
      %v2351 = vand.u32 2147483647, %v636
      %vm2352 = vcmp.le.f32.partialorder %v2351, 0.7853982
      %vm2353 = vcmp.lt.s32.totalorder %v636, 0
      %v2354 = vand.u32 %v636, 2139095040
      %v2355 = vshrl.u32 %v2354, 23
      %v2356 = vsub.s32 %v2355, 127
      %v2357 = vand.u32 2147483647, %v636
      %v2358 = vand.u32 %v2357, 8388607
      %v2359 = vor.u32 %v2358, 8388608
      %v2360 = vsub.s32 0, %v2359
      %v2361 = vadd.s32 %v2356, 1
      %vm2362 = vcmp.gt.s32.totalorder %v2361, 0
      %v2363 = vsel %vm2362, %v2361, 0
      %v2364 = vshrl.u32 %v2363, 5
      %v2365 = vand.u32 %v2363, 31
      %v2366 = vsub.s32 32, %v2365
      %v2367 = vshrl.u32 683565275, %v2366
      %v2368 = vshll.u32 683565275, %v2365
      %v2369 = vshrl.u32 2475754826, %v2366
      %v2370 = vor.u32 %v2368, %v2369
      %v2371 = vshll.u32 2475754826, %v2365
      %v2372 = vshrl.u32 2131351028, %v2366
      %v2373 = vor.u32 %v2371, %v2372
      %v2374 = vshll.u32 2131351028, %v2365
      %v2375 = vshrl.u32 2102212464, %v2366
      %v2376 = vor.u32 %v2374, %v2375
      %v2377 = vshll.u32 2102212464, %v2365
      %v2378 = vshrl.u32 920167782, %v2366
      %v2379 = vor.u32 %v2377, %v2378
      %v2380 = vshll.u32 920167782, %v2365
      %v2381 = vshrl.u32 1326507024, %v2366
      %v2382 = vor.u32 %v2380, %v2381
      %vm2383 = vcmp.lt.s32.totalorder %v2364, 1
      %vm2384 = vcmp.lt.s32.totalorder %v2364, 2
      %vm2385 = vcmp.lt.s32.totalorder %v2364, 3
      %vm2386 = vcmp.lt.s32.totalorder %v2364, 4
      %v2387 = vsel %vm2383, %v2367, %v2370
      %v2388 = vsel %vm2386, %v2376, 2102212464
      %v2389 = vsel %vm2385, %v2373, %v2388
      %v2390 = vsel %vm2384, %v2387, %v2389
      %v2391 = vsel %vm2383, %v2370, %v2373
      %v2392 = vsel %vm2386, %v2379, 920167782
      %v2393 = vsel %vm2385, %v2376, %v2392
      %v2394 = vsel %vm2384, %v2391, %v2393
      %v2395 = vsel %vm2383, %v2373, %v2376
      %v2396 = vsel %vm2386, %v2382, 1326507024
      %v2397 = vsel %vm2385, %v2379, %v2396
      %v2398 = vsel %vm2384, %v2395, %v2397
      %v2399 = vshll.u32 %v2359, 8
      %v2400 = vand.u32 %v2399, 65535
      %v2401 = vshrl.u32 %v2399, 16
      %v2402 = vand.u32 %v2398, 65535
      %v2403 = vshrl.u32 %v2398, 16
      %v2404 = vmul.u32 %v2400, %v2402
      %v2405 = vmul.u32 %v2400, %v2403
      %v2406 = vmul.u32 %v2401, %v2402
      %v2407 = vmul.u32 %v2401, %v2403
      %v2408 = vshll.u32 %v2405, 16
      %v2409 = vshrl.u32 %v2405, 16
      %v2410 = vshll.u32 %v2406, 16
      %v2411 = vshrl.u32 %v2406, 16
      %vm2412 = vc.u32 %v2404, %v2408
      %v2413 = vsel %vm2412, 1, 0
      %v2414 = vadd.s32 %v2404, %v2408
      %v2415 = vadd.s32 %v2407, %v2413
      %vm2416 = vc.u32 %v2414, %v2410
      %v2417 = vsel %vm2416, 1, 0
      %v2418 = vadd.s32 %v2414, %v2410
      %v2419 = vadd.s32 %v2415, %v2417
      %v2420 = vadd.s32 %v2419, %v2409
      %v2421 = vadd.s32 %v2420, %v2411
      %v2422 = vand.u32 %v2399, 65535
      %v2423 = vshrl.u32 %v2399, 16
      %v2424 = vand.u32 %v2394, 65535
      %v2425 = vshrl.u32 %v2394, 16
      %v2426 = vmul.u32 %v2422, %v2424
      %v2427 = vmul.u32 %v2422, %v2425
      %v2428 = vmul.u32 %v2423, %v2424
      %v2429 = vmul.u32 %v2423, %v2425
      %v2430 = vshll.u32 %v2427, 16
      %v2431 = vshrl.u32 %v2427, 16
      %v2432 = vshll.u32 %v2428, 16
      %v2433 = vshrl.u32 %v2428, 16
      %vm2434 = vc.u32 %v2426, %v2430
      %v2435 = vsel %vm2434, 1, 0
      %v2436 = vadd.s32 %v2426, %v2430
      %v2437 = vadd.s32 %v2429, %v2435
      %vm2438 = vc.u32 %v2436, %v2432
      %v2439 = vsel %vm2438, 1, 0
      %v2440 = vadd.s32 %v2436, %v2432
      %v2441 = vadd.s32 %v2437, %v2439
      %v2442 = vadd.s32 %v2441, %v2431
      %v2443 = vadd.s32 %v2442, %v2433
      %v2444 = vmul.u32 %v2399, %v2390
      %v2445 = vadd.s32 %v2421, %v2440
      %vm2446 = vc.u32 %v2421, %v2440
      %v2447 = vadd.s32 %v2443, 1
      %v2448 = vsel %vm2446, %v2447, %v2443
      %v2449 = vadd.s32 %v2444, %v2448
      %v2450 = vadd.s32 %v2449, 536870912
      %v2451 = vshrl.u32 %v2450, 30
      %v2452 = vshll.u32 %v2451, 30
      %v2453 = vsub.s32 %v2449, %v2452
      %vm2454 = vcmp.lt.s32.totalorder %v2453, 0
      %v2455 = vsub.s32 0, %v2453
      %v2456 = vsel %vm2454, %v2455, %v2453
      %v2457 = vclz %v2456
      %v2458 = vsub.s32 %v2457, 2
      %vm2459 = vcmp.gt.s32.totalorder 0, %v2458
      %v2460 = vsel %vm2459, 0, %v2458
      %v2461 = vsub.s32 32, %v2460
      %v2462 = vshll.u32 %v2453, %v2460
      %v2463 = vshrl.u32 %v2445, %v2461
      %v2464 = vor.u32 %v2462, %v2463
      %v2465 = vsub.s32 4294967266, %v2460
      %v2466 = vadd.s32 %v2465, 127
      %v2467 = vshll.u32 %v2466, 23
      %v2468 = vor.u32 4788187, %v2467
      %v2469 = vand.u32 2147483647, %v2468
      %v2471 = vcvt.s32.f32 %v2464
      %v2472 = vmul.f32 %v2471, %v2469
      %v2473 = vxor.u32 %v2472, 2147483648
      %v2474 = vsel %vm2353, %v2473, %v2472
      %v2475 = vsub.s32 4, %v2451
      %v2476 = vsel %vm2353, %v2475, %v2451
      %v2477 = vsel %vm2352, %v636, %v2474
      %v2478 = vsel %vm2352, 0, %v2476
      %v2479 = vmul.f32 %v2477, %v2477
      %v2480 = vmul.f32 %v2479, -0.001358992
      %v2481 = vadd.f32 %v2480, 0.041655596
      %v2482 = vmul.f32 %v2479, %v2481
      %v2483 = vadd.f32 %v2482, -0.4999988
      %v2484 = vmul.f32 %v2479, %v2483
      %v2485 = vadd.f32 1.0, %v2484
      %v2486 = vmul.f32 %v2477, %v2477
      %v2487 = vmul.f32 %v2486, -0.00019511016
      %v2488 = vadd.f32 %v2487, 0.008332121
      %v2489 = vmul.f32 %v2486, %v2488
      %v2490 = vadd.f32 %v2489, -0.16666654
      %v2491 = vmul.f32 %v2486, %v2490
      %v2492 = vadd.f32 %v2491, 1.0
      %v2493 = vmul.f32 %v2492, %v2477
      %vm2494 = vweird.f32 %v636
      %v2495 = vand.u32 %v2478, 3
      %vm2496 = vcmp.lt.s32.totalorder %v2495, 2
      %vm2497 = vcmp.eq.s32.totalorder %v2495, 0
      %v2498 = vxor.u32 %v2493, 2147483648
      %v2499 = vsel %vm2497, %v2485, %v2498
      %vm2500 = vcmp.eq.s32.totalorder %v2495, 2
      %v2501 = vxor.u32 %v2485, 2147483648
      %v2502 = vsel %vm2500, %v2501, %v2493
      %v2503 = vsel %vm2496, %v2499, %v2502
      %v2504 = vsel %vm2494, nan, %v2503
      %v2505 = vand.u32 2147483647, %v637
      %vm2506 = vcmp.le.f32.partialorder %v2505, 0.7853982
      %vm2507 = vcmp.lt.s32.totalorder %v637, 0
      %v2508 = vand.u32 %v637, 2139095040
      %v2509 = vshrl.u32 %v2508, 23
      %v2510 = vsub.s32 %v2509, 127
      %v2511 = vand.u32 2147483647, %v637
      %v2512 = vand.u32 %v2511, 8388607
      %v2513 = vor.u32 %v2512, 8388608
      %v2514 = vsub.s32 0, %v2513
      %v2515 = vadd.s32 %v2510, 1
      %vm2516 = vcmp.gt.s32.totalorder %v2515, 0
      %v2517 = vsel %vm2516, %v2515, 0
      %v2518 = vshrl.u32 %v2517, 5
      %v2519 = vand.u32 %v2517, 31
      %v2520 = vsub.s32 32, %v2519
      %v2521 = vshrl.u32 683565275, %v2520
      %v2522 = vshll.u32 683565275, %v2519
      %v2523 = vshrl.u32 2475754826, %v2520
      %v2524 = vor.u32 %v2522, %v2523
      %v2525 = vshll.u32 2475754826, %v2519
      %v2526 = vshrl.u32 2131351028, %v2520
      %v2527 = vor.u32 %v2525, %v2526
      %v2528 = vshll.u32 2131351028, %v2519
      %v2529 = vshrl.u32 2102212464, %v2520
      %v2530 = vor.u32 %v2528, %v2529
      %v2531 = vshll.u32 2102212464, %v2519
      %v2532 = vshrl.u32 920167782, %v2520
      %v2533 = vor.u32 %v2531, %v2532
      %v2534 = vshll.u32 920167782, %v2519
      %v2535 = vshrl.u32 1326507024, %v2520
      %v2536 = vor.u32 %v2534, %v2535
      %vm2537 = vcmp.lt.s32.totalorder %v2518, 1
      %vm2538 = vcmp.lt.s32.totalorder %v2518, 2
      %vm2539 = vcmp.lt.s32.totalorder %v2518, 3
      %vm2540 = vcmp.lt.s32.totalorder %v2518, 4
      %v2541 = vsel %vm2537, %v2521, %v2524
      %v2542 = vsel %vm2540, %v2530, 2102212464
      %v2543 = vsel %vm2539, %v2527, %v2542
      %v2544 = vsel %vm2538, %v2541, %v2543
      %v2545 = vsel %vm2537, %v2524, %v2527
      %v2546 = vsel %vm2540, %v2533, 920167782
      %v2547 = vsel %vm2539, %v2530, %v2546
      %v2548 = vsel %vm2538, %v2545, %v2547
      %v2549 = vsel %vm2537, %v2527, %v2530
      %v2550 = vsel %vm2540, %v2536, 1326507024
      %v2551 = vsel %vm2539, %v2533, %v2550
      %v2552 = vsel %vm2538, %v2549, %v2551
      %v2553 = vshll.u32 %v2513, 8
      %v2554 = vand.u32 %v2553, 65535
      %v2555 = vshrl.u32 %v2553, 16
      %v2556 = vand.u32 %v2552, 65535
      %v2557 = vshrl.u32 %v2552, 16
      %v2558 = vmul.u32 %v2554, %v2556
      %v2559 = vmul.u32 %v2554, %v2557
      %v2560 = vmul.u32 %v2555, %v2556
      %v2561 = vmul.u32 %v2555, %v2557
      %v2562 = vshll.u32 %v2559, 16
      %v2563 = vshrl.u32 %v2559, 16
      %v2564 = vshll.u32 %v2560, 16
      %v2565 = vshrl.u32 %v2560, 16
      %vm2566 = vc.u32 %v2558, %v2562
      %v2567 = vsel %vm2566, 1, 0
      %v2568 = vadd.s32 %v2558, %v2562
      %v2569 = vadd.s32 %v2561, %v2567
      %vm2570 = vc.u32 %v2568, %v2564
      %v2571 = vsel %vm2570, 1, 0
      %v2572 = vadd.s32 %v2568, %v2564
      %v2573 = vadd.s32 %v2569, %v2571
      %v2574 = vadd.s32 %v2573, %v2563
      %v2575 = vadd.s32 %v2574, %v2565
      %v2576 = vand.u32 %v2553, 65535
      %v2577 = vshrl.u32 %v2553, 16
      %v2578 = vand.u32 %v2548, 65535
      %v2579 = vshrl.u32 %v2548, 16
      %v2580 = vmul.u32 %v2576, %v2578
      %v2581 = vmul.u32 %v2576, %v2579
      %v2582 = vmul.u32 %v2577, %v2578
      %v2583 = vmul.u32 %v2577, %v2579
      %v2584 = vshll.u32 %v2581, 16
      %v2585 = vshrl.u32 %v2581, 16
      %v2586 = vshll.u32 %v2582, 16
      %v2587 = vshrl.u32 %v2582, 16
      %vm2588 = vc.u32 %v2580, %v2584
      %v2589 = vsel %vm2588, 1, 0
      %v2590 = vadd.s32 %v2580, %v2584
      %v2591 = vadd.s32 %v2583, %v2589
      %vm2592 = vc.u32 %v2590, %v2586
      %v2593 = vsel %vm2592, 1, 0
      %v2594 = vadd.s32 %v2590, %v2586
      %v2595 = vadd.s32 %v2591, %v2593
      %v2596 = vadd.s32 %v2595, %v2585
      %v2597 = vadd.s32 %v2596, %v2587
      %v2598 = vmul.u32 %v2553, %v2544
      %v2599 = vadd.s32 %v2575, %v2594
      %vm2600 = vc.u32 %v2575, %v2594
      %v2601 = vadd.s32 %v2597, 1
      %v2602 = vsel %vm2600, %v2601, %v2597
      %v2603 = vadd.s32 %v2598, %v2602
      %v2604 = vadd.s32 %v2603, 536870912
      %v2605 = vshrl.u32 %v2604, 30
      %v2606 = vshll.u32 %v2605, 30
      %v2607 = vsub.s32 %v2603, %v2606
      %vm2608 = vcmp.lt.s32.totalorder %v2607, 0
      %v2609 = vsub.s32 0, %v2607
      %v2610 = vsel %vm2608, %v2609, %v2607
      %v2611 = vclz %v2610
      %v2612 = vsub.s32 %v2611, 2
      %vm2613 = vcmp.gt.s32.totalorder 0, %v2612
      %v2614 = vsel %vm2613, 0, %v2612
      %v2615 = vsub.s32 32, %v2614
      %v2616 = vshll.u32 %v2607, %v2614
      %v2617 = vshrl.u32 %v2599, %v2615
      %v2618 = vor.u32 %v2616, %v2617
      %v2619 = vsub.s32 4294967266, %v2614
      %v2620 = vadd.s32 %v2619, 127
      %v2621 = vshll.u32 %v2620, 23
      %v2622 = vor.u32 4788187, %v2621
      %v2623 = vand.u32 2147483647, %v2622
      %v2625 = vcvt.s32.f32 %v2618
      %v2626 = vmul.f32 %v2625, %v2623
      %v2627 = vxor.u32 %v2626, 2147483648
      %v2628 = vsel %vm2507, %v2627, %v2626
      %v2629 = vsub.s32 4, %v2605
      %v2630 = vsel %vm2507, %v2629, %v2605
      %v2631 = vsel %vm2506, %v637, %v2628
      %v2632 = vsel %vm2506, 0, %v2630
      %v2633 = vmul.f32 %v2631, %v2631
      %v2634 = vmul.f32 %v2633, -0.001358992
      %v2635 = vadd.f32 %v2634, 0.041655596
      %v2636 = vmul.f32 %v2633, %v2635
      %v2637 = vadd.f32 %v2636, -0.4999988
      %v2638 = vmul.f32 %v2633, %v2637
      %v2639 = vadd.f32 1.0, %v2638
      %v2640 = vmul.f32 %v2631, %v2631
      %v2641 = vmul.f32 %v2640, -0.00019511016
      %v2642 = vadd.f32 %v2641, 0.008332121
      %v2643 = vmul.f32 %v2640, %v2642
      %v2644 = vadd.f32 %v2643, -0.16666654
      %v2645 = vmul.f32 %v2640, %v2644
      %v2646 = vadd.f32 %v2645, 1.0
      %v2647 = vmul.f32 %v2646, %v2631
      %vm2648 = vweird.f32 %v637
      %v2649 = vand.u32 %v2632, 3
      %vm2650 = vcmp.lt.s32.totalorder %v2649, 2
      %vm2651 = vcmp.eq.s32.totalorder %v2649, 0
      %v2652 = vxor.u32 %v2647, 2147483648
      %v2653 = vsel %vm2651, %v2639, %v2652
      %vm2654 = vcmp.eq.s32.totalorder %v2649, 2
      %v2655 = vxor.u32 %v2639, 2147483648
      %v2656 = vsel %vm2654, %v2655, %v2647
      %v2657 = vsel %vm2650, %v2653, %v2656
      %v2658 = vsel %vm2648, nan, %v2657
      %v2659 = vand.u32 2147483647, %v638
      %vm2660 = vcmp.le.f32.partialorder %v2659, 0.7853982
      %vm2661 = vcmp.lt.s32.totalorder %v638, 0
      %v2662 = vand.u32 %v638, 2139095040
      %v2663 = vshrl.u32 %v2662, 23
      %v2664 = vsub.s32 %v2663, 127
      %v2665 = vand.u32 2147483647, %v638
      %v2666 = vand.u32 %v2665, 8388607
      %v2667 = vor.u32 %v2666, 8388608
      %v2668 = vsub.s32 0, %v2667
      %v2669 = vadd.s32 %v2664, 1
      %vm2670 = vcmp.gt.s32.totalorder %v2669, 0
      %v2671 = vsel %vm2670, %v2669, 0
      %v2672 = vshrl.u32 %v2671, 5
      %v2673 = vand.u32 %v2671, 31
      %v2674 = vsub.s32 32, %v2673
      %v2675 = vshrl.u32 683565275, %v2674
      %v2676 = vshll.u32 683565275, %v2673
      %v2677 = vshrl.u32 2475754826, %v2674
      %v2678 = vor.u32 %v2676, %v2677
      %v2679 = vshll.u32 2475754826, %v2673
      %v2680 = vshrl.u32 2131351028, %v2674
      %v2681 = vor.u32 %v2679, %v2680
      %v2682 = vshll.u32 2131351028, %v2673
      %v2683 = vshrl.u32 2102212464, %v2674
      %v2684 = vor.u32 %v2682, %v2683
      %v2685 = vshll.u32 2102212464, %v2673
      %v2686 = vshrl.u32 920167782, %v2674
      %v2687 = vor.u32 %v2685, %v2686
      %v2688 = vshll.u32 920167782, %v2673
      %v2689 = vshrl.u32 1326507024, %v2674
      %v2690 = vor.u32 %v2688, %v2689
      %vm2691 = vcmp.lt.s32.totalorder %v2672, 1
      %vm2692 = vcmp.lt.s32.totalorder %v2672, 2
      %vm2693 = vcmp.lt.s32.totalorder %v2672, 3
      %vm2694 = vcmp.lt.s32.totalorder %v2672, 4
      %v2695 = vsel %vm2691, %v2675, %v2678
      %v2696 = vsel %vm2694, %v2684, 2102212464
      %v2697 = vsel %vm2693, %v2681, %v2696
      %v2698 = vsel %vm2692, %v2695, %v2697
      %v2699 = vsel %vm2691, %v2678, %v2681
      %v2700 = vsel %vm2694, %v2687, 920167782
      %v2701 = vsel %vm2693, %v2684, %v2700
      %v2702 = vsel %vm2692, %v2699, %v2701
      %v2703 = vsel %vm2691, %v2681, %v2684
      %v2704 = vsel %vm2694, %v2690, 1326507024
      %v2705 = vsel %vm2693, %v2687, %v2704
      %v2706 = vsel %vm2692, %v2703, %v2705
      %v2707 = vshll.u32 %v2667, 8
      %v2708 = vand.u32 %v2707, 65535
      %v2709 = vshrl.u32 %v2707, 16
      %v2710 = vand.u32 %v2706, 65535
      %v2711 = vshrl.u32 %v2706, 16
      %v2712 = vmul.u32 %v2708, %v2710
      %v2713 = vmul.u32 %v2708, %v2711
      %v2714 = vmul.u32 %v2709, %v2710
      %v2715 = vmul.u32 %v2709, %v2711
      %v2716 = vshll.u32 %v2713, 16
      %v2717 = vshrl.u32 %v2713, 16
      %v2718 = vshll.u32 %v2714, 16
      %v2719 = vshrl.u32 %v2714, 16
      %vm2720 = vc.u32 %v2712, %v2716
      %v2721 = vsel %vm2720, 1, 0
      %v2722 = vadd.s32 %v2712, %v2716
      %v2723 = vadd.s32 %v2715, %v2721
      %vm2724 = vc.u32 %v2722, %v2718
      %v2725 = vsel %vm2724, 1, 0
      %v2726 = vadd.s32 %v2722, %v2718
      %v2727 = vadd.s32 %v2723, %v2725
      %v2728 = vadd.s32 %v2727, %v2717
      %v2729 = vadd.s32 %v2728, %v2719
      %v2730 = vand.u32 %v2707, 65535
      %v2731 = vshrl.u32 %v2707, 16
      %v2732 = vand.u32 %v2702, 65535
      %v2733 = vshrl.u32 %v2702, 16
      %v2734 = vmul.u32 %v2730, %v2732
      %v2735 = vmul.u32 %v2730, %v2733
      %v2736 = vmul.u32 %v2731, %v2732
      %v2737 = vmul.u32 %v2731, %v2733
      %v2738 = vshll.u32 %v2735, 16
      %v2739 = vshrl.u32 %v2735, 16
      %v2740 = vshll.u32 %v2736, 16
      %v2741 = vshrl.u32 %v2736, 16
      %vm2742 = vc.u32 %v2734, %v2738
      %v2743 = vsel %vm2742, 1, 0
      %v2744 = vadd.s32 %v2734, %v2738
      %v2745 = vadd.s32 %v2737, %v2743
      %vm2746 = vc.u32 %v2744, %v2740
      %v2747 = vsel %vm2746, 1, 0
      %v2748 = vadd.s32 %v2744, %v2740
      %v2749 = vadd.s32 %v2745, %v2747
      %v2750 = vadd.s32 %v2749, %v2739
      %v2751 = vadd.s32 %v2750, %v2741
      %v2752 = vmul.u32 %v2707, %v2698
      %v2753 = vadd.s32 %v2729, %v2748
      %vm2754 = vc.u32 %v2729, %v2748
      %v2755 = vadd.s32 %v2751, 1
      %v2756 = vsel %vm2754, %v2755, %v2751
      %v2757 = vadd.s32 %v2752, %v2756
      %v2758 = vadd.s32 %v2757, 536870912
      %v2759 = vshrl.u32 %v2758, 30
      %v2760 = vshll.u32 %v2759, 30
      %v2761 = vsub.s32 %v2757, %v2760
      %vm2762 = vcmp.lt.s32.totalorder %v2761, 0
      %v2763 = vsub.s32 0, %v2761
      %v2764 = vsel %vm2762, %v2763, %v2761
      %v2765 = vclz %v2764
      %v2766 = vsub.s32 %v2765, 2
      %vm2767 = vcmp.gt.s32.totalorder 0, %v2766
      %v2768 = vsel %vm2767, 0, %v2766
      %v2769 = vsub.s32 32, %v2768
      %v2770 = vshll.u32 %v2761, %v2768
      %v2771 = vshrl.u32 %v2753, %v2769
      %v2772 = vor.u32 %v2770, %v2771
      %v2773 = vsub.s32 4294967266, %v2768
      %v2774 = vadd.s32 %v2773, 127
      %v2775 = vshll.u32 %v2774, 23
      %v2776 = vor.u32 4788187, %v2775
      %v2777 = vand.u32 2147483647, %v2776
      %v2779 = vcvt.s32.f32 %v2772
      %v2780 = vmul.f32 %v2779, %v2777
      %v2781 = vxor.u32 %v2780, 2147483648
      %v2782 = vsel %vm2661, %v2781, %v2780
      %v2783 = vsub.s32 4, %v2759
      %v2784 = vsel %vm2661, %v2783, %v2759
      %v2785 = vsel %vm2660, %v638, %v2782
      %v2786 = vsel %vm2660, 0, %v2784
      %v2787 = vmul.f32 %v2785, %v2785
      %v2788 = vmul.f32 %v2787, -0.001358992
      %v2789 = vadd.f32 %v2788, 0.041655596
      %v2790 = vmul.f32 %v2787, %v2789
      %v2791 = vadd.f32 %v2790, -0.4999988
      %v2792 = vmul.f32 %v2787, %v2791
      %v2793 = vadd.f32 1.0, %v2792
      %v2794 = vmul.f32 %v2785, %v2785
      %v2795 = vmul.f32 %v2794, -0.00019511016
      %v2796 = vadd.f32 %v2795, 0.008332121
      %v2797 = vmul.f32 %v2794, %v2796
      %v2798 = vadd.f32 %v2797, -0.16666654
      %v2799 = vmul.f32 %v2794, %v2798
      %v2800 = vadd.f32 %v2799, 1.0
      %v2801 = vmul.f32 %v2800, %v2785
      %vm2802 = vweird.f32 %v638
      %v2803 = vand.u32 %v2786, 3
      %vm2804 = vcmp.lt.s32.totalorder %v2803, 2
      %vm2805 = vcmp.eq.s32.totalorder %v2803, 0
      %v2806 = vxor.u32 %v2801, 2147483648
      %v2807 = vsel %vm2805, %v2793, %v2806
      %vm2808 = vcmp.eq.s32.totalorder %v2803, 2
      %v2809 = vxor.u32 %v2793, 2147483648
      %v2810 = vsel %vm2808, %v2809, %v2801
      %v2811 = vsel %vm2804, %v2807, %v2810
      %v2812 = vsel %vm2802, nan, %v2811
      %v2813 = vand.u32 2147483647, %v639
      %vm2814 = vcmp.le.f32.partialorder %v2813, 0.7853982
      %vm2815 = vcmp.lt.s32.totalorder %v639, 0
      %v2816 = vand.u32 %v639, 2139095040
      %v2817 = vshrl.u32 %v2816, 23
      %v2818 = vsub.s32 %v2817, 127
      %v2819 = vand.u32 2147483647, %v639
      %v2820 = vand.u32 %v2819, 8388607
      %v2821 = vor.u32 %v2820, 8388608
      %v2822 = vsub.s32 0, %v2821
      %v2823 = vadd.s32 %v2818, 1
      %vm2824 = vcmp.gt.s32.totalorder %v2823, 0
      %v2825 = vsel %vm2824, %v2823, 0
      %v2826 = vshrl.u32 %v2825, 5
      %v2827 = vand.u32 %v2825, 31
      %v2828 = vsub.s32 32, %v2827
      %v2829 = vshrl.u32 683565275, %v2828
      %v2830 = vshll.u32 683565275, %v2827
      %v2831 = vshrl.u32 2475754826, %v2828
      %v2832 = vor.u32 %v2830, %v2831
      %v2833 = vshll.u32 2475754826, %v2827
      %v2834 = vshrl.u32 2131351028, %v2828
      %v2835 = vor.u32 %v2833, %v2834
      %v2836 = vshll.u32 2131351028, %v2827
      %v2837 = vshrl.u32 2102212464, %v2828
      %v2838 = vor.u32 %v2836, %v2837
      %v2839 = vshll.u32 2102212464, %v2827
      %v2840 = vshrl.u32 920167782, %v2828
      %v2841 = vor.u32 %v2839, %v2840
      %v2842 = vshll.u32 920167782, %v2827
      %v2843 = vshrl.u32 1326507024, %v2828
      %v2844 = vor.u32 %v2842, %v2843
      %vm2845 = vcmp.lt.s32.totalorder %v2826, 1
      %vm2846 = vcmp.lt.s32.totalorder %v2826, 2
      %vm2847 = vcmp.lt.s32.totalorder %v2826, 3
      %vm2848 = vcmp.lt.s32.totalorder %v2826, 4
      %v2849 = vsel %vm2845, %v2829, %v2832
      %v2850 = vsel %vm2848, %v2838, 2102212464
      %v2851 = vsel %vm2847, %v2835, %v2850
      %v2852 = vsel %vm2846, %v2849, %v2851
      %v2853 = vsel %vm2845, %v2832, %v2835
      %v2854 = vsel %vm2848, %v2841, 920167782
      %v2855 = vsel %vm2847, %v2838, %v2854
      %v2856 = vsel %vm2846, %v2853, %v2855
      %v2857 = vsel %vm2845, %v2835, %v2838
      %v2858 = vsel %vm2848, %v2844, 1326507024
      %v2859 = vsel %vm2847, %v2841, %v2858
      %v2860 = vsel %vm2846, %v2857, %v2859
      %v2861 = vshll.u32 %v2821, 8
      %v2862 = vand.u32 %v2861, 65535
      %v2863 = vshrl.u32 %v2861, 16
      %v2864 = vand.u32 %v2860, 65535
      %v2865 = vshrl.u32 %v2860, 16
      %v2866 = vmul.u32 %v2862, %v2864
      %v2867 = vmul.u32 %v2862, %v2865
      %v2868 = vmul.u32 %v2863, %v2864
      %v2869 = vmul.u32 %v2863, %v2865
      %v2870 = vshll.u32 %v2867, 16
      %v2871 = vshrl.u32 %v2867, 16
      %v2872 = vshll.u32 %v2868, 16
      %v2873 = vshrl.u32 %v2868, 16
      %vm2874 = vc.u32 %v2866, %v2870
      %v2875 = vsel %vm2874, 1, 0
      %v2876 = vadd.s32 %v2866, %v2870
      %v2877 = vadd.s32 %v2869, %v2875
      %vm2878 = vc.u32 %v2876, %v2872
      %v2879 = vsel %vm2878, 1, 0
      %v2880 = vadd.s32 %v2876, %v2872
      %v2881 = vadd.s32 %v2877, %v2879
      %v2882 = vadd.s32 %v2881, %v2871
      %v2883 = vadd.s32 %v2882, %v2873
      %v2884 = vand.u32 %v2861, 65535
      %v2885 = vshrl.u32 %v2861, 16
      %v2886 = vand.u32 %v2856, 65535
      %v2887 = vshrl.u32 %v2856, 16
      %v2888 = vmul.u32 %v2884, %v2886
      %v2889 = vmul.u32 %v2884, %v2887
      %v2890 = vmul.u32 %v2885, %v2886
      %v2891 = vmul.u32 %v2885, %v2887
      %v2892 = vshll.u32 %v2889, 16
      %v2893 = vshrl.u32 %v2889, 16
      %v2894 = vshll.u32 %v2890, 16
      %v2895 = vshrl.u32 %v2890, 16
      %vm2896 = vc.u32 %v2888, %v2892
      %v2897 = vsel %vm2896, 1, 0
      %v2898 = vadd.s32 %v2888, %v2892
      %v2899 = vadd.s32 %v2891, %v2897
      %vm2900 = vc.u32 %v2898, %v2894
      %v2901 = vsel %vm2900, 1, 0
      %v2902 = vadd.s32 %v2898, %v2894
      %v2903 = vadd.s32 %v2899, %v2901
      %v2904 = vadd.s32 %v2903, %v2893
      %v2905 = vadd.s32 %v2904, %v2895
      %v2906 = vmul.u32 %v2861, %v2852
      %v2907 = vadd.s32 %v2883, %v2902
      %vm2908 = vc.u32 %v2883, %v2902
      %v2909 = vadd.s32 %v2905, 1
      %v2910 = vsel %vm2908, %v2909, %v2905
      %v2911 = vadd.s32 %v2906, %v2910
      %v2912 = vadd.s32 %v2911, 536870912
      %v2913 = vshrl.u32 %v2912, 30
      %v2914 = vshll.u32 %v2913, 30
      %v2915 = vsub.s32 %v2911, %v2914
      %vm2916 = vcmp.lt.s32.totalorder %v2915, 0
      %v2917 = vsub.s32 0, %v2915
      %v2918 = vsel %vm2916, %v2917, %v2915
      %v2919 = vclz %v2918
      %v2920 = vsub.s32 %v2919, 2
      %vm2921 = vcmp.gt.s32.totalorder 0, %v2920
      %v2922 = vsel %vm2921, 0, %v2920
      %v2923 = vsub.s32 32, %v2922
      %v2924 = vshll.u32 %v2915, %v2922
      %v2925 = vshrl.u32 %v2907, %v2923
      %v2926 = vor.u32 %v2924, %v2925
      %v2927 = vsub.s32 4294967266, %v2922
      %v2928 = vadd.s32 %v2927, 127
      %v2929 = vshll.u32 %v2928, 23
      %v2930 = vor.u32 4788187, %v2929
      %v2931 = vand.u32 2147483647, %v2930
      %v2933 = vcvt.s32.f32 %v2926
      %v2934 = vmul.f32 %v2933, %v2931
      %v2935 = vxor.u32 %v2934, 2147483648
      %v2936 = vsel %vm2815, %v2935, %v2934
      %v2937 = vsub.s32 4, %v2913
      %v2938 = vsel %vm2815, %v2937, %v2913
      %v2939 = vsel %vm2814, %v639, %v2936
      %v2940 = vsel %vm2814, 0, %v2938
      %v2941 = vmul.f32 %v2939, %v2939
      %v2942 = vmul.f32 %v2941, -0.001358992
      %v2943 = vadd.f32 %v2942, 0.041655596
      %v2944 = vmul.f32 %v2941, %v2943
      %v2945 = vadd.f32 %v2944, -0.4999988
      %v2946 = vmul.f32 %v2941, %v2945
      %v2947 = vadd.f32 1.0, %v2946
      %v2948 = vmul.f32 %v2939, %v2939
      %v2949 = vmul.f32 %v2948, -0.00019511016
      %v2950 = vadd.f32 %v2949, 0.008332121
      %v2951 = vmul.f32 %v2948, %v2950
      %v2952 = vadd.f32 %v2951, -0.16666654
      %v2953 = vmul.f32 %v2948, %v2952
      %v2954 = vadd.f32 %v2953, 1.0
      %v2955 = vmul.f32 %v2954, %v2939
      %vm2956 = vweird.f32 %v639
      %v2957 = vand.u32 %v2940, 3
      %vm2958 = vcmp.lt.s32.totalorder %v2957, 2
      %vm2959 = vcmp.eq.s32.totalorder %v2957, 0
      %v2960 = vxor.u32 %v2955, 2147483648
      %v2961 = vsel %vm2959, %v2947, %v2960
      %vm2962 = vcmp.eq.s32.totalorder %v2957, 2
      %v2963 = vxor.u32 %v2947, 2147483648
      %v2964 = vsel %vm2962, %v2963, %v2955
      %v2965 = vsel %vm2958, %v2961, %v2964
      %v2966 = vsel %vm2956, nan, %v2965
      %v2967 = vand.u32 2147483647, %v640
      %vm2968 = vcmp.le.f32.partialorder %v2967, 0.7853982
      %vm2969 = vcmp.lt.s32.totalorder %v640, 0
      %v2970 = vand.u32 %v640, 2139095040
      %v2971 = vshrl.u32 %v2970, 23
      %v2972 = vsub.s32 %v2971, 127
      %v2973 = vand.u32 2147483647, %v640
      %v2974 = vand.u32 %v2973, 8388607
      %v2975 = vor.u32 %v2974, 8388608
      %v2976 = vsub.s32 0, %v2975
      %v2977 = vadd.s32 %v2972, 1
      %vm2978 = vcmp.gt.s32.totalorder %v2977, 0
      %v2979 = vsel %vm2978, %v2977, 0
      %v2980 = vshrl.u32 %v2979, 5
      %v2981 = vand.u32 %v2979, 31
      %v2982 = vsub.s32 32, %v2981
      %v2983 = vshrl.u32 683565275, %v2982
      %v2984 = vshll.u32 683565275, %v2981
      %v2985 = vshrl.u32 2475754826, %v2982
      %v2986 = vor.u32 %v2984, %v2985
      %v2987 = vshll.u32 2475754826, %v2981
      %v2988 = vshrl.u32 2131351028, %v2982
      %v2989 = vor.u32 %v2987, %v2988
      %v2990 = vshll.u32 2131351028, %v2981
      %v2991 = vshrl.u32 2102212464, %v2982
      %v2992 = vor.u32 %v2990, %v2991
      %v2993 = vshll.u32 2102212464, %v2981
      %v2994 = vshrl.u32 920167782, %v2982
      %v2995 = vor.u32 %v2993, %v2994
      %v2996 = vshll.u32 920167782, %v2981
      %v2997 = vshrl.u32 1326507024, %v2982
      %v2998 = vor.u32 %v2996, %v2997
      %vm2999 = vcmp.lt.s32.totalorder %v2980, 1
      %vm3000 = vcmp.lt.s32.totalorder %v2980, 2
      %vm3001 = vcmp.lt.s32.totalorder %v2980, 3
      %vm3002 = vcmp.lt.s32.totalorder %v2980, 4
      %v3003 = vsel %vm2999, %v2983, %v2986
      %v3004 = vsel %vm3002, %v2992, 2102212464
      %v3005 = vsel %vm3001, %v2989, %v3004
      %v3006 = vsel %vm3000, %v3003, %v3005
      %v3007 = vsel %vm2999, %v2986, %v2989
      %v3008 = vsel %vm3002, %v2995, 920167782
      %v3009 = vsel %vm3001, %v2992, %v3008
      %v3010 = vsel %vm3000, %v3007, %v3009
      %v3011 = vsel %vm2999, %v2989, %v2992
      %v3012 = vsel %vm3002, %v2998, 1326507024
      %v3013 = vsel %vm3001, %v2995, %v3012
      %v3014 = vsel %vm3000, %v3011, %v3013
      %v3015 = vshll.u32 %v2975, 8
      %v3016 = vand.u32 %v3015, 65535
      %v3017 = vshrl.u32 %v3015, 16
      %v3018 = vand.u32 %v3014, 65535
      %v3019 = vshrl.u32 %v3014, 16
      %v3020 = vmul.u32 %v3016, %v3018
      %v3021 = vmul.u32 %v3016, %v3019
      %v3022 = vmul.u32 %v3017, %v3018
      %v3023 = vmul.u32 %v3017, %v3019
      %v3024 = vshll.u32 %v3021, 16
      %v3025 = vshrl.u32 %v3021, 16
      %v3026 = vshll.u32 %v3022, 16
      %v3027 = vshrl.u32 %v3022, 16
      %vm3028 = vc.u32 %v3020, %v3024
      %v3029 = vsel %vm3028, 1, 0
      %v3030 = vadd.s32 %v3020, %v3024
      %v3031 = vadd.s32 %v3023, %v3029
      %vm3032 = vc.u32 %v3030, %v3026
      %v3033 = vsel %vm3032, 1, 0
      %v3034 = vadd.s32 %v3030, %v3026
      %v3035 = vadd.s32 %v3031, %v3033
      %v3036 = vadd.s32 %v3035, %v3025
      %v3037 = vadd.s32 %v3036, %v3027
      %v3038 = vand.u32 %v3015, 65535
      %v3039 = vshrl.u32 %v3015, 16
      %v3040 = vand.u32 %v3010, 65535
      %v3041 = vshrl.u32 %v3010, 16
      %v3042 = vmul.u32 %v3038, %v3040
      %v3043 = vmul.u32 %v3038, %v3041
      %v3044 = vmul.u32 %v3039, %v3040
      %v3045 = vmul.u32 %v3039, %v3041
      %v3046 = vshll.u32 %v3043, 16
      %v3047 = vshrl.u32 %v3043, 16
      %v3048 = vshll.u32 %v3044, 16
      %v3049 = vshrl.u32 %v3044, 16
      %vm3050 = vc.u32 %v3042, %v3046
      %v3051 = vsel %vm3050, 1, 0
      %v3052 = vadd.s32 %v3042, %v3046
      %v3053 = vadd.s32 %v3045, %v3051
      %vm3054 = vc.u32 %v3052, %v3048
      %v3055 = vsel %vm3054, 1, 0
      %v3056 = vadd.s32 %v3052, %v3048
      %v3057 = vadd.s32 %v3053, %v3055
      %v3058 = vadd.s32 %v3057, %v3047
      %v3059 = vadd.s32 %v3058, %v3049
      %v3060 = vmul.u32 %v3015, %v3006
      %v3061 = vadd.s32 %v3037, %v3056
      %vm3062 = vc.u32 %v3037, %v3056
      %v3063 = vadd.s32 %v3059, 1
      %v3064 = vsel %vm3062, %v3063, %v3059
      %v3065 = vadd.s32 %v3060, %v3064
      %v3066 = vadd.s32 %v3065, 536870912
      %v3067 = vshrl.u32 %v3066, 30
      %v3068 = vshll.u32 %v3067, 30
      %v3069 = vsub.s32 %v3065, %v3068
      %vm3070 = vcmp.lt.s32.totalorder %v3069, 0
      %v3071 = vsub.s32 0, %v3069
      %v3072 = vsel %vm3070, %v3071, %v3069
      %v3073 = vclz %v3072
      %v3074 = vsub.s32 %v3073, 2
      %vm3075 = vcmp.gt.s32.totalorder 0, %v3074
      %v3076 = vsel %vm3075, 0, %v3074
      %v3077 = vsub.s32 32, %v3076
      %v3078 = vshll.u32 %v3069, %v3076
      %v3079 = vshrl.u32 %v3061, %v3077
      %v3080 = vor.u32 %v3078, %v3079
      %v3081 = vsub.s32 4294967266, %v3076
      %v3082 = vadd.s32 %v3081, 127
      %v3083 = vshll.u32 %v3082, 23
      %v3084 = vor.u32 4788187, %v3083
      %v3085 = vand.u32 2147483647, %v3084
      %v3087 = vcvt.s32.f32 %v3080
      %v3088 = vmul.f32 %v3087, %v3085
      %v3089 = vxor.u32 %v3088, 2147483648
      %v3090 = vsel %vm2969, %v3089, %v3088
      %v3091 = vsub.s32 4, %v3067
      %v3092 = vsel %vm2969, %v3091, %v3067
      %v3093 = vsel %vm2968, %v640, %v3090
      %v3094 = vsel %vm2968, 0, %v3092
      %v3095 = vmul.f32 %v3093, %v3093
      %v3096 = vmul.f32 %v3095, -0.001358992
      %v3097 = vadd.f32 %v3096, 0.041655596
      %v3098 = vmul.f32 %v3095, %v3097
      %v3099 = vadd.f32 %v3098, -0.4999988
      %v3100 = vmul.f32 %v3095, %v3099
      %v3101 = vadd.f32 1.0, %v3100
      %v3102 = vmul.f32 %v3093, %v3093
      %v3103 = vmul.f32 %v3102, -0.00019511016
      %v3104 = vadd.f32 %v3103, 0.008332121
      %v3105 = vmul.f32 %v3102, %v3104
      %v3106 = vadd.f32 %v3105, -0.16666654
      %v3107 = vmul.f32 %v3102, %v3106
      %v3108 = vadd.f32 %v3107, 1.0
      %v3109 = vmul.f32 %v3108, %v3093
      %vm3110 = vweird.f32 %v640
      %v3111 = vand.u32 %v3094, 3
      %vm3112 = vcmp.lt.s32.totalorder %v3111, 2
      %vm3113 = vcmp.eq.s32.totalorder %v3111, 0
      %v3114 = vxor.u32 %v3109, 2147483648
      %v3115 = vsel %vm3113, %v3101, %v3114
      %vm3116 = vcmp.eq.s32.totalorder %v3111, 2
      %v3117 = vxor.u32 %v3101, 2147483648
      %v3118 = vsel %vm3116, %v3117, %v3109
      %v3119 = vsel %vm3112, %v3115, %v3118
      %v3120 = vsel %vm3110, nan, %v3119
      %v3121 = vpack.c.bf16 %v958, %v803
      %v3122 = vpack.c.bf16 %v1268, %v1113
      %v3123 = vpack.c.bf16 %v1578, %v1423
      %v3124 = vpack.c.bf16 %v1888, %v1733
      %v3125 = vld [vmem:[%s3] sm:$0xf]
      %v3126 = vld [vmem:[%s3 + $0x4] sm:$0xf]
      %v3127 = vld [vmem:[%s3 + $0x8] sm:$0xf]
      %v3128 = vld [vmem:[%s3 + $0xc] sm:$0xf]
      %v3129 = vld [vmem:[%s3 + $0x10] sm:$0xf]
      %v3130 = vld [vmem:[%s3 + $0x14] sm:$0xf]
      %v3131 = vld [vmem:[%s3 + $0x18] sm:$0xf]
      %v3132 = vld [vmem:[%s3 + $0x1c] sm:$0xf]
      %v3141 = vunpack.c.l.b16 %v3125
      %v3142 = vunpack.c.l.b16 %v3126
      %v3143 = vunpack.c.l.b16 %v3127
      %v3144 = vunpack.c.l.b16 %v3128
      %v3145 = vunpack.c.l.b16 %v3129
      %v3146 = vunpack.c.l.b16 %v3130
      %v3147 = vunpack.c.l.b16 %v3131
      %v3148 = vunpack.c.l.b16 %v3132
      %v3149 = vpack.c.b16 %v3142, %v3141
      %v3150 = vpack.c.b16 %v3144, %v3143
      %v3151 = vpack.c.b16 %v3146, %v3145
      %v3152 = vpack.c.b16 %v3148, %v3147
      %vm3157 = vcmask 523264
      %v3159 = vsel %vm3157, %v3121, 0
      %v3162 = vsel %vm3157, %v3122, 0
      %v3165 = vsel %vm3157, %v3123, 0
      %v3168 = vsel %vm3157, %v3124, 0
      %3170 = vmatpush.bf16.msra.mxu0 0
      %3171 = vmatpush.bf16.msra.mxu0 0
      %3172 = vmatpush.bf16.msra.mxu0 0
      %3173 = vmatpush.bf16.msra.mxu0 0
      %3174 = vmatpush.bf16.msra.mxu0 %v3152
      %3175 = vmatpush.bf16.msra.mxu0 %v3151
      %3176 = vmatpush.bf16.msra.mxu0 %v3150
      %3177 = vmatpush.bf16.msra.mxu0 %v3149
      %3178 = vmatmul.bf16.gmra.mxu0 %v3159
      %v3179 = vpop.f32.mrf.mxu0
      %v3180 = vadd.f32 0.0, %v3179
      %v3181 = vpop.f32.mrf.mxu0
      %v3182 = vadd.f32 0.0, %v3181
      %3183 = vmatmul.bf16.gmra.mxu0 %v3162
      %v3184 = vpop.f32.mrf.mxu0
      %v3185 = vadd.f32 0.0, %v3184
      %v3186 = vpop.f32.mrf.mxu0
      %v3187 = vadd.f32 0.0, %v3186
      %3188 = vmatmul.bf16.gmra.mxu0 %v3165
      %v3189 = vpop.f32.mrf.mxu0
      %v3190 = vadd.f32 0.0, %v3189
      %v3191 = vpop.f32.mrf.mxu0
      %v3192 = vadd.f32 0.0, %v3191
      %3193 = vmatmul.bf16.gmra.mxu0 %v3168
      %v3194 = vpop.f32.mrf.mxu0
      %v3195 = vadd.f32 0.0, %v3194
      %v3196 = vpop.f32.mrf.mxu0
      %v3197 = vadd.f32 0.0, %v3196
      %3198 = vdwg.mxu0
      %v3199 = vadd.f32 %v641, %v3180
      %v3200 = vadd.f32 %v642, %v3182
      %v3201 = vadd.f32 %v643, %v3185
      %v3202 = vadd.f32 %v644, %v3187
      %v3203 = vadd.f32 %v645, %v3190
      %v3204 = vadd.f32 %v646, %v3192
      %v3205 = vadd.f32 %v647, %v3195
      %v3206 = vadd.f32 %v648, %v3197
      %v3207 = vpack.c.bf16 %v2196, %v2042
      %v3208 = vpack.c.bf16 %v2504, %v2350
      %v3209 = vpack.c.bf16 %v2812, %v2658
      %v3210 = vpack.c.bf16 %v3120, %v2966
      %v3211 = vld [vmem:[%s4] sm:$0xf]
      %v3212 = vld [vmem:[%s4 + $0x4] sm:$0xf]
      %v3213 = vld [vmem:[%s4 + $0x8] sm:$0xf]
      %v3214 = vld [vmem:[%s4 + $0xc] sm:$0xf]
      %v3215 = vld [vmem:[%s4 + $0x10] sm:$0xf]
      %v3216 = vld [vmem:[%s4 + $0x14] sm:$0xf]
      %v3217 = vld [vmem:[%s4 + $0x18] sm:$0xf]
      %v3218 = vld [vmem:[%s4 + $0x1c] sm:$0xf]
      %v3227 = vunpack.c.l.b16 %v3211
      %v3228 = vunpack.c.l.b16 %v3212
      %v3229 = vunpack.c.l.b16 %v3213
      %v3230 = vunpack.c.l.b16 %v3214
      %v3231 = vunpack.c.l.b16 %v3215
      %v3232 = vunpack.c.l.b16 %v3216
      %v3233 = vunpack.c.l.b16 %v3217
      %v3234 = vunpack.c.l.b16 %v3218
      %v3235 = vpack.c.b16 %v3228, %v3227
      %v3236 = vpack.c.b16 %v3230, %v3229
      %v3237 = vpack.c.b16 %v3232, %v3231
      %v3238 = vpack.c.b16 %v3234, %v3233
      %v3244 = vsel %vm3157, %v3207, 0
      %v3247 = vsel %vm3157, %v3208, 0
      %v3250 = vsel %vm3157, %v3209, 0
      %v3253 = vsel %vm3157, %v3210, 0
      %3255 = vmatpush.bf16.msra.mxu0 0
      %3256 = vmatpush.bf16.msra.mxu0 0
      %3257 = vmatpush.bf16.msra.mxu0 0
      %3258 = vmatpush.bf16.msra.mxu0 0
      %3259 = vmatpush.bf16.msra.mxu0 %v3238
      %3260 = vmatpush.bf16.msra.mxu0 %v3237
      %3261 = vmatpush.bf16.msra.mxu0 %v3236
      %3262 = vmatpush.bf16.msra.mxu0 %v3235
      %3263 = vmatmul.bf16.gmra.mxu0 %v3244
      %v3264 = vpop.f32.mrf.mxu0
      %v3265 = vadd.f32 0.0, %v3264
      %v3266 = vpop.f32.mrf.mxu0
      %v3267 = vadd.f32 0.0, %v3266
      %3268 = vmatmul.bf16.gmra.mxu0 %v3247
      %v3269 = vpop.f32.mrf.mxu0
      %v3270 = vadd.f32 0.0, %v3269
      %v3271 = vpop.f32.mrf.mxu0
      %v3272 = vadd.f32 0.0, %v3271
      %3273 = vmatmul.bf16.gmra.mxu0 %v3250
      %v3274 = vpop.f32.mrf.mxu0
      %v3275 = vadd.f32 0.0, %v3274
      %v3276 = vpop.f32.mrf.mxu0
      %v3277 = vadd.f32 0.0, %v3276
      %3278 = vmatmul.bf16.gmra.mxu0 %v3253
      %v3279 = vpop.f32.mrf.mxu0
      %v3280 = vadd.f32 0.0, %v3279
      %v3281 = vpop.f32.mrf.mxu0
      %v3282 = vadd.f32 0.0, %v3281
      %3283 = vdwg.mxu0
      %v3284 = vadd.f32 %v3199, %v3265
      %v3285 = vadd.f32 %v3200, %v3267
      %v3286 = vadd.f32 %v3201, %v3270
      %v3287 = vadd.f32 %v3202, %v3272
      %v3288 = vadd.f32 %v3203, %v3275
      %v3289 = vadd.f32 %v3204, %v3277
      %v3290 = vadd.f32 %v3205, %v3280
      %v3291 = vadd.f32 %v3206, %v3282
      %v3292 = vld [vmem:[%s5] sm:$0x1]
      %v3294 = vperm.slane %v3292, 0
      %v3296 = vadd.f32 %v3284, %v3294
      %v3297 = vadd.f32 %v3285, %v3294
      %v3298 = vadd.f32 %v3286, %v3294
      %v3299 = vadd.f32 %v3287, %v3294
      %v3300 = vadd.f32 %v3288, %v3294
      %v3301 = vadd.f32 %v3289, %v3294
      %v3302 = vadd.f32 %v3290, %v3294
      %v3303 = vadd.f32 %v3291, %v3294
      %v3304 = vmax.f32 %v3296, 0.0
      %v3305 = vmax.f32 %v3297, 0.0
      %v3306 = vmax.f32 %v3298, 0.0
      %v3307 = vmax.f32 %v3299, 0.0
      %v3308 = vmax.f32 %v3300, 0.0
      %v3309 = vmax.f32 %v3301, 0.0
      %v3310 = vmax.f32 %v3302, 0.0
      %v3311 = vmax.f32 %v3303, 0.0
      %v3312 = vpack.c.bf16 %v3305, %v3304
      %v3313 = vpack.c.bf16 %v3307, %v3306
      %v3314 = vpack.c.bf16 %v3309, %v3308
      %v3315 = vpack.c.bf16 %v3311, %v3310
      %v3316 = vld [vmem:[%s6] sm:$0xf]
      %v3317 = vld [vmem:[%s6 + $0x4] sm:$0xf]
      %v3318 = vld [vmem:[%s6 + $0x8] sm:$0xf]
      %v3319 = vld [vmem:[%s6 + $0xc] sm:$0xf]
      %v3320 = vld [vmem:[%s6 + $0x10] sm:$0xf]
      %v3321 = vld [vmem:[%s6 + $0x14] sm:$0xf]
      %v3322 = vld [vmem:[%s6 + $0x18] sm:$0xf]
      %v3323 = vld [vmem:[%s6 + $0x1c] sm:$0xf]
      %v3324 = vld [vmem:[%s7] sm:$0x1]
      %v3326 = vperm.slane %v3324, 0
      %v3336 = vunpack.c.l.b16 %v3316
      %v3337 = vunpack.c.l.b16 %v3317
      %v3338 = vunpack.c.l.b16 %v3318
      %v3339 = vunpack.c.l.b16 %v3319
      %v3340 = vunpack.c.l.b16 %v3320
      %v3341 = vunpack.c.l.b16 %v3321
      %v3342 = vunpack.c.l.b16 %v3322
      %v3343 = vunpack.c.l.b16 %v3323
      %v3344 = vpack.c.b16 %v3337, %v3336
      %v3345 = vpack.c.b16 %v3339, %v3338
      %v3346 = vpack.c.b16 %v3341, %v3340
      %v3347 = vpack.c.b16 %v3343, %v3342
      %v3353 = vsel %vm3157, %v3312, 0
      %v3356 = vsel %vm3157, %v3313, 0
      %v3359 = vsel %vm3157, %v3314, 0
      %v3362 = vsel %vm3157, %v3315, 0
      %3364 = vmatpush.bf16.msra.mxu0 0
      %3365 = vmatpush.bf16.msra.mxu0 0
      %3366 = vmatpush.bf16.msra.mxu0 0
      %3367 = vmatpush.bf16.msra.mxu0 0
      %3368 = vmatpush.bf16.msra.mxu0 %v3347
      %3369 = vmatpush.bf16.msra.mxu0 %v3346
      %3370 = vmatpush.bf16.msra.mxu0 %v3345
      %3371 = vmatpush.bf16.msra.mxu0 %v3344
      %3372 = vmatmul.bf16.gmra.mxu0 %v3353
      %v3373 = vpop.f32.mrf.mxu0
      %v3374 = vadd.f32 %v3326, %v3373
      %v3375 = vpop.f32.mrf.mxu0
      %v3376 = vadd.f32 %v3326, %v3375
      %3377 = vmatmul.bf16.gmra.mxu0 %v3356
      %v3378 = vpop.f32.mrf.mxu0
      %v3379 = vadd.f32 %v3326, %v3378
      %v3380 = vpop.f32.mrf.mxu0
      %v3381 = vadd.f32 %v3326, %v3380
      %3382 = vmatmul.bf16.gmra.mxu0 %v3359
      %v3383 = vpop.f32.mrf.mxu0
      %v3384 = vadd.f32 %v3326, %v3383
      %v3385 = vpop.f32.mrf.mxu0
      %v3386 = vadd.f32 %v3326, %v3385
      %3387 = vmatmul.bf16.gmra.mxu0 %v3362
      %v3388 = vpop.f32.mrf.mxu0
      %v3389 = vadd.f32 %v3326, %v3388
      %v3390 = vpop.f32.mrf.mxu0
      %v3391 = vadd.f32 %v3326, %v3390
      %3392 = vdwg.mxu0
      %v3393 = vmax.f32 %v3374, 0.0
      %v3394 = vmax.f32 %v3376, 0.0
      %v3395 = vmax.f32 %v3379, 0.0
      %v3396 = vmax.f32 %v3381, 0.0
      %v3397 = vmax.f32 %v3384, 0.0
      %v3398 = vmax.f32 %v3386, 0.0
      %v3399 = vmax.f32 %v3389, 0.0
      %v3400 = vmax.f32 %v3391, 0.0
      %v3401 = vpack.c.bf16 %v3394, %v3393
      %v3402 = vpack.c.bf16 %v3396, %v3395
      %v3403 = vpack.c.bf16 %v3398, %v3397
      %v3404 = vpack.c.bf16 %v3400, %v3399
      %s3405 = scalar_lea.vmem %s6, 32
      %v3406 = vld [vmem:[%s3405] sm:$0xf]
      %v3407 = vld [vmem:[%s3405 + $0x4] sm:$0xf]
      %v3408 = vld [vmem:[%s3405 + $0x8] sm:$0xf]
      %v3409 = vld [vmem:[%s3405 + $0xc] sm:$0xf]
      %v3410 = vld [vmem:[%s3405 + $0x10] sm:$0xf]
      %v3411 = vld [vmem:[%s3405 + $0x14] sm:$0xf]
      %v3412 = vld [vmem:[%s3405 + $0x18] sm:$0xf]
      %v3413 = vld [vmem:[%s3405 + $0x1c] sm:$0xf]
      %s3414 = scalar_lea.vmem %s7, 1
      %v3415 = vld [vmem:[%s3414] sm:$0x1]
      %v3417 = vperm.slane %v3415, 0
      %v3427 = vunpack.c.l.b16 %v3406
      %v3428 = vunpack.c.l.b16 %v3407
      %v3429 = vunpack.c.l.b16 %v3408
      %v3430 = vunpack.c.l.b16 %v3409
      %v3431 = vunpack.c.l.b16 %v3410
      %v3432 = vunpack.c.l.b16 %v3411
      %v3433 = vunpack.c.l.b16 %v3412
      %v3434 = vunpack.c.l.b16 %v3413
      %v3435 = vpack.c.b16 %v3428, %v3427
      %v3436 = vpack.c.b16 %v3430, %v3429
      %v3437 = vpack.c.b16 %v3432, %v3431
      %v3438 = vpack.c.b16 %v3434, %v3433
      %v3444 = vsel %vm3157, %v3401, 0
      %v3447 = vsel %vm3157, %v3402, 0
      %v3450 = vsel %vm3157, %v3403, 0
      %v3453 = vsel %vm3157, %v3404, 0
      %3455 = vmatpush.bf16.msra.mxu0 0
      %3456 = vmatpush.bf16.msra.mxu0 0
      %3457 = vmatpush.bf16.msra.mxu0 0
      %3458 = vmatpush.bf16.msra.mxu0 0
      %3459 = vmatpush.bf16.msra.mxu0 %v3438
      %3460 = vmatpush.bf16.msra.mxu0 %v3437
      %3461 = vmatpush.bf16.msra.mxu0 %v3436
      %3462 = vmatpush.bf16.msra.mxu0 %v3435
      %3463 = vmatmul.bf16.gmra.mxu0 %v3444
      %v3464 = vpop.f32.mrf.mxu0
      %v3465 = vadd.f32 %v3417, %v3464
      %v3466 = vpop.f32.mrf.mxu0
      %v3467 = vadd.f32 %v3417, %v3466
      %3468 = vmatmul.bf16.gmra.mxu0 %v3447
      %v3469 = vpop.f32.mrf.mxu0
      %v3470 = vadd.f32 %v3417, %v3469
      %v3471 = vpop.f32.mrf.mxu0
      %v3472 = vadd.f32 %v3417, %v3471
      %3473 = vmatmul.bf16.gmra.mxu0 %v3450
      %v3474 = vpop.f32.mrf.mxu0
      %v3475 = vadd.f32 %v3417, %v3474
      %v3476 = vpop.f32.mrf.mxu0
      %v3477 = vadd.f32 %v3417, %v3476
      %3478 = vmatmul.bf16.gmra.mxu0 %v3453
      %v3479 = vpop.f32.mrf.mxu0
      %v3480 = vadd.f32 %v3417, %v3479
      %v3481 = vpop.f32.mrf.mxu0
      %v3482 = vadd.f32 %v3417, %v3481
      %3483 = vdwg.mxu0
      %v3484 = vmax.f32 %v3465, 0.0
      %v3485 = vmax.f32 %v3467, 0.0
      %v3486 = vmax.f32 %v3470, 0.0
      %v3487 = vmax.f32 %v3472, 0.0
      %v3488 = vmax.f32 %v3475, 0.0
      %v3489 = vmax.f32 %v3477, 0.0
      %v3490 = vmax.f32 %v3480, 0.0
      %v3491 = vmax.f32 %v3482, 0.0
      %v3492 = vpack.c.bf16 %v3485, %v3484
      %v3493 = vpack.c.bf16 %v3487, %v3486
      %v3494 = vpack.c.bf16 %v3489, %v3488
      %v3495 = vpack.c.bf16 %v3491, %v3490
      %s3496 = scalar_lea.vmem %s6, 64
      %v3497 = vld [vmem:[%s3496] sm:$0xf]
      %v3498 = vld [vmem:[%s3496 + $0x4] sm:$0xf]
      %v3499 = vld [vmem:[%s3496 + $0x8] sm:$0xf]
      %v3500 = vld [vmem:[%s3496 + $0xc] sm:$0xf]
      %v3501 = vld [vmem:[%s3496 + $0x10] sm:$0xf]
      %v3502 = vld [vmem:[%s3496 + $0x14] sm:$0xf]
      %v3503 = vld [vmem:[%s3496 + $0x18] sm:$0xf]
      %v3504 = vld [vmem:[%s3496 + $0x1c] sm:$0xf]
      %s3505 = scalar_lea.vmem %s7, 2
      %v3506 = vld [vmem:[%s3505] sm:$0x1]
      %v3508 = vperm.slane %v3506, 0
      %v3518 = vunpack.c.l.b16 %v3497
      %v3519 = vunpack.c.l.b16 %v3498
      %v3520 = vunpack.c.l.b16 %v3499
      %v3521 = vunpack.c.l.b16 %v3500
      %v3522 = vunpack.c.l.b16 %v3501
      %v3523 = vunpack.c.l.b16 %v3502
      %v3524 = vunpack.c.l.b16 %v3503
      %v3525 = vunpack.c.l.b16 %v3504
      %v3526 = vpack.c.b16 %v3519, %v3518
      %v3527 = vpack.c.b16 %v3521, %v3520
      %v3528 = vpack.c.b16 %v3523, %v3522
      %v3529 = vpack.c.b16 %v3525, %v3524
      %v3535 = vsel %vm3157, %v3492, 0
      %v3538 = vsel %vm3157, %v3493, 0
      %v3541 = vsel %vm3157, %v3494, 0
      %v3544 = vsel %vm3157, %v3495, 0
      %3546 = vmatpush.bf16.msra.mxu0 0
      %3547 = vmatpush.bf16.msra.mxu0 0
      %3548 = vmatpush.bf16.msra.mxu0 0
      %3549 = vmatpush.bf16.msra.mxu0 0
      %3550 = vmatpush.bf16.msra.mxu0 %v3529
      %3551 = vmatpush.bf16.msra.mxu0 %v3528
      %3552 = vmatpush.bf16.msra.mxu0 %v3527
      %3553 = vmatpush.bf16.msra.mxu0 %v3526
      %3554 = vmatmul.bf16.gmra.mxu0 %v3535
      %v3555 = vpop.f32.mrf.mxu0
      %v3556 = vadd.f32 %v3508, %v3555
      %v3557 = vpop.f32.mrf.mxu0
      %v3558 = vadd.f32 %v3508, %v3557
      %3559 = vmatmul.bf16.gmra.mxu0 %v3538
      %v3560 = vpop.f32.mrf.mxu0
      %v3561 = vadd.f32 %v3508, %v3560
      %v3562 = vpop.f32.mrf.mxu0
      %v3563 = vadd.f32 %v3508, %v3562
      %3564 = vmatmul.bf16.gmra.mxu0 %v3541
      %v3565 = vpop.f32.mrf.mxu0
      %v3566 = vadd.f32 %v3508, %v3565
      %v3567 = vpop.f32.mrf.mxu0
      %v3568 = vadd.f32 %v3508, %v3567
      %3569 = vmatmul.bf16.gmra.mxu0 %v3544
      %v3570 = vpop.f32.mrf.mxu0
      %v3571 = vadd.f32 %v3508, %v3570
      %v3572 = vpop.f32.mrf.mxu0
      %v3573 = vadd.f32 %v3508, %v3572
      %3574 = vdwg.mxu0
      %v3575 = vmax.f32 %v3556, 0.0
      %v3576 = vmax.f32 %v3558, 0.0
      %v3577 = vmax.f32 %v3561, 0.0
      %v3578 = vmax.f32 %v3563, 0.0
      %v3579 = vmax.f32 %v3566, 0.0
      %v3580 = vmax.f32 %v3568, 0.0
      %v3581 = vmax.f32 %v3571, 0.0
      %v3582 = vmax.f32 %v3573, 0.0
      %v3583 = vpack.c.bf16 %v3576, %v3575
      %v3584 = vpack.c.bf16 %v3578, %v3577
      %v3585 = vpack.c.bf16 %v3580, %v3579
      %v3586 = vpack.c.bf16 %v3582, %v3581
      %s3587 = scalar_lea.vmem %s6, 96
      %v3588 = vld [vmem:[%s3587] sm:$0xf]
      %v3589 = vld [vmem:[%s3587 + $0x4] sm:$0xf]
      %v3590 = vld [vmem:[%s3587 + $0x8] sm:$0xf]
      %v3591 = vld [vmem:[%s3587 + $0xc] sm:$0xf]
      %v3592 = vld [vmem:[%s3587 + $0x10] sm:$0xf]
      %v3593 = vld [vmem:[%s3587 + $0x14] sm:$0xf]
      %v3594 = vld [vmem:[%s3587 + $0x18] sm:$0xf]
      %v3595 = vld [vmem:[%s3587 + $0x1c] sm:$0xf]
      %s3596 = scalar_lea.vmem %s7, 3
      %v3597 = vld [vmem:[%s3596] sm:$0x1]
      %v3599 = vperm.slane %v3597, 0
      %v3609 = vunpack.c.l.b16 %v3588
      %v3610 = vunpack.c.l.b16 %v3589
      %v3611 = vunpack.c.l.b16 %v3590
      %v3612 = vunpack.c.l.b16 %v3591
      %v3613 = vunpack.c.l.b16 %v3592
      %v3614 = vunpack.c.l.b16 %v3593
      %v3615 = vunpack.c.l.b16 %v3594
      %v3616 = vunpack.c.l.b16 %v3595
      %v3617 = vpack.c.b16 %v3610, %v3609
      %v3618 = vpack.c.b16 %v3612, %v3611
      %v3619 = vpack.c.b16 %v3614, %v3613
      %v3620 = vpack.c.b16 %v3616, %v3615
      %v3626 = vsel %vm3157, %v3583, 0
      %v3629 = vsel %vm3157, %v3584, 0
      %v3632 = vsel %vm3157, %v3585, 0
      %v3635 = vsel %vm3157, %v3586, 0
      %3637 = vmatpush.bf16.msra.mxu0 0
      %3638 = vmatpush.bf16.msra.mxu0 0
      %3639 = vmatpush.bf16.msra.mxu0 0
      %3640 = vmatpush.bf16.msra.mxu0 0
      %3641 = vmatpush.bf16.msra.mxu0 %v3620
      %3642 = vmatpush.bf16.msra.mxu0 %v3619
      %3643 = vmatpush.bf16.msra.mxu0 %v3618
      %3644 = vmatpush.bf16.msra.mxu0 %v3617
      %3645 = vmatmul.bf16.gmra.mxu0 %v3626
      %v3646 = vpop.f32.mrf.mxu0
      %v3647 = vadd.f32 %v3599, %v3646
      %v3648 = vpop.f32.mrf.mxu0
      %v3649 = vadd.f32 %v3599, %v3648
      %3650 = vmatmul.bf16.gmra.mxu0 %v3629
      %v3651 = vpop.f32.mrf.mxu0
      %v3652 = vadd.f32 %v3599, %v3651
      %v3653 = vpop.f32.mrf.mxu0
      %v3654 = vadd.f32 %v3599, %v3653
      %3655 = vmatmul.bf16.gmra.mxu0 %v3632
      %v3656 = vpop.f32.mrf.mxu0
      %v3657 = vadd.f32 %v3599, %v3656
      %v3658 = vpop.f32.mrf.mxu0
      %v3659 = vadd.f32 %v3599, %v3658
      %3660 = vmatmul.bf16.gmra.mxu0 %v3635
      %v3661 = vpop.f32.mrf.mxu0
      %v3662 = vadd.f32 %v3599, %v3661
      %v3663 = vpop.f32.mrf.mxu0
      %v3664 = vadd.f32 %v3599, %v3663
      %3665 = vdwg.mxu0
      %v3666 = vmax.f32 %v3647, 0.0
      %v3667 = vmax.f32 %v3649, 0.0
      %v3668 = vmax.f32 %v3652, 0.0
      %v3669 = vmax.f32 %v3654, 0.0
      %v3670 = vmax.f32 %v3657, 0.0
      %v3671 = vmax.f32 %v3659, 0.0
      %v3672 = vmax.f32 %v3662, 0.0
      %v3673 = vmax.f32 %v3664, 0.0
      %v3674 = vld [vmem:[%s8] sm:$0x1]
      %v3675 = vperm.slane %v3674, 0
      %v3676 = vmul.f32 %v3666, %v3675
      %v3677 = vmul.f32 %v3667, %v3675
      %v3678 = vmul.f32 %v3668, %v3675
      %v3679 = vmul.f32 %v3669, %v3675
      %v3680 = vmul.f32 %v3670, %v3675
      %v3681 = vmul.f32 %v3671, %v3675
      %v3682 = vmul.f32 %v3672, %v3675
      %v3683 = vmul.f32 %v3673, %v3675
      %v3684 = vsel %vm3157, %v3676, 0.0
      %3685 = vadd.xlane.f32.xlu0 %v3684
      %v3686 = vpop.xlane.xlu0 %3685
      %v3687 = vsel %vm3157, %v3677, 0.0
      %3688 = vadd.xlane.f32.xlu0 %v3687
      %v3689 = vpop.xlane.xlu0 %3688
      %v3690 = vsel %vm3157, %v3678, 0.0
      %3691 = vadd.xlane.f32.xlu0 %v3690
      %v3692 = vpop.xlane.xlu0 %3691
      %v3693 = vsel %vm3157, %v3679, 0.0
      %3694 = vadd.xlane.f32.xlu0 %v3693
      %v3695 = vpop.xlane.xlu0 %3694
      %v3696 = vsel %vm3157, %v3680, 0.0
      %3697 = vadd.xlane.f32.xlu0 %v3696
      %v3698 = vpop.xlane.xlu0 %3697
      %v3699 = vsel %vm3157, %v3681, 0.0
      %3700 = vadd.xlane.f32.xlu0 %v3699
      %v3701 = vpop.xlane.xlu0 %3700
      %v3702 = vsel %vm3157, %v3682, 0.0
      %3703 = vadd.xlane.f32.xlu0 %v3702
      %v3704 = vpop.xlane.xlu0 %3703
      %v3705 = vsel %vm3157, %v3683, 0.0
      %3706 = vadd.xlane.f32.xlu0 %v3705
      %v3707 = vpop.xlane.xlu0 %3706
      %v3708 = vld [vmem:[%s8 + $0x1] sm:$0x1]
      %v3709 = vperm.slane %v3708, 0
      %v3710 = vmul.f32 %v3666, %v3709
      %v3711 = vmul.f32 %v3667, %v3709
      %v3712 = vmul.f32 %v3668, %v3709
      %v3713 = vmul.f32 %v3669, %v3709
      %v3714 = vmul.f32 %v3670, %v3709
      %v3715 = vmul.f32 %v3671, %v3709
      %v3716 = vmul.f32 %v3672, %v3709
      %v3717 = vmul.f32 %v3673, %v3709
      %v3718 = vsel %vm3157, %v3710, 0.0
      %3719 = vadd.xlane.f32.xlu0 %v3718
      %v3720 = vpop.xlane.xlu0 %3719
      %v3721 = vsel %vm3157, %v3711, 0.0
      %3722 = vadd.xlane.f32.xlu0 %v3721
      %v3723 = vpop.xlane.xlu0 %3722
      %v3724 = vsel %vm3157, %v3712, 0.0
      %3725 = vadd.xlane.f32.xlu0 %v3724
      %v3726 = vpop.xlane.xlu0 %3725
      %v3727 = vsel %vm3157, %v3713, 0.0
      %3728 = vadd.xlane.f32.xlu0 %v3727
      %v3729 = vpop.xlane.xlu0 %3728
      %v3730 = vsel %vm3157, %v3714, 0.0
      %3731 = vadd.xlane.f32.xlu0 %v3730
      %v3732 = vpop.xlane.xlu0 %3731
      %v3733 = vsel %vm3157, %v3715, 0.0
      %3734 = vadd.xlane.f32.xlu0 %v3733
      %v3735 = vpop.xlane.xlu0 %3734
      %v3736 = vsel %vm3157, %v3716, 0.0
      %3737 = vadd.xlane.f32.xlu0 %v3736
      %v3738 = vpop.xlane.xlu0 %3737
      %v3739 = vsel %vm3157, %v3717, 0.0
      %3740 = vadd.xlane.f32.xlu0 %v3739
      %v3741 = vpop.xlane.xlu0 %3740
      %v3742 = vld [vmem:[%s8 + $0x2] sm:$0x1]
      %v3743 = vperm.slane %v3742, 0
      %v3744 = vmul.f32 %v3666, %v3743
      %v3745 = vmul.f32 %v3667, %v3743
      %v3746 = vmul.f32 %v3668, %v3743
      %v3747 = vmul.f32 %v3669, %v3743
      %v3748 = vmul.f32 %v3670, %v3743
      %v3749 = vmul.f32 %v3671, %v3743
      %v3750 = vmul.f32 %v3672, %v3743
      %v3751 = vmul.f32 %v3673, %v3743
      %v3752 = vsel %vm3157, %v3744, 0.0
      %3753 = vadd.xlane.f32.xlu0 %v3752
      %v3754 = vpop.xlane.xlu0 %3753
      %v3755 = vsel %vm3157, %v3745, 0.0
      %3756 = vadd.xlane.f32.xlu0 %v3755
      %v3757 = vpop.xlane.xlu0 %3756
      %v3758 = vsel %vm3157, %v3746, 0.0
      %3759 = vadd.xlane.f32.xlu0 %v3758
      %v3760 = vpop.xlane.xlu0 %3759
      %v3761 = vsel %vm3157, %v3747, 0.0
      %3762 = vadd.xlane.f32.xlu0 %v3761
      %v3763 = vpop.xlane.xlu0 %3762
      %v3764 = vsel %vm3157, %v3748, 0.0
      %3765 = vadd.xlane.f32.xlu0 %v3764
      %v3766 = vpop.xlane.xlu0 %3765
      %v3767 = vsel %vm3157, %v3749, 0.0
      %3768 = vadd.xlane.f32.xlu0 %v3767
      %v3769 = vpop.xlane.xlu0 %3768
      %v3770 = vsel %vm3157, %v3750, 0.0
      %3771 = vadd.xlane.f32.xlu0 %v3770
      %v3772 = vpop.xlane.xlu0 %3771
      %v3773 = vsel %vm3157, %v3751, 0.0
      %3774 = vadd.xlane.f32.xlu0 %v3773
      %v3775 = vpop.xlane.xlu0 %3774
      %vm3776 = vcmask 7168
      %v3777 = vsel %vm3776, %v3686, %v3720
      %v3778 = vsel %vm3776, %v3689, %v3723
      %v3779 = vsel %vm3776, %v3692, %v3726
      %v3780 = vsel %vm3776, %v3695, %v3729
      %v3781 = vsel %vm3776, %v3698, %v3732
      %v3782 = vsel %vm3776, %v3701, %v3735
      %v3783 = vsel %vm3776, %v3704, %v3738
      %v3784 = vsel %vm3776, %v3707, %v3741
      %vm3785 = vcmask 15360
      %v3786 = vsel %vm3785, %v3777, %v3754
      %v3787 = vsel %vm3785, %v3778, %v3757
      %v3788 = vsel %vm3785, %v3779, %v3760
      %v3789 = vsel %vm3785, %v3780, %v3763
      %v3790 = vsel %vm3785, %v3781, %v3766
      %v3791 = vsel %vm3785, %v3782, %v3769
      %v3792 = vsel %vm3785, %v3783, %v3772
      %v3793 = vsel %vm3785, %v3784, %v3775
      %v3794 = vld [vmem:[%s9] sm:$0x1]
      %v3796 = vperm.slane %v3794, 0
      %v3798 = vadd.f32 %v3786, %v3796
      %v3799 = vadd.f32 %v3787, %v3796
      %v3800 = vadd.f32 %v3788, %v3796
      %v3801 = vadd.f32 %v3789, %v3796
      %v3802 = vadd.f32 %v3790, %v3796
      %v3803 = vadd.f32 %v3791, %v3796
      %v3804 = vadd.f32 %v3792, %v3796
      %v3805 = vadd.f32 %v3793, %v3796
      %v3806 = vtanh.pop %v3798
      %v3807 = vtanh.pop %v3799
      %v3808 = vtanh.pop %v3800
      %v3809 = vtanh.pop %v3801
      %v3810 = vtanh.pop %v3802
      %v3811 = vtanh.pop %v3803
      %v3812 = vtanh.pop %v3804
      %v3813 = vtanh.pop %v3805
      %v3814 = vmul.f32 %v3806, 0.1
      %v3815 = vmul.f32 %v3807, 0.1
      %v3816 = vmul.f32 %v3808, 0.1
      %v3817 = vmul.f32 %v3809, 0.1
      %v3818 = vmul.f32 %v3810, 0.1
      %v3819 = vmul.f32 %v3811, 0.1
      %v3820 = vmul.f32 %v3812, 0.1
      %v3821 = vmul.f32 %v3813, 0.1
      %s3822 = scalar_lea.vmem %s6, 128
      %v3823 = vld [vmem:[%s3822] sm:$0xf]
      %v3824 = vld [vmem:[%s3822 + $0x4] sm:$0xf]
      %v3825 = vld [vmem:[%s3822 + $0x8] sm:$0xf]
      %v3826 = vld [vmem:[%s3822 + $0xc] sm:$0xf]
      %v3827 = vld [vmem:[%s3822 + $0x10] sm:$0xf]
      %v3828 = vld [vmem:[%s3822 + $0x14] sm:$0xf]
      %v3829 = vld [vmem:[%s3822 + $0x18] sm:$0xf]
      %v3830 = vld [vmem:[%s3822 + $0x1c] sm:$0xf]
      %s3831 = scalar_lea.vmem %s7, 4
      %v3832 = vld [vmem:[%s3831] sm:$0x1]
      %v3834 = vperm.slane %v3832, 0
      %v3844 = vunpack.c.l.b16 %v3823
      %v3845 = vunpack.c.l.b16 %v3824
      %v3846 = vunpack.c.l.b16 %v3825
      %v3847 = vunpack.c.l.b16 %v3826
      %v3848 = vunpack.c.l.b16 %v3827
      %v3849 = vunpack.c.l.b16 %v3828
      %v3850 = vunpack.c.l.b16 %v3829
      %v3851 = vunpack.c.l.b16 %v3830
      %v3852 = vpack.c.b16 %v3845, %v3844
      %v3853 = vpack.c.b16 %v3847, %v3846
      %v3854 = vpack.c.b16 %v3849, %v3848
      %v3855 = vpack.c.b16 %v3851, %v3850
      %3860 = vmatpush.bf16.msra.mxu0 0
      %3861 = vmatpush.bf16.msra.mxu0 0
      %3862 = vmatpush.bf16.msra.mxu0 0
      %3863 = vmatpush.bf16.msra.mxu0 0
      %3864 = vmatpush.bf16.msra.mxu0 %v3855
      %3865 = vmatpush.bf16.msra.mxu0 %v3854
      %3866 = vmatpush.bf16.msra.mxu0 %v3853
      %3867 = vmatpush.bf16.msra.mxu0 %v3852
      %3868 = vmatmul.bf16.gmra.mxu0 %v3535
      %v3869 = vpop.f32.mrf.mxu0
      %v3870 = vadd.f32 %v3834, %v3869
      %v3871 = vpop.f32.mrf.mxu0
      %v3872 = vadd.f32 %v3834, %v3871
      %3873 = vmatmul.bf16.gmra.mxu0 %v3538
      %v3874 = vpop.f32.mrf.mxu0
      %v3875 = vadd.f32 %v3834, %v3874
      %v3876 = vpop.f32.mrf.mxu0
      %v3877 = vadd.f32 %v3834, %v3876
      %3878 = vmatmul.bf16.gmra.mxu0 %v3541
      %v3879 = vpop.f32.mrf.mxu0
      %v3880 = vadd.f32 %v3834, %v3879
      %v3881 = vpop.f32.mrf.mxu0
      %v3882 = vadd.f32 %v3834, %v3881
      %3883 = vmatmul.bf16.gmra.mxu0 %v3544
      %v3884 = vpop.f32.mrf.mxu0
      %v3885 = vadd.f32 %v3834, %v3884
      %v3886 = vpop.f32.mrf.mxu0
      %v3887 = vadd.f32 %v3834, %v3886
      %3888 = vdwg.mxu0
      %v3889 = vmax.f32 %v3870, 0.0
      %v3890 = vmax.f32 %v3872, 0.0
      %v3891 = vmax.f32 %v3875, 0.0
      %v3892 = vmax.f32 %v3877, 0.0
      %v3893 = vmax.f32 %v3880, 0.0
      %v3894 = vmax.f32 %v3882, 0.0
      %v3895 = vmax.f32 %v3885, 0.0
      %v3896 = vmax.f32 %v3887, 0.0
      %v3897 = vpack.c.bf16 %v3890, %v3889
      %v3898 = vpack.c.bf16 %v3892, %v3891
      %v3899 = vpack.c.bf16 %v3894, %v3893
      %v3900 = vpack.c.bf16 %v3896, %v3895
      %s3901 = scalar_lea.vmem %s6, 160
      %v3902 = vld [vmem:[%s3901] sm:$0xf]
      %v3903 = vld [vmem:[%s3901 + $0x4] sm:$0xf]
      %v3904 = vld [vmem:[%s3901 + $0x8] sm:$0xf]
      %v3905 = vld [vmem:[%s3901 + $0xc] sm:$0xf]
      %v3906 = vld [vmem:[%s3901 + $0x10] sm:$0xf]
      %v3907 = vld [vmem:[%s3901 + $0x14] sm:$0xf]
      %v3908 = vld [vmem:[%s3901 + $0x18] sm:$0xf]
      %v3909 = vld [vmem:[%s3901 + $0x1c] sm:$0xf]
      %s3910 = scalar_lea.vmem %s7, 5
      %v3911 = vld [vmem:[%s3910] sm:$0x1]
      %v3913 = vperm.slane %v3911, 0
      %v3923 = vunpack.c.l.b16 %v3902
      %v3924 = vunpack.c.l.b16 %v3903
      %v3925 = vunpack.c.l.b16 %v3904
      %v3926 = vunpack.c.l.b16 %v3905
      %v3927 = vunpack.c.l.b16 %v3906
      %v3928 = vunpack.c.l.b16 %v3907
      %v3929 = vunpack.c.l.b16 %v3908
      %v3930 = vunpack.c.l.b16 %v3909
      %v3931 = vpack.c.b16 %v3924, %v3923
      %v3932 = vpack.c.b16 %v3926, %v3925
      %v3933 = vpack.c.b16 %v3928, %v3927
      %v3934 = vpack.c.b16 %v3930, %v3929
      %v3940 = vsel %vm3157, %v3897, 0
      %v3943 = vsel %vm3157, %v3898, 0
      %v3946 = vsel %vm3157, %v3899, 0
      %v3949 = vsel %vm3157, %v3900, 0
      %3951 = vmatpush.bf16.msra.mxu0 0
      %3952 = vmatpush.bf16.msra.mxu0 0
      %3953 = vmatpush.bf16.msra.mxu0 0
      %3954 = vmatpush.bf16.msra.mxu0 0
      %3955 = vmatpush.bf16.msra.mxu0 %v3934
      %3956 = vmatpush.bf16.msra.mxu0 %v3933
      %3957 = vmatpush.bf16.msra.mxu0 %v3932
      %3958 = vmatpush.bf16.msra.mxu0 %v3931
      %3959 = vmatmul.bf16.gmra.mxu0 %v3940
      %v3960 = vpop.f32.mrf.mxu0
      %v3961 = vadd.f32 %v3913, %v3960
      %v3962 = vpop.f32.mrf.mxu0
      %v3963 = vadd.f32 %v3913, %v3962
      %3964 = vmatmul.bf16.gmra.mxu0 %v3943
      %v3965 = vpop.f32.mrf.mxu0
      %v3966 = vadd.f32 %v3913, %v3965
      %v3967 = vpop.f32.mrf.mxu0
      %v3968 = vadd.f32 %v3913, %v3967
      %3969 = vmatmul.bf16.gmra.mxu0 %v3946
      %v3970 = vpop.f32.mrf.mxu0
      %v3971 = vadd.f32 %v3913, %v3970
      %v3972 = vpop.f32.mrf.mxu0
      %v3973 = vadd.f32 %v3913, %v3972
      %3974 = vmatmul.bf16.gmra.mxu0 %v3949
      %v3975 = vpop.f32.mrf.mxu0
      %v3976 = vadd.f32 %v3913, %v3975
      %v3977 = vpop.f32.mrf.mxu0
      %v3978 = vadd.f32 %v3913, %v3977
      %3979 = vdwg.mxu0
      %v3980 = vmax.f32 %v3961, 0.0
      %v3981 = vmax.f32 %v3963, 0.0
      %v3982 = vmax.f32 %v3966, 0.0
      %v3983 = vmax.f32 %v3968, 0.0
      %v3984 = vmax.f32 %v3971, 0.0
      %v3985 = vmax.f32 %v3973, 0.0
      %v3986 = vmax.f32 %v3976, 0.0
      %v3987 = vmax.f32 %v3978, 0.0
      %v3988 = vld [vmem:[%s12] sm:$0x1]
      %v3989 = vld [vmem:[%s10] sm:$0x1]
      %v3990 = vperm.slane %v3989, 0
      %v3991 = vmul.f32 %v3980, %v3990
      %v3992 = vmul.f32 %v3981, %v3990
      %v3993 = vmul.f32 %v3982, %v3990
      %v3994 = vmul.f32 %v3983, %v3990
      %v3995 = vmul.f32 %v3984, %v3990
      %v3996 = vmul.f32 %v3985, %v3990
      %v3997 = vmul.f32 %v3986, %v3990
      %v3998 = vmul.f32 %v3987, %v3990
      %v3999 = vsel %vm3157, %v3991, 0.0
      %4000 = vadd.xlane.f32.xlu0 %v3999
      %v4001 = vpop.xlane.xlu0 %4000
      %v4002 = vsel %vm3157, %v3992, 0.0
      %4003 = vadd.xlane.f32.xlu0 %v4002
      %v4004 = vpop.xlane.xlu0 %4003
      %v4005 = vsel %vm3157, %v3993, 0.0
      %4006 = vadd.xlane.f32.xlu0 %v4005
      %v4007 = vpop.xlane.xlu0 %4006
      %v4008 = vsel %vm3157, %v3994, 0.0
      %4009 = vadd.xlane.f32.xlu0 %v4008
      %v4010 = vpop.xlane.xlu0 %4009
      %v4011 = vsel %vm3157, %v3995, 0.0
      %4012 = vadd.xlane.f32.xlu0 %v4011
      %v4013 = vpop.xlane.xlu0 %4012
      %v4014 = vsel %vm3157, %v3996, 0.0
      %4015 = vadd.xlane.f32.xlu0 %v4014
      %v4016 = vpop.xlane.xlu0 %4015
      %v4017 = vsel %vm3157, %v3997, 0.0
      %4018 = vadd.xlane.f32.xlu0 %v4017
      %v4019 = vpop.xlane.xlu0 %4018
      %v4020 = vsel %vm3157, %v3998, 0.0
      %4021 = vadd.xlane.f32.xlu0 %v4020
      %v4022 = vpop.xlane.xlu0 %4021
      %v4023 = vld [vmem:[%s10 + $0x1] sm:$0x1]
      %v4024 = vperm.slane %v4023, 0
      %v4025 = vmul.f32 %v3980, %v4024
      %v4026 = vmul.f32 %v3981, %v4024
      %v4027 = vmul.f32 %v3982, %v4024
      %v4028 = vmul.f32 %v3983, %v4024
      %v4029 = vmul.f32 %v3984, %v4024
      %v4030 = vmul.f32 %v3985, %v4024
      %v4031 = vmul.f32 %v3986, %v4024
      %v4032 = vmul.f32 %v3987, %v4024
      %v4033 = vsel %vm3157, %v4025, 0.0
      %4034 = vadd.xlane.f32.xlu0 %v4033
      %v4035 = vpop.xlane.xlu0 %4034
      %v4036 = vsel %vm3157, %v4026, 0.0
      %4037 = vadd.xlane.f32.xlu0 %v4036
      %v4038 = vpop.xlane.xlu0 %4037
      %v4039 = vsel %vm3157, %v4027, 0.0
      %4040 = vadd.xlane.f32.xlu0 %v4039
      %v4041 = vpop.xlane.xlu0 %4040
      %v4042 = vsel %vm3157, %v4028, 0.0
      %4043 = vadd.xlane.f32.xlu0 %v4042
      %v4044 = vpop.xlane.xlu0 %4043
      %v4045 = vsel %vm3157, %v4029, 0.0
      %4046 = vadd.xlane.f32.xlu0 %v4045
      %v4047 = vpop.xlane.xlu0 %4046
      %v4048 = vsel %vm3157, %v4030, 0.0
      %4049 = vadd.xlane.f32.xlu0 %v4048
      %v4050 = vpop.xlane.xlu0 %4049
      %v4051 = vsel %vm3157, %v4031, 0.0
      %4052 = vadd.xlane.f32.xlu0 %v4051
      %v4053 = vpop.xlane.xlu0 %4052
      %v4054 = vsel %vm3157, %v4032, 0.0
      %4055 = vadd.xlane.f32.xlu0 %v4054
      %v4056 = vpop.xlane.xlu0 %4055
      %v4057 = vld [vmem:[%s10 + $0x2] sm:$0x1]
      %v4058 = vperm.slane %v4057, 0
      %v4059 = vmul.f32 %v3980, %v4058
      %v4060 = vmul.f32 %v3981, %v4058
      %v4061 = vmul.f32 %v3982, %v4058
      %v4062 = vmul.f32 %v3983, %v4058
      %v4063 = vmul.f32 %v3984, %v4058
      %v4064 = vmul.f32 %v3985, %v4058
      %v4065 = vmul.f32 %v3986, %v4058
      %v4066 = vmul.f32 %v3987, %v4058
      %v4067 = vsel %vm3157, %v4059, 0.0
      %4068 = vadd.xlane.f32.xlu0 %v4067
      %v4069 = vpop.xlane.xlu0 %4068
      %v4070 = vsel %vm3157, %v4060, 0.0
      %4071 = vadd.xlane.f32.xlu0 %v4070
      %v4072 = vpop.xlane.xlu0 %4071
      %v4073 = vsel %vm3157, %v4061, 0.0
      %4074 = vadd.xlane.f32.xlu0 %v4073
      %v4075 = vpop.xlane.xlu0 %4074
      %v4076 = vsel %vm3157, %v4062, 0.0
      %4077 = vadd.xlane.f32.xlu0 %v4076
      %v4078 = vpop.xlane.xlu0 %4077
      %v4079 = vsel %vm3157, %v4063, 0.0
      %4080 = vadd.xlane.f32.xlu0 %v4079
      %v4081 = vpop.xlane.xlu0 %4080
      %v4082 = vsel %vm3157, %v4064, 0.0
      %4083 = vadd.xlane.f32.xlu0 %v4082
      %v4084 = vpop.xlane.xlu0 %4083
      %v4085 = vsel %vm3157, %v4065, 0.0
      %4086 = vadd.xlane.f32.xlu0 %v4085
      %v4087 = vpop.xlane.xlu0 %4086
      %v4088 = vsel %vm3157, %v4066, 0.0
      %4089 = vadd.xlane.f32.xlu0 %v4088
      %v4090 = vpop.xlane.xlu0 %4089
      %v4091 = vsel %vm3776, %v4001, %v4035
      %v4092 = vsel %vm3776, %v4004, %v4038
      %v4093 = vsel %vm3776, %v4007, %v4041
      %v4094 = vsel %vm3776, %v4010, %v4044
      %v4095 = vsel %vm3776, %v4013, %v4047
      %v4096 = vsel %vm3776, %v4016, %v4050
      %v4097 = vsel %vm3776, %v4019, %v4053
      %v4098 = vsel %vm3776, %v4022, %v4056
      %v4099 = vsel %vm3785, %v4091, %v4069
      %v4100 = vsel %vm3785, %v4092, %v4072
      %v4101 = vsel %vm3785, %v4093, %v4075
      %v4102 = vsel %vm3785, %v4094, %v4078
      %v4103 = vsel %vm3785, %v4095, %v4081
      %v4104 = vsel %vm3785, %v4096, %v4084
      %v4105 = vsel %vm3785, %v4097, %v4087
      %v4106 = vsel %vm3785, %v4098, %v4090
      %v4107 = vld [vmem:[%s11] sm:$0x1]
      %v4109 = vperm.slane %v4107, 0
      %v4111 = vadd.f32 %v4099, %v4109
      %v4112 = vadd.f32 %v4100, %v4109
      %v4113 = vadd.f32 %v4101, %v4109
      %v4114 = vadd.f32 %v4102, %v4109
      %v4115 = vadd.f32 %v4103, %v4109
      %v4116 = vadd.f32 %v4104, %v4109
      %v4117 = vadd.f32 %v4105, %v4109
      %v4118 = vadd.f32 %v4106, %v4109
      %v4119 = vtanh.pop %v4111
      %v4120 = vtanh.pop %v4112
      %v4121 = vtanh.pop %v4113
      %v4122 = vtanh.pop %v4114
      %v4123 = vtanh.pop %v4115
      %v4124 = vtanh.pop %v4116
      %v4125 = vtanh.pop %v4117
      %v4126 = vtanh.pop %v4118
      %v4127 = vadd.f32 %v4119, 1.0
      %v4128 = vadd.f32 %v4120, 1.0
      %v4129 = vadd.f32 %v4121, 1.0
      %v4130 = vadd.f32 %v4122, 1.0
      %v4131 = vadd.f32 %v4123, 1.0
      %v4132 = vadd.f32 %v4124, 1.0
      %v4133 = vadd.f32 %v4125, 1.0
      %v4134 = vadd.f32 %v4126, 1.0
      %v4135 = vmul.f32 %v4127, 0.5
      %v4136 = vmul.f32 %v4128, 0.5
      %v4137 = vmul.f32 %v4129, 0.5
      %v4138 = vmul.f32 %v4130, 0.5
      %v4139 = vmul.f32 %v4131, 0.5
      %v4140 = vmul.f32 %v4132, 0.5
      %v4141 = vmul.f32 %v4133, 0.5
      %v4142 = vmul.f32 %v4134, 0.5
      %v4144 = vperm.slane %v3988, 0
      %v4146 = vadd.f32 %v4144, %v4135
      %v4147 = vadd.f32 %v4144, %v4136
      %v4148 = vadd.f32 %v4144, %v4137
      %v4149 = vadd.f32 %v4144, %v4138
      %v4150 = vadd.f32 %v4144, %v4139
      %v4151 = vadd.f32 %v4144, %v4140
      %v4152 = vadd.f32 %v4144, %v4141
      %v4153 = vadd.f32 %v4144, %v4142
      %4162 = vrot.lane.b32.xlu0 %v4146, 3
      %v4163 = vpop.permute.xlu0 %4162
      %4164 = vrot.lane.b32.xlu0 %v4147, 3
      %v4165 = vpop.permute.xlu0 %4164
      %4166 = vrot.lane.b32.xlu0 %v4148, 3
      %v4167 = vpop.permute.xlu0 %4166
      %4168 = vrot.lane.b32.xlu0 %v4149, 3
      %v4169 = vpop.permute.xlu0 %4168
      %4170 = vrot.lane.b32.xlu0 %v4150, 3
      %v4171 = vpop.permute.xlu0 %4170
      %4172 = vrot.lane.b32.xlu0 %v4151, 3
      %v4173 = vpop.permute.xlu0 %4172
      %4174 = vrot.lane.b32.xlu0 %v4152, 3
      %v4175 = vpop.permute.xlu0 %4174
      %4176 = vrot.lane.b32.xlu0 %v4153, 3
      %v4177 = vpop.permute.xlu0 %4176
      %vm4186 = vcmask 23552
      %v4187 = vsel %vm4186, %v3814, %v4163
      %v4188 = vsel %vm4186, %v3815, %v4165
      %v4189 = vsel %vm4186, %v3816, %v4167
      %v4190 = vsel %vm4186, %v3817, %v4169
      %v4191 = vsel %vm4186, %v3818, %v4171
      %v4192 = vsel %vm4186, %v3819, %v4173
      %v4193 = vsel %vm4186, %v3820, %v4175
      %v4194 = vsel %vm4186, %v3821, %v4177
      %vm4195 = vcmask 48128
      %v4196 = vsel %vm4195, %v4187, 0.0
      %v4197 = vsel %vm4195, %v4188, 0.0
      %v4198 = vsel %vm4195, %v4189, 0.0
      %v4199 = vsel %vm4195, %v4190, 0.0
      %v4200 = vsel %vm4195, %v4191, 0.0
      %v4201 = vsel %vm4195, %v4192, 0.0
      %v4202 = vsel %vm4195, %v4193, 0.0
      %v4203 = vsel %vm4195, %v4194, 0.0
      %vm4204 = vcmask 64512
      %4205 = vst.msk [vmem:[%s442] sm:$0xff] %vm4204, %v4196
      %4206 = vst.msk [vmem:[%s442 + $0x8] sm:$0xff] %vm4204, %v4197
      %4207 = vst.msk [vmem:[%s442 + $0x10] sm:$0xff] %vm4204, %v4198
      %4208 = vst.msk [vmem:[%s442 + $0x18] sm:$0xff] %vm4204, %v4199
      %4209 = vst.msk [vmem:[%s442 + $0x20] sm:$0xff] %vm4204, %v4200
      %4210 = vst.msk [vmem:[%s442 + $0x28] sm:$0xff] %vm4204, %v4201
      %4211 = vst.msk [vmem:[%s442 + $0x30] sm:$0xff] %vm4204, %v4202
      %4212 = vst.msk [vmem:[%s442 + $0x38] sm:$0xff] %vm4204, %v4203
      %s4213 = smul.u32 8, %s24
      %p4214 = scmp.lt.s32.totalorder %s4213, 31
      %s4215 = scalar_select %p4214, %s4213, 31
      %s4216 = smul.addr %s4215, 8
      %s4217 = scalar_lea.vmem %s13, %s4216
      // Predicated region
      $region73: #{fwd.1} parent=71 // pred_check
        %p4218 = pneg %p320
      $region74: #{fwd.1} parent=71 // pred_check_branch
        %4220 = sbr.rel (%p4218) target = $region76
      $region75: #{fwd.1} parent=71 // pred_region
        %s4221 = smul.u32 8, %s24
      $region76: #{fwd.1} parent=71 // pred_fallthru
        _
    $region72: #{fwd.1} parent=5 // pred_fallthru
      _
    %p4222 = scmp.le.s32.totalorder 2, %s19
    // Predicated region
    $region77: #{fwd.1} parent=5 // pred_check
      %p4223 = pneg %p4222
    $region78: #{fwd.1} parent=5 // pred_check_branch
      %4225 = sbr.rel (%p4223) target = $region80
    $region79: #{fwd.1} parent=5 // pred_region
      %s4226 = ssub.s32 %s19, 2
      // Predicated region
      $region81: #{fwd.1} parent=79 // pred_check
        %p4227 = pneg %p326
      $region82: #{fwd.1} parent=79 // pred_check_branch
        %4229 = sbr.rel (%p4227) target = $region84
      $region83: #{fwd.1} parent=79 // pred_region
        %s4230 = smul.u32 8, %s25
        %p4231 = scmp.lt.s32.totalorder %s4230, 31
        %s4232 = scalar_select %p4231, %s4230, 31
        %s4233 = smul.addr %s4232, 8
        %s4234 = scalar_lea.vmem %s13, %s4233
      $region84: #{fwd.1} parent=79 // pred_fallthru
        _
    $region80: #{fwd.1} parent=5 // pred_fallthru
      _
  $region6: #{fwd.1} parent=0 // loop_footer
    %s23 = sadd.s32 1, %s19
  $region7: #{fwd.1} parent=0 // loop_footer_branch
    %18 = sbr.rel target = $region3
  $region8: #{fwd.1} parent=0 // loop_exit
    _

</llo_original>
